<compile_context>
chip_gen: v7x
topology: tpu7x:2x2x1
jax: 0.10.0
libtpu: 0.0.40
codegen_flags: <defaults>
</compile_context>

<pallas_src>
import jax
import jax.numpy as jnp
from jax.experimental import pallas as pl
from jax.experimental.pallas import tpu as pltpu


def _attn_gated_kernel(x_ref, wab_ref, bab_ref, wc_ref, bc_ref, at_out_ref):
    """One N-tile of the gated-attention forward.

    x_ref    : (TN, L)  f32   input tile
    wab_ref  : (L, 2D)  bf16  [Wa^T | Wb^T] stacked along the lane axis
    bab_ref  : (1, 2D)  f32   [ba | bb]
    wc_ref   : (C, D)   bf16  Wc (original torch layout)
    bc_ref   : (C, 1)   f32   bc
    at_out_ref : (C, TN)      attention logits A^T for this tile (lane-dense)
    """
    # Single wide matmul produces both gate pre-activations; bf16 operands on
    # the MXU, f32 accumulation.
    x_bf = x_ref[...].astype(jnp.bfloat16)                       # (TN, L)
    z = jnp.dot(x_bf, wab_ref[...],
                preferred_element_type=jnp.float32)              # (TN, 2D) f32
    z = z + bab_ref[...]                                         # f32 bias add

    d = wc_ref.shape[1]                                          # static D (mult of 128)
    a = jnp.tanh(z[:, :d])                                       # EUP, f32
    b = jax.nn.sigmoid(z[:, d:])                                 # EUP, f32
    gated = a * b                                                # (TN, D) f32, VPU

    # Lane-dense logits: A^T = Wc @ gated^T  -> (C, TN).  NT contraction keeps
    # the MXU fed without an explicit XLU transpose of gated.
    a_t = jax.lax.dot_general(
        wc_ref[...], gated.astype(jnp.bfloat16),
        dimension_numbers=(((1,), (1,)), ((), ())),
        preferred_element_type=jnp.float32)                      # (C, TN)
    at_out_ref[...] = (a_t + bc_ref[...]).astype(at_out_ref.dtype)


def prepare_params(params, compute_dtype=jnp.bfloat16):
    """One-time re-layout of the torch nn.Linear parameters.

    params (torch layout): wa, wb : (D, L); ba, bb : (D,); wc : (C, D); bc : (C,)
    """
    wa, ba = params["wa"], params["ba"]
    wb, bb = params["wb"], params["bb"]
    wc, bc = params["wc"], params["bc"]
    D, L = wa.shape
    C = wc.shape[0]
    wab = jnp.concatenate([wa.T, wb.T], axis=1).astype(compute_dtype)      # (L, 2D)
    bab = jnp.concatenate([ba, bb], axis=0).reshape(1, 2 * D).astype(jnp.float32)
    wc_p = wc.astype(compute_dtype)                                        # (C, D)
    bc_p = bc.reshape(C, 1).astype(jnp.float32)                            # (C, 1)
    return {"wab": wab, "bab": bab, "wc": wc_p, "bc": bc_p,
            "L": L, "D": D, "C": C}


def _round_up(v, m):
    return ((v + m - 1) // m) * m


def _choose_tile(n, block_n):
    """Bag-dimension tile: lane-legal for the (C, tn) output and >=2 steps when possible."""
    if n <= 128:
        return n                      # single block; lane dim equals the full extent
    # Multiple of 128 (lane-dense output block), aim for >=2 grid steps so the
    # "parallel" axis can shard across v7x's two TensorCores, cap by VMEM budget.
    half = _round_up(pl.cdiv(n, 2), 128)
    return max(128, min(block_n, half))


def attn_net_gated_pallas(x, prepared, *, block_n=1024):
    """Forward pass of Attn_Net_Gated. Returns (A, x) like the torch module."""
    N, L = x.shape
    D, C = prepared["D"], prepared["C"]
    assert L == prepared["L"]
    # Keep the z[:, :D] / z[:, D:] split on a lane-tile boundary (no hidden copy).
    assert D % 128 == 0, "D must be a multiple of 128 for the stacked-gate split"

    tn = _choose_tile(N, block_n)
    grid = (pl.cdiv(N, tn),)

    itemsize = jnp.dtype(x.dtype).itemsize
    flops = 2 * N * L * (2 * D) + 2 * N * D * C
    bytes_accessed = (
        N * L * itemsize                     # x stream
        + L * 2 * D * 2 + 2 * D * 4          # wab (bf16) + bab (f32)
        + C * D * 2 + C * 4                  # wc (bf16) + bc (f32)
        + C * N * itemsize                   # output
    )

    a_t = pl.pallas_call(
        _attn_gated_kernel,
        out_shape=jax.ShapeDtypeStruct((C, N), x.dtype),
        grid_spec=pltpu.PrefetchScalarGridSpec(
            num_scalar_prefetch=0,
            grid=grid,
            in_specs=[
                pl.BlockSpec((tn, L), lambda i: (i, 0)),        # x tile (streamed)
                pl.BlockSpec((L, 2 * D), lambda i: (0, 0)),     # [Wa^T|Wb^T] (constant)
                pl.BlockSpec((1, 2 * D), lambda i: (0, 0)),     # [ba|bb]     (constant)
                pl.BlockSpec((C, D), lambda i: (0, 0)),         # Wc          (constant)
                pl.BlockSpec((C, 1), lambda i: (0, 0)),         # bc          (constant)
            ],
            out_specs=pl.BlockSpec((C, tn), lambda i: (0, i)),  # lane-dense A^T
        ),
        compiler_params=pltpu.CompilerParams(
            dimension_semantics=("parallel",)),
        cost_estimate=pl.CostEstimate(
            flops=flops,
            transcendentals=2 * N * D,
            bytes_accessed=bytes_accessed),
    )(x, prepared["wab"], prepared["bab"], prepared["wc"], prepared["bc"])

    A = a_t.T                                 # (N, C); trivial for C == 1
    # The module returns the input untouched as the second output.
    return A, x

# TODO(synk): Dropout(0.25) branch (constructor dropout=True) is omitted; the
# default module has dropout=False and eval-mode dropout is identity anyway.


def _reference(x, params):
    """Pure-JAX f32 reference mirroring the PyTorch forward exactly."""
    hp = jax.lax.Precision.HIGHEST
    a = jnp.tanh(jnp.dot(x, params["wa"].T, precision=hp) + params["ba"])
    b = jax.nn.sigmoid(jnp.dot(x, params["wb"].T, precision=hp) + params["bb"])
    A = jnp.dot(a * b, params["wc"].T, precision=hp) + params["bc"]
    return A, x


if __name__ == "__main__":
    # Module defaults: L=1024, D=256, n_classes=1.  N=300 patches exercises the
    # multi-step grid AND the ragged (non-multiple-of-tn) last block.
    N, L, D, C = 300, 1024, 256, 1

    key = jax.random.PRNGKey(0)
    k_x, k_wa, k_ba, k_wb, k_bb, k_wc, k_bc = jax.random.split(key, 7)

    x = jax.random.normal(k_x, (N, L), jnp.float32)
    params = {
        "wa": 0.03 * jax.random.normal(k_wa, (D, L), jnp.float32),
        "ba": 0.03 * jax.random.normal(k_ba, (D,), jnp.float32),
        "wb": 0.03 * jax.random.normal(k_wb, (D, L), jnp.float32),
        "bb": 0.03 * jax.random.normal(k_bb, (D,), jnp.float32),
        "wc": 0.03 * jax.random.normal(k_wc, (C, D), jnp.float32),
        "bc": 0.03 * jax.random.normal(k_bc, (C,), jnp.float32),
    }

    prepared = prepare_params(params)          # one-time weight re-layout
    A, x_out = attn_net_gated_pallas(x, prepared)
    jax.block_until_ready(A)

    A_ref, _ = _reference(x, params)

    assert A.shape == (N, C)
    assert x_out.shape == (N, L)
    # bf16 MXU operands -> looser tolerance vs. the f32 HIGHEST-precision reference.
    max_err = float(jnp.max(jnp.abs(A - A_ref)))
    assert jnp.allclose(A, A_ref, atol=2e-2, rtol=2e-2), f"max abs err {max_err}"
    assert jnp.array_equal(x_out, x)

    print("KERNEL_OK")
</pallas_src>

<mosaic_0001>
module attributes {stable_mosaic.version = 11 : i64} {
  func.func @_attn_gated_kernel(%arg0: i32, %arg1: memref<256x1024xf32, #tpu.memory_space<vmem>>, %arg2: memref<1024x512xbf16, #tpu.memory_space<vmem>>, %arg3: memref<1x512xf32, #tpu.memory_space<vmem>>, %arg4: memref<1x256xbf16, #tpu.memory_space<vmem>>, %arg5: memref<1x1xf32, #tpu.memory_space<vmem>>, %arg6: memref<1x256xf32, #tpu.memory_space<vmem>>) attributes {dimension_semantics = [#tpu.dimension_semantics<parallel>], iteration_bounds = array<i64: 2>, scalar_prefetch = 0 : i64, scratch_operands = 0 : i64, tpu.core_type = #tpu.core_type<tc>, window_params = [{transform_indices = @transform_0, window_bounds = array<i64: 256, 1024>}, {pipeline_mode = #tpu.pipeline_mode<synchronous>, transform_indices = @transform_1, window_bounds = array<i64: 1024, 512>}, {pipeline_mode = #tpu.pipeline_mode<synchronous>, transform_indices = @transform_2, window_bounds = array<i64: 1, 512>}, {pipeline_mode = #tpu.pipeline_mode<synchronous>, transform_indices = @transform_3, window_bounds = array<i64: 1, 256>}, {pipeline_mode = #tpu.pipeline_mode<synchronous>, transform_indices = @transform_4, window_bounds = array<i64: 1, 1>}, {transform_indices = @transform_5, window_bounds = array<i64: 1, 256>}]} {
    %c0 = arith.constant 0 : index
    %c0_0 = arith.constant 0 : index
    %0 = vector.load %arg1[%c0, %c0_0] : memref<256x1024xf32, #tpu.memory_space<vmem>>, vector<256x1024xf32>
    %1 = arith.truncf %0 : vector<256x1024xf32> to vector<256x1024xbf16>
    %c0_1 = arith.constant 0 : index
    %c0_2 = arith.constant 0 : index
    %2 = vector.load %arg2[%c0_1, %c0_2] : memref<1024x512xbf16, #tpu.memory_space<vmem>>, vector<1024x512xbf16>
    %cst = arith.constant dense<0.000000e+00> : vector<256x512xf32>
    %3 = tpu.matmul %1, %2, %cst {dimension_numbers = #tpu.dot_dimension_numbers<[1], [0], [0], [1], [0, 0, 1, 1], [], []>} : vector<256x1024xbf16>, vector<1024x512xbf16>, vector<256x512xf32> -> vector<256x512xf32>
    %c0_3 = arith.constant 0 : index
    %c0_4 = arith.constant 0 : index
    %4 = vector.load %arg3[%c0_3, %c0_4] : memref<1x512xf32, #tpu.memory_space<vmem>>, vector<1x512xf32>
    %5 = vector.broadcast %4 : vector<1x512xf32> to vector<256x512xf32>
    %6 = arith.addf %3, %5 : vector<256x512xf32>
    %7 = vector.extract_strided_slice %6 {offsets = [0, 0], sizes = [256, 256], strides = [1, 1]} : vector<256x512xf32> to vector<256x256xf32>
    %8 = math.tanh %7 : vector<256x256xf32>
    %9 = vector.extract_strided_slice %6 {offsets = [0, 256], sizes = [256, 256], strides = [1, 1]} : vector<256x512xf32> to vector<256x256xf32>
    %10 = arith.negf %9 : vector<256x256xf32>
    %11 = math.exp %10 : vector<256x256xf32>
    %cst_5 = arith.constant 1.000000e+00 : f32
    %12 = vector.broadcast %cst_5 : f32 to vector<256x256xf32>
    %13 = arith.addf %12, %11 : vector<256x256xf32>
    %14 = arith.divf %12, %13 : vector<256x256xf32>
    %15 = arith.mulf %8, %14 : vector<256x256xf32>
    %c0_6 = arith.constant 0 : index
    %c0_7 = arith.constant 0 : index
    %16 = vector.load %arg4[%c0_6, %c0_7] : memref<1x256xbf16, #tpu.memory_space<vmem>>, vector<1x256xbf16>
    %17 = arith.truncf %15 : vector<256x256xf32> to vector<256x256xbf16>
    %cst_8 = arith.constant dense<0.000000e+00> : vector<1x256xf32>
    %18 = tpu.matmul %16, %17, %cst_8 {dimension_numbers = #tpu.dot_dimension_numbers<[1], [1], [0], [0], [0, 0, 1, 0], [], []>} : vector<1x256xbf16>, vector<256x256xbf16>, vector<1x256xf32> -> vector<1x256xf32>
    %c0_9 = arith.constant 0 : index
    %c0_10 = arith.constant 0 : index
    %19 = vector.load %arg5[%c0_9, %c0_10] : memref<1x1xf32, #tpu.memory_space<vmem>>, vector<1x1xf32>
    %20 = vector.broadcast %19 : vector<1x1xf32> to vector<1x256xf32>
    %21 = arith.addf %18, %20 : vector<1x256xf32>
    %c0_11 = arith.constant 0 : index
    %c0_12 = arith.constant 0 : index
    %22 = vector.load %arg6[%c0_11, %c0_12] : memref<1x256xf32, #tpu.memory_space<vmem>>, vector<1x256xf32>
    tpu.vector_store %arg6[%c0_11, %c0_12], %21 {strides = array<i32>} : memref<1x256xf32, #tpu.memory_space<vmem>>, vector<1x256xf32>,
    return
  }
  func.func @transform_0(%arg0: i32) -> (i32, i32) {
    %c0_i32 = arith.constant 0 : i32
    %c0_i32_0 = arith.constant 0 : i32
    return %arg0, %c0_i32 : i32, i32
  }
  func.func @transform_1(%arg0: i32) -> (i32, i32) {
    %c0_i32 = arith.constant 0 : i32
    %c0_i32_0 = arith.constant 0 : i32
    %c0_i32_1 = arith.constant 0 : i32
    return %c0_i32, %c0_i32_0 : i32, i32
  }
  func.func @transform_2(%arg0: i32) -> (i32, i32) {
    %c0_i32 = arith.constant 0 : i32
    %c0_i32_0 = arith.constant 0 : i32
    %c0_i32_1 = arith.constant 0 : i32
    return %c0_i32, %c0_i32_0 : i32, i32
  }
  func.func @transform_3(%arg0: i32) -> (i32, i32) {
    %c0_i32 = arith.constant 0 : i32
    %c0_i32_0 = arith.constant 0 : i32
    %c0_i32_1 = arith.constant 0 : i32
    return %c0_i32, %c0_i32_0 : i32, i32
  }
  func.func @transform_4(%arg0: i32) -> (i32, i32) {
    %c0_i32 = arith.constant 0 : i32
    %c0_i32_0 = arith.constant 0 : i32
    %c0_i32_1 = arith.constant 0 : i32
    return %c0_i32, %c0_i32_0 : i32, i32
  }
  func.func @transform_5(%arg0: i32) -> (i32, i32) {
    %c0_i32 = arith.constant 0 : i32
    %c0_i32_0 = arith.constant 0 : i32
    return %c0_i32, %arg0 : i32, i32
  }
}

</mosaic_0001>

<llo_original>
// kernel: tpu_custom_call.1
$region0: #{tpu_custom_call.1}
  #allocation0 [shape = 'u32[]', space=smem, size = 0x4, offset = 0x4, fixed_abs, tag = 'smem constant byte address 0x4 - core index']
  #allocation1 [shape = 'u32[144,128]{1,0:T(1,128)}', space=vmem, size = 0x12000, scoped, tag = 'internal scratch']
  #allocation2 [shape = 'f32[1,1]{1,0:T(1,128)S(1)}', space=vmem, size = 0x200, scoped, tag = 'scoped memory for tpu_custom_call.1']
  %s0 = inlined_call_operand.hbm [shape: f32[300,1024], index: 0, kind: input, shape index: {}]
  %s1 = inlined_call_operand.hbm [shape: bf16[1024,512], index: 1, kind: input, shape index: {}]
  %s2 = inlined_call_operand.hbm [shape: f32[1,512], index: 2, kind: input, shape index: {}]
  %s3 = inlined_call_operand.hbm [shape: bf16[1,256], index: 3, kind: input, shape index: {}]
  %s4 = inlined_call_operand.<no memory space> [shape: f32[1,1], index: 4, kind: input, shape index: {}]
  %s5 = inlined_call_operand.hbm [shape: f32[1,300], index: 5, kind: output, shape index: {}]
  %s6 = sld [smem:[#allocation0]]
  $region69: #{tpu_custom_call.1} parent=0
    _
  %s8 = ssub.s32 1, %s6
  %s9 = scalar_select 0, %s8, %s6
  %v10 = vstv %s4
  %11 = vst [vmem:[#allocation2] sm:$0x1] %v10
  $region1: #{tpu_custom_call.1} parent=0
    #allocation3 [shape = 'u8[2097152]{0}', space=vmem, size = 0x200000, scoped, tag = 'input window, operand 0']
    #allocation4 [shape = 's32[2]{0}', space=sflag, size = 0x8, scoped, tag = 'scoped memory for tpu_custom_call.1']
    #allocation5 [shape = 's32[2]{0}', space=sflag, size = 0x8, scoped, tag = 'scoped memory for tpu_custom_call.1']
    #allocation6 [shape = 'u8[1048576]{0}', space=vmem, size = 0x100000, scoped, tag = 'input window, operand 1, single buffered']
    #allocation7 [shape = 's32[1]{0}', space=sflag, size = 0x4, scoped, tag = 'scoped memory for tpu_custom_call.1']
    #allocation8 [shape = 'u8[2048]{0}', space=vmem, size = 0x800, scoped, tag = 'input window, operand 2, single buffered']
    #allocation9 [shape = 'u8[1024]{0}', space=vmem, size = 0x400, scoped, tag = 'input window, operand 3, single buffered']
    #allocation10 [shape = 's32[1]{0}', space=sflag, size = 0x4, scoped, tag = 'scoped memory for tpu_custom_call.1']
    #allocation11 [shape = 'u8[2048]{0}', space=vmem, size = 0x800, scoped, tag = 'output window, operand 0']
    %12 = vsyncpa [#allocation4], 0
    %s13 = scalar_lea.sflag [#allocation4], 1
    %14 = vsyncpa %s13, 0
    %15 = vsyncpa [#allocation7], 0
    %16 = vsyncpa [#allocation10], 0
    %17 = vsyncpa [#allocation5], 0
    %s18 = scalar_lea.sflag [#allocation5], 1
    %19 = vsyncpa %s18, 0
    loop: start=0, step=1, limit=4
    $region2: #{tpu_custom_call.1} parent=1 // loop_pre_header
      _
    $region3: #{tpu_custom_call.1} parent=1 // loop_header
      %s21 = sphi 0, %s25
      %p22 = scmp.ge.s32.totalorder %s21, 4
      %s31 = sphi 0, %s33
      %s34 = sphi 0, %s31
      %s35 = sphi 0, %s34
      %s51 = sphi 0, %s35
      %s55 = sphi 0, %s55
      %s57 = sphi 0, %s55
      %s58 = sphi 0, %s57
      %s72 = sphi 0, %s58
      %s76 = sphi 0, %s76
      %s78 = sphi 0, %s76
      %s79 = sphi 0, %s78
      %s93 = sphi 0, %s79
      %s97 = sphi 0, %s97
      %s99 = sphi 0, %s97
      %s100 = sphi 0, %s99
      %s114 = sphi 0, %s100
      %s118 = sphi 0, %s118
      %s120 = sphi 0, %s118
      %s121 = sphi 0, %s120
      %s135 = sphi 0, %s121
      %s141 = sphi 0, %s143
      %s144 = sphi 0, %s141
      %s145 = sphi 0, %s144
      %s161 = sphi 0, %s145
    $region4: #{tpu_custom_call.1} parent=1 // loop_header_branch
      %24 = sbr.rel (%p22) target = $region8
    $region5: #{tpu_custom_call.1} parent=1 // loop_body
      %s26 = ssub.s32 %s21, 1
      %s27 = ssub.s32 %s21, 2
      %s28 = sadd.s32 %s21, 1
      %s29 = ssub.s32 %s21, %s28
      %p30 = scmp.eq.s32.totalorder %s29, 0
      %s32 = sadd.s32 %s31, 1
      %s33 = scalar_select %p30, %s31, %s32
      %p36 = pneg %p30
      %p37 = scmp.eq.s32.totalorder %s21, 1
      %p38 = por %p36, %p37
      %p39 = scmp.ne.s32.totalorder %s31, %s34
      %p40 = scmp.eq.s32.totalorder %s21, 0
      %p41 = por %p39, %p40
      %p42 = scmp.ne.s32.totalorder %s31, %s34
      %p43 = scmp.eq.s32.totalorder %s26, 1
      %p44 = por %p42, %p43
      %p45 = scmp.ne.s32.totalorder %s34, %s35
      %p46 = scmp.eq.s32.totalorder %s26, 0
      %p47 = por %p45, %p46
      %p48 = scmp.ne.s32.totalorder %s34, %s35
      %p49 = scmp.eq.s32.totalorder %s27, 1
      %p50 = por %p48, %p49
      %p52 = scmp.ne.s32.totalorder %s35, %s51
      %p53 = scmp.eq.s32.totalorder %s27, 0
      %p54 = por %p52, %p53
      %s56 = sadd.s32 %s55, 1
      %p59 = scmp.eq.s32.totalorder %s21, 1
      %p60 = scmp.ne.s32.totalorder %s55, %s57
      %p61 = scmp.eq.s32.totalorder %s21, 0
      %p62 = por %p60, %p61
      %p63 = scmp.ne.s32.totalorder %s55, %s57
      %p64 = scmp.eq.s32.totalorder %s26, 1
      %p65 = por %p63, %p64
      %p66 = scmp.ne.s32.totalorder %s57, %s58
      %p67 = scmp.eq.s32.totalorder %s26, 0
      %p68 = por %p66, %p67
      %p69 = scmp.ne.s32.totalorder %s57, %s58
      %p70 = scmp.eq.s32.totalorder %s27, 1
      %p71 = por %p69, %p70
      %p73 = scmp.ne.s32.totalorder %s58, %s72
      %p74 = scmp.eq.s32.totalorder %s27, 0
      %p75 = por %p73, %p74
      %s77 = sadd.s32 %s76, 1
      %p80 = scmp.eq.s32.totalorder %s21, 1
      %p81 = scmp.ne.s32.totalorder %s76, %s78
      %p82 = scmp.eq.s32.totalorder %s21, 0
      %p83 = por %p81, %p82
      %p84 = scmp.ne.s32.totalorder %s76, %s78
      %p85 = scmp.eq.s32.totalorder %s26, 1
      %p86 = por %p84, %p85
      %p87 = scmp.ne.s32.totalorder %s78, %s79
      %p88 = scmp.eq.s32.totalorder %s26, 0
      %p89 = por %p87, %p88
      %p90 = scmp.ne.s32.totalorder %s78, %s79
      %p91 = scmp.eq.s32.totalorder %s27, 1
      %p92 = por %p90, %p91
      %p94 = scmp.ne.s32.totalorder %s79, %s93
      %p95 = scmp.eq.s32.totalorder %s27, 0
      %p96 = por %p94, %p95
      %s98 = sadd.s32 %s97, 1
      %p101 = scmp.eq.s32.totalorder %s21, 1
      %p102 = scmp.ne.s32.totalorder %s97, %s99
      %p103 = scmp.eq.s32.totalorder %s21, 0
      %p104 = por %p102, %p103
      %p105 = scmp.ne.s32.totalorder %s97, %s99
      %p106 = scmp.eq.s32.totalorder %s26, 1
      %p107 = por %p105, %p106
      %p108 = scmp.ne.s32.totalorder %s99, %s100
      %p109 = scmp.eq.s32.totalorder %s26, 0
      %p110 = por %p108, %p109
      %p111 = scmp.ne.s32.totalorder %s99, %s100
      %p112 = scmp.eq.s32.totalorder %s27, 1
      %p113 = por %p111, %p112
      %p115 = scmp.ne.s32.totalorder %s100, %s114
      %p116 = scmp.eq.s32.totalorder %s27, 0
      %p117 = por %p115, %p116
      %s119 = sadd.s32 %s118, 1
      %p122 = scmp.eq.s32.totalorder %s21, 1
      %p123 = scmp.ne.s32.totalorder %s118, %s120
      %p124 = scmp.eq.s32.totalorder %s21, 0
      %p125 = por %p123, %p124
      %p126 = scmp.ne.s32.totalorder %s118, %s120
      %p127 = scmp.eq.s32.totalorder %s26, 1
      %p128 = por %p126, %p127
      %p129 = scmp.ne.s32.totalorder %s120, %s121
      %p130 = scmp.eq.s32.totalorder %s26, 0
      %p131 = por %p129, %p130
      %p132 = scmp.ne.s32.totalorder %s120, %s121
      %p133 = scmp.eq.s32.totalorder %s27, 1
      %p134 = por %p132, %p133
      %p136 = scmp.ne.s32.totalorder %s121, %s135
      %p137 = scmp.eq.s32.totalorder %s27, 0
      %p138 = por %p136, %p137
      %s139 = ssub.s32 %s21, %s28
      %p140 = scmp.eq.s32.totalorder %s139, 0
      %s142 = sadd.s32 %s141, 1
      %s143 = scalar_select %p140, %s141, %s142
      %p146 = pneg %p140
      %p147 = scmp.eq.s32.totalorder %s21, 1
      %p148 = por %p146, %p147
      %p149 = scmp.ne.s32.totalorder %s141, %s144
      %p150 = scmp.eq.s32.totalorder %s21, 0
      %p151 = por %p149, %p150
      %p152 = scmp.ne.s32.totalorder %s141, %s144
      %p153 = scmp.eq.s32.totalorder %s26, 1
      %p154 = por %p152, %p153
      %p155 = scmp.ne.s32.totalorder %s144, %s145
      %p156 = scmp.eq.s32.totalorder %s26, 0
      %p157 = por %p155, %p156
      %p158 = scmp.ne.s32.totalorder %s144, %s145
      %p159 = scmp.eq.s32.totalorder %s27, 1
      %p160 = por %p158, %p159
      %p162 = scmp.ne.s32.totalorder %s145, %s161
      %p163 = scmp.eq.s32.totalorder %s27, 0
      %p164 = por %p162, %p163
      %p165 = scmp.le.s32.totalorder 1, %s21
      %p166 = scmp.lt.s32.totalorder %s21, 3
      %p167 = pnand %p165, %p166
      %p168 = pneg %p167
      // Predicated region
      $region9: #{tpu_custom_call.1} parent=5 // pred_check
        _
      $region10: #{tpu_custom_call.1} parent=5 // pred_check_branch
        %170 = sbr.rel (%p167) target = $region12
      $region11: #{tpu_custom_call.1} parent=5 // pred_region
        %s171 = ssub.s32 %s21, 1
        // Predicated region
        $region13: #{tpu_custom_call.1} parent=11 // pred_check
          %p172 = pneg %p68
        $region14: #{tpu_custom_call.1} parent=11 // pred_check_branch
          %174 = sbr.rel (%p172) target = $region16
        $region15: #{tpu_custom_call.1} parent=11 // pred_region
          %s176 = ssub.s32 32768, 32768
          %177 = vsyncadd [#allocation7], %s176
          %s178 = sshll.u32 [#allocation6], 4
          %s179 = int_to_ptr.vmem [resolvable:$true] %s178
          %184 = dma.hbm_to_vmem [thread:$0]  %s1, 32768, %s179, [#allocation7], 256, 256, 16
        $region16: #{tpu_custom_call.1} parent=11 // pred_fallthru
          _
        // Predicated region
        $region17: #{tpu_custom_call.1} parent=11 // pred_check
          %p185 = pneg %p89
        $region18: #{tpu_custom_call.1} parent=11 // pred_check_branch
          %187 = sbr.rel (%p185) target = $region20
        $region19: #{tpu_custom_call.1} parent=11 // pred_region
          %s189 = ssub.s32 64, 64
          %190 = vsyncadd [#allocation7], %s189
          %s192 = sshll.u32 [#allocation8], 4
          %s193 = int_to_ptr.vmem [resolvable:$true] %s192
          %195 = dma.hbm_to_vmem [thread:$0]  %s2, 64, %s193, [#allocation7]
        $region20: #{tpu_custom_call.1} parent=11 // pred_fallthru
          _
        // Predicated region
        $region21: #{tpu_custom_call.1} parent=11 // pred_check
          %p196 = pneg %p110
        $region22: #{tpu_custom_call.1} parent=11 // pred_check_branch
          %198 = sbr.rel (%p196) target = $region24
        $region23: #{tpu_custom_call.1} parent=11 // pred_region
          %s200 = ssub.s32 32, 32
          %201 = vsyncadd [#allocation10], %s200
          %s203 = sshll.u32 [#allocation9], 4
          %s204 = int_to_ptr.vmem [resolvable:$true] %s203
          %206 = dma.hbm_to_vmem [thread:$0]  %s3, 32, %s204, [#allocation10]
        $region24: #{tpu_custom_call.1} parent=11 // pred_fallthru
          _
        // Predicated region
        $region25: #{tpu_custom_call.1} parent=11 // pred_check
          %p207 = pneg %p131
        $region26: #{tpu_custom_call.1} parent=11 // pred_check_branch
          %209 = sbr.rel (%p207) target = $region28
        $region27: #{tpu_custom_call.1} parent=11 // pred_region
          _
        $region28: #{tpu_custom_call.1} parent=11 // pred_fallthru
          _
      $region12: #{tpu_custom_call.1} parent=5 // pred_fallthru
        _
      %p210 = scmp.lt.s32.totalorder %s21, 2
      // Predicated region
      $region29: #{tpu_custom_call.1} parent=5 // pred_check
        %p211 = pneg %p210
      $region30: #{tpu_custom_call.1} parent=5 // pred_check_branch
        %213 = sbr.rel (%p211) target = $region32
      $region31: #{tpu_custom_call.1} parent=5 // pred_region
        // Predicated region
        $region33: #{tpu_custom_call.1} parent=31 // pred_check
          %p214 = pneg %p41
        $region34: #{tpu_custom_call.1} parent=31 // pred_check_branch
          %216 = sbr.rel (%p214) target = $region36
        $region35: #{tpu_custom_call.1} parent=31 // pred_region
          %s217 = sand.u32 %s31, 1
          %s218 = scalar_lea.sflag [#allocation4], %s217
          %s219 = sand.u32 %s31, 1
          %s220 = smul.addr %s219, 2048
          %s221 = scalar_lea.vmem [#allocation3], %s220
          %s222 = smul.u32 32, %s21
          %s223 = ssub.s32 38, %s222
          %p224 = scmp.lt.s32.totalorder %s223, 32
          %s225 = scalar_select %p224, %s223, 32
          %s226 = smul.u32 128, %s225
          %s227 = smul.u32 %s226, 8
          %s229 = ssub.s32 32768, %s227
          %230 = vsyncadd %s218, %s229
          %p231 = scmp.ne.s32.totalorder 0, %s227
          %s232 = smul.addr %s222, 8
          %s233 = smul.addr %s232, 128
          %s234 = scalar_lea.hbm %s0, %s233
          %s235 = smul.u32 64, %s225
          %s236 = sshll.u32 %s221, 4
          %s237 = int_to_ptr.vmem [resolvable:$true] %s236
          %s238 = sshll.u32 %s235, 4
          %242 = dma.hbm_to_vmem [thread:$0]  (%p231), %s234, %s238, %s237, %s218, 1024, 1024, 64
        $region36: #{tpu_custom_call.1} parent=31 // pred_fallthru
          _
      $region32: #{tpu_custom_call.1} parent=5 // pred_fallthru
        _
      %p243 = scmp.le.s32.totalorder 1, %s21
      %p244 = scmp.lt.s32.totalorder %s21, 3
      %p245 = pnand %p243, %p244
      %p246 = pneg %p245
      // Predicated region
      $region37: #{tpu_custom_call.1} parent=5 // pred_check
        _
      $region38: #{tpu_custom_call.1} parent=5 // pred_check_branch
        %248 = sbr.rel (%p245) target = $region40
      $region39: #{tpu_custom_call.1} parent=5 // pred_region
        %s249 = ssub.s32 %s21, 1
        %s250 = sand.u32 %s34, 1
        %s251 = scalar_lea.sflag [#allocation4], %s250
        %s252 = sand.u32 %s34, 1
        %s253 = smul.addr %s252, 2048
        %s254 = scalar_lea.vmem [#allocation3], %s253
        // Predicated region
        $region41: #{tpu_custom_call.1} parent=39 // pred_check
          %p255 = pneg %p47
        $region42: #{tpu_custom_call.1} parent=39 // pred_check_branch
          %257 = sbr.rel (%p255) target = $region44
        $region43: #{tpu_custom_call.1} parent=39 // pred_region
          %258 = dma.done %s251, 32768
        $region44: #{tpu_custom_call.1} parent=39 // pred_fallthru
          _
        // Predicated region
        $region45: #{tpu_custom_call.1} parent=39 // pred_check
          %p259 = pneg %p68
        $region46: #{tpu_custom_call.1} parent=39 // pred_check_branch
          %261 = sbr.rel (%p259) target = $region48
        $region47: #{tpu_custom_call.1} parent=39 // pred_region
          %262 = dma.done [#allocation7], 32768
        $region48: #{tpu_custom_call.1} parent=39 // pred_fallthru
          _
        // Predicated region
        $region49: #{tpu_custom_call.1} parent=39 // pred_check
          %p263 = pneg %p89
        $region50: #{tpu_custom_call.1} parent=39 // pred_check_branch
          %265 = sbr.rel (%p263) target = $region52
        $region51: #{tpu_custom_call.1} parent=39 // pred_region
          %266 = dma.done [#allocation7], 64
        $region52: #{tpu_custom_call.1} parent=39 // pred_fallthru
          _
        // Predicated region
        $region53: #{tpu_custom_call.1} parent=39 // pred_check
          %p267 = pneg %p110
        $region54: #{tpu_custom_call.1} parent=39 // pred_check_branch
          %269 = sbr.rel (%p267) target = $region56
        $region55: #{tpu_custom_call.1} parent=39 // pred_region
          %270 = dma.done [#allocation10], 32
        $region56: #{tpu_custom_call.1} parent=39 // pred_fallthru
          _
        %s271 = sand.u32 %s34, 1
        %s272 = scalar_lea.sflag [#allocation4], %s271
        %s273 = sand.u32 %s34, 1
        %s274 = smul.addr %s273, 2048
        %s275 = scalar_lea.vmem [#allocation3], %s274
        %p276 = pneg %p47
        %p277 = pneg %p44
        %p278 = pneg %p68
        %p279 = pneg %p65
        %p280 = pneg %p89
        %p281 = pneg %p86
        %p282 = pneg %p110
        %p283 = pneg %p107
        %p284 = pneg %p131
        %p285 = pneg %p128
        %p286 = pneg %p157
        %p287 = pneg %p154
        %s288 = sand.u32 %s144, 1
        %s289 = scalar_lea.sflag [#allocation5], %s288
        %s290 = sand.u32 %s144, 1
        %s291 = smul.addr %s290, 2
        %s292 = scalar_lea.vmem [#allocation11], %s291
        %s293 = smul.u32 32, %s26
        %s294 = ssub.s32 38, %s293
        %p295 = scmp.lt.s32.totalorder %s294, 32
        %s296 = scalar_select %p295, %s294, 32
        %s297 = smul.u32 128, %s296
        %s298 = smul.u32 %s297, 8
        %s299 = smul.u32 2, %s26
        %s300 = ssub.s32 3, %s299
        %p301 = scmp.lt.s32.totalorder %s300, 2
        %s302 = scalar_select %p301, %s300, 2
        %s303 = smul.u32 16, %s302
        %v304 = vld [vmem:[%s254] sm:$0xff]
        %v305 = vld [vmem:[%s254 + $0x8] sm:$0xff]
        %v306 = vld [vmem:[%s254 + $0x10] sm:$0xff]
        %v307 = vld [vmem:[%s254 + $0x18] sm:$0xff]
        %v308 = vld [vmem:[%s254 + $0x20] sm:$0xff]
        %v309 = vld [vmem:[%s254 + $0x28] sm:$0xff]
        %v310 = vld [vmem:[%s254 + $0x30] sm:$0xff]
        %v311 = vld [vmem:[%s254 + $0x38] sm:$0xff]
        %v312 = vld [vmem:[%s254 + $0x40] sm:$0xff]
        %v313 = vld [vmem:[%s254 + $0x48] sm:$0xff]
        %v314 = vld [vmem:[%s254 + $0x50] sm:$0xff]
        %v315 = vld [vmem:[%s254 + $0x58] sm:$0xff]
        %v316 = vld [vmem:[%s254 + $0x60] sm:$0xff]
        %v317 = vld [vmem:[%s254 + $0x68] sm:$0xff]
        %v318 = vld [vmem:[%s254 + $0x70] sm:$0xff]
        %v319 = vld [vmem:[%s254 + $0x78] sm:$0xff]
        %v320 = vld [vmem:[%s254 + $0x80] sm:$0xff]
        %v321 = vld [vmem:[%s254 + $0x88] sm:$0xff]
        %v322 = vld [vmem:[%s254 + $0x90] sm:$0xff]
        %v323 = vld [vmem:[%s254 + $0x98] sm:$0xff]
        %v324 = vld [vmem:[%s254 + $0xa0] sm:$0xff]
        %v325 = vld [vmem:[%s254 + $0xa8] sm:$0xff]
        %v326 = vld [vmem:[%s254 + $0xb0] sm:$0xff]
        %v327 = vld [vmem:[%s254 + $0xb8] sm:$0xff]
        %v328 = vld [vmem:[%s254 + $0xc0] sm:$0xff]
        %v329 = vld [vmem:[%s254 + $0xc8] sm:$0xff]
        %v330 = vld [vmem:[%s254 + $0xd0] sm:$0xff]
        %v331 = vld [vmem:[%s254 + $0xd8] sm:$0xff]
        %v332 = vld [vmem:[%s254 + $0xe0] sm:$0xff]
        %v333 = vld [vmem:[%s254 + $0xe8] sm:$0xff]
        %v334 = vld [vmem:[%s254 + $0xf0] sm:$0xff]
        %v335 = vld [vmem:[%s254 + $0xf8] sm:$0xff]
        %v336 = vld [vmem:[%s254 + $0x100] sm:$0xff]
        %v337 = vld [vmem:[%s254 + $0x108] sm:$0xff]
        %v338 = vld [vmem:[%s254 + $0x110] sm:$0xff]
        %v339 = vld [vmem:[%s254 + $0x118] sm:$0xff]
        %v340 = vld [vmem:[%s254 + $0x120] sm:$0xff]
        %v341 = vld [vmem:[%s254 + $0x128] sm:$0xff]
        %v342 = vld [vmem:[%s254 + $0x130] sm:$0xff]
        %v343 = vld [vmem:[%s254 + $0x138] sm:$0xff]
        %v344 = vld [vmem:[%s254 + $0x140] sm:$0xff]
        %v345 = vld [vmem:[%s254 + $0x148] sm:$0xff]
        %v346 = vld [vmem:[%s254 + $0x150] sm:$0xff]
        %v347 = vld [vmem:[%s254 + $0x158] sm:$0xff]
        %v348 = vld [vmem:[%s254 + $0x160] sm:$0xff]
        %v349 = vld [vmem:[%s254 + $0x168] sm:$0xff]
        %v350 = vld [vmem:[%s254 + $0x170] sm:$0xff]
        %v351 = vld [vmem:[%s254 + $0x178] sm:$0xff]
        %v352 = vld [vmem:[%s254 + $0x180] sm:$0xff]
        %v353 = vld [vmem:[%s254 + $0x188] sm:$0xff]
        %v354 = vld [vmem:[%s254 + $0x190] sm:$0xff]
        %v355 = vld [vmem:[%s254 + $0x198] sm:$0xff]
        %v356 = vld [vmem:[%s254 + $0x1a0] sm:$0xff]
        %v357 = vld [vmem:[%s254 + $0x1a8] sm:$0xff]
        %v358 = vld [vmem:[%s254 + $0x1b0] sm:$0xff]
        %v359 = vld [vmem:[%s254 + $0x1b8] sm:$0xff]
        %v360 = vld [vmem:[%s254 + $0x1c0] sm:$0xff]
        %v361 = vld [vmem:[%s254 + $0x1c8] sm:$0xff]
        %v362 = vld [vmem:[%s254 + $0x1d0] sm:$0xff]
        %v363 = vld [vmem:[%s254 + $0x1d8] sm:$0xff]
        %v364 = vld [vmem:[%s254 + $0x1e0] sm:$0xff]
        %v365 = vld [vmem:[%s254 + $0x1e8] sm:$0xff]
        %v366 = vld [vmem:[%s254 + $0x1f0] sm:$0xff]
        %v367 = vld [vmem:[%s254 + $0x1f8] sm:$0xff]
        %v368 = vld [vmem:[%s254 + $0x200] sm:$0xff]
        %v369 = vld [vmem:[%s254 + $0x208] sm:$0xff]
        %v370 = vld [vmem:[%s254 + $0x210] sm:$0xff]
        %v371 = vld [vmem:[%s254 + $0x218] sm:$0xff]
        %v372 = vld [vmem:[%s254 + $0x220] sm:$0xff]
        %v373 = vld [vmem:[%s254 + $0x228] sm:$0xff]
        %v374 = vld [vmem:[%s254 + $0x230] sm:$0xff]
        %v375 = vld [vmem:[%s254 + $0x238] sm:$0xff]
        %v376 = vld [vmem:[%s254 + $0x240] sm:$0xff]
        %v377 = vld [vmem:[%s254 + $0x248] sm:$0xff]
        %v378 = vld [vmem:[%s254 + $0x250] sm:$0xff]
        %v379 = vld [vmem:[%s254 + $0x258] sm:$0xff]
        %v380 = vld [vmem:[%s254 + $0x260] sm:$0xff]
        %v381 = vld [vmem:[%s254 + $0x268] sm:$0xff]
        %v382 = vld [vmem:[%s254 + $0x270] sm:$0xff]
        %v383 = vld [vmem:[%s254 + $0x278] sm:$0xff]
        %v384 = vld [vmem:[%s254 + $0x280] sm:$0xff]
        %v385 = vld [vmem:[%s254 + $0x288] sm:$0xff]
        %v386 = vld [vmem:[%s254 + $0x290] sm:$0xff]
        %v387 = vld [vmem:[%s254 + $0x298] sm:$0xff]
        %v388 = vld [vmem:[%s254 + $0x2a0] sm:$0xff]
        %v389 = vld [vmem:[%s254 + $0x2a8] sm:$0xff]
        %v390 = vld [vmem:[%s254 + $0x2b0] sm:$0xff]
        %v391 = vld [vmem:[%s254 + $0x2b8] sm:$0xff]
        %v392 = vld [vmem:[%s254 + $0x2c0] sm:$0xff]
        %v393 = vld [vmem:[%s254 + $0x2c8] sm:$0xff]
        %v394 = vld [vmem:[%s254 + $0x2d0] sm:$0xff]
        %v395 = vld [vmem:[%s254 + $0x2d8] sm:$0xff]
        %v396 = vld [vmem:[%s254 + $0x2e0] sm:$0xff]
        %v397 = vld [vmem:[%s254 + $0x2e8] sm:$0xff]
        %v398 = vld [vmem:[%s254 + $0x2f0] sm:$0xff]
        %v399 = vld [vmem:[%s254 + $0x2f8] sm:$0xff]
        %v400 = vld [vmem:[%s254 + $0x300] sm:$0xff]
        %v401 = vld [vmem:[%s254 + $0x308] sm:$0xff]
        %v402 = vld [vmem:[%s254 + $0x310] sm:$0xff]
        %v403 = vld [vmem:[%s254 + $0x318] sm:$0xff]
        %v404 = vld [vmem:[%s254 + $0x320] sm:$0xff]
        %v405 = vld [vmem:[%s254 + $0x328] sm:$0xff]
        %v406 = vld [vmem:[%s254 + $0x330] sm:$0xff]
        %v407 = vld [vmem:[%s254 + $0x338] sm:$0xff]
        %v408 = vld [vmem:[%s254 + $0x340] sm:$0xff]
        %v409 = vld [vmem:[%s254 + $0x348] sm:$0xff]
        %v410 = vld [vmem:[%s254 + $0x350] sm:$0xff]
        %v411 = vld [vmem:[%s254 + $0x358] sm:$0xff]
        %v412 = vld [vmem:[%s254 + $0x360] sm:$0xff]
        %v413 = vld [vmem:[%s254 + $0x368] sm:$0xff]
        %v414 = vld [vmem:[%s254 + $0x370] sm:$0xff]
        %v415 = vld [vmem:[%s254 + $0x378] sm:$0xff]
        %v416 = vld [vmem:[%s254 + $0x380] sm:$0xff]
        %v417 = vld [vmem:[%s254 + $0x388] sm:$0xff]
        %v418 = vld [vmem:[%s254 + $0x390] sm:$0xff]
        %v419 = vld [vmem:[%s254 + $0x398] sm:$0xff]
        %v420 = vld [vmem:[%s254 + $0x3a0] sm:$0xff]
        %v421 = vld [vmem:[%s254 + $0x3a8] sm:$0xff]
        %v422 = vld [vmem:[%s254 + $0x3b0] sm:$0xff]
        %v423 = vld [vmem:[%s254 + $0x3b8] sm:$0xff]
        %v424 = vld [vmem:[%s254 + $0x3c0] sm:$0xff]
        %v425 = vld [vmem:[%s254 + $0x3c8] sm:$0xff]
        %v426 = vld [vmem:[%s254 + $0x3d0] sm:$0xff]
        %v427 = vld [vmem:[%s254 + $0x3d8] sm:$0xff]
        %v428 = vld [vmem:[%s254 + $0x3e0] sm:$0xff]
        %v429 = vld [vmem:[%s254 + $0x3e8] sm:$0xff]
        %v430 = vld [vmem:[%s254 + $0x3f0] sm:$0xff]
        %v431 = vld [vmem:[%s254 + $0x3f8] sm:$0xff]
        %v432 = vld [vmem:[%s254 + $0x400] sm:$0xff]
        %v433 = vld [vmem:[%s254 + $0x408] sm:$0xff]
        %v434 = vld [vmem:[%s254 + $0x410] sm:$0xff]
        %v435 = vld [vmem:[%s254 + $0x418] sm:$0xff]
        %v436 = vld [vmem:[%s254 + $0x420] sm:$0xff]
        %v437 = vld [vmem:[%s254 + $0x428] sm:$0xff]
        %v438 = vld [vmem:[%s254 + $0x430] sm:$0xff]
        %v439 = vld [vmem:[%s254 + $0x438] sm:$0xff]
        %v440 = vld [vmem:[%s254 + $0x440] sm:$0xff]
        %v441 = vld [vmem:[%s254 + $0x448] sm:$0xff]
        %v442 = vld [vmem:[%s254 + $0x450] sm:$0xff]
        %v443 = vld [vmem:[%s254 + $0x458] sm:$0xff]
        %v444 = vld [vmem:[%s254 + $0x460] sm:$0xff]
        %v445 = vld [vmem:[%s254 + $0x468] sm:$0xff]
        %v446 = vld [vmem:[%s254 + $0x470] sm:$0xff]
        %v447 = vld [vmem:[%s254 + $0x478] sm:$0xff]
        %v448 = vld [vmem:[%s254 + $0x480] sm:$0xff]
        %v449 = vld [vmem:[%s254 + $0x488] sm:$0xff]
        %v450 = vld [vmem:[%s254 + $0x490] sm:$0xff]
        %v451 = vld [vmem:[%s254 + $0x498] sm:$0xff]
        %v452 = vld [vmem:[%s254 + $0x4a0] sm:$0xff]
        %v453 = vld [vmem:[%s254 + $0x4a8] sm:$0xff]
        %v454 = vld [vmem:[%s254 + $0x4b0] sm:$0xff]
        %v455 = vld [vmem:[%s254 + $0x4b8] sm:$0xff]
        %v456 = vld [vmem:[%s254 + $0x4c0] sm:$0xff]
        %v457 = vld [vmem:[%s254 + $0x4c8] sm:$0xff]
        %v458 = vld [vmem:[%s254 + $0x4d0] sm:$0xff]
        %v459 = vld [vmem:[%s254 + $0x4d8] sm:$0xff]
        %v460 = vld [vmem:[%s254 + $0x4e0] sm:$0xff]
        %v461 = vld [vmem:[%s254 + $0x4e8] sm:$0xff]
        %v462 = vld [vmem:[%s254 + $0x4f0] sm:$0xff]
        %v463 = vld [vmem:[%s254 + $0x4f8] sm:$0xff]
        %v464 = vld [vmem:[%s254 + $0x500] sm:$0xff]
        %v465 = vld [vmem:[%s254 + $0x508] sm:$0xff]
        %v466 = vld [vmem:[%s254 + $0x510] sm:$0xff]
        %v467 = vld [vmem:[%s254 + $0x518] sm:$0xff]
        %v468 = vld [vmem:[%s254 + $0x520] sm:$0xff]
        %v469 = vld [vmem:[%s254 + $0x528] sm:$0xff]
        %v470 = vld [vmem:[%s254 + $0x530] sm:$0xff]
        %v471 = vld [vmem:[%s254 + $0x538] sm:$0xff]
        %v472 = vld [vmem:[%s254 + $0x540] sm:$0xff]
        %v473 = vld [vmem:[%s254 + $0x548] sm:$0xff]
        %v474 = vld [vmem:[%s254 + $0x550] sm:$0xff]
        %v475 = vld [vmem:[%s254 + $0x558] sm:$0xff]
        %v476 = vld [vmem:[%s254 + $0x560] sm:$0xff]
        %v477 = vld [vmem:[%s254 + $0x568] sm:$0xff]
        %v478 = vld [vmem:[%s254 + $0x570] sm:$0xff]
        %v479 = vld [vmem:[%s254 + $0x578] sm:$0xff]
        %v480 = vld [vmem:[%s254 + $0x580] sm:$0xff]
        %v481 = vld [vmem:[%s254 + $0x588] sm:$0xff]
        %v482 = vld [vmem:[%s254 + $0x590] sm:$0xff]
        %v483 = vld [vmem:[%s254 + $0x598] sm:$0xff]
        %v484 = vld [vmem:[%s254 + $0x5a0] sm:$0xff]
        %v485 = vld [vmem:[%s254 + $0x5a8] sm:$0xff]
        %v486 = vld [vmem:[%s254 + $0x5b0] sm:$0xff]
        %v487 = vld [vmem:[%s254 + $0x5b8] sm:$0xff]
        %v488 = vld [vmem:[%s254 + $0x5c0] sm:$0xff]
        %v489 = vld [vmem:[%s254 + $0x5c8] sm:$0xff]
        %v490 = vld [vmem:[%s254 + $0x5d0] sm:$0xff]
        %v491 = vld [vmem:[%s254 + $0x5d8] sm:$0xff]
        %v492 = vld [vmem:[%s254 + $0x5e0] sm:$0xff]
        %v493 = vld [vmem:[%s254 + $0x5e8] sm:$0xff]
        %v494 = vld [vmem:[%s254 + $0x5f0] sm:$0xff]
        %v495 = vld [vmem:[%s254 + $0x5f8] sm:$0xff]
        %v496 = vld [vmem:[%s254 + $0x600] sm:$0xff]
        %v497 = vld [vmem:[%s254 + $0x608] sm:$0xff]
        %v498 = vld [vmem:[%s254 + $0x610] sm:$0xff]
        %v499 = vld [vmem:[%s254 + $0x618] sm:$0xff]
        %v500 = vld [vmem:[%s254 + $0x620] sm:$0xff]
        %v501 = vld [vmem:[%s254 + $0x628] sm:$0xff]
        %v502 = vld [vmem:[%s254 + $0x630] sm:$0xff]
        %v503 = vld [vmem:[%s254 + $0x638] sm:$0xff]
        %v504 = vld [vmem:[%s254 + $0x640] sm:$0xff]
        %v505 = vld [vmem:[%s254 + $0x648] sm:$0xff]
        %v506 = vld [vmem:[%s254 + $0x650] sm:$0xff]
        %v507 = vld [vmem:[%s254 + $0x658] sm:$0xff]
        %v508 = vld [vmem:[%s254 + $0x660] sm:$0xff]
        %v509 = vld [vmem:[%s254 + $0x668] sm:$0xff]
        %v510 = vld [vmem:[%s254 + $0x670] sm:$0xff]
        %v511 = vld [vmem:[%s254 + $0x678] sm:$0xff]
        %v512 = vld [vmem:[%s254 + $0x680] sm:$0xff]
        %v513 = vld [vmem:[%s254 + $0x688] sm:$0xff]
        %v514 = vld [vmem:[%s254 + $0x690] sm:$0xff]
        %v515 = vld [vmem:[%s254 + $0x698] sm:$0xff]
        %v516 = vld [vmem:[%s254 + $0x6a0] sm:$0xff]
        %v517 = vld [vmem:[%s254 + $0x6a8] sm:$0xff]
        %v518 = vld [vmem:[%s254 + $0x6b0] sm:$0xff]
        %v519 = vld [vmem:[%s254 + $0x6b8] sm:$0xff]
        %v520 = vld [vmem:[%s254 + $0x6c0] sm:$0xff]
        %v521 = vld [vmem:[%s254 + $0x6c8] sm:$0xff]
        %v522 = vld [vmem:[%s254 + $0x6d0] sm:$0xff]
        %v523 = vld [vmem:[%s254 + $0x6d8] sm:$0xff]
        %v524 = vld [vmem:[%s254 + $0x6e0] sm:$0xff]
        %v525 = vld [vmem:[%s254 + $0x6e8] sm:$0xff]
        %v526 = vld [vmem:[%s254 + $0x6f0] sm:$0xff]
        %v527 = vld [vmem:[%s254 + $0x6f8] sm:$0xff]
        %v528 = vld [vmem:[%s254 + $0x700] sm:$0xff]
        %v529 = vld [vmem:[%s254 + $0x708] sm:$0xff]
        %v530 = vld [vmem:[%s254 + $0x710] sm:$0xff]
        %v531 = vld [vmem:[%s254 + $0x718] sm:$0xff]
        %v532 = vld [vmem:[%s254 + $0x720] sm:$0xff]
        %v533 = vld [vmem:[%s254 + $0x728] sm:$0xff]
        %v534 = vld [vmem:[%s254 + $0x730] sm:$0xff]
        %v535 = vld [vmem:[%s254 + $0x738] sm:$0xff]
        %v536 = vld [vmem:[%s254 + $0x740] sm:$0xff]
        %v537 = vld [vmem:[%s254 + $0x748] sm:$0xff]
        %v538 = vld [vmem:[%s254 + $0x750] sm:$0xff]
        %v539 = vld [vmem:[%s254 + $0x758] sm:$0xff]
        %v540 = vld [vmem:[%s254 + $0x760] sm:$0xff]
        %v541 = vld [vmem:[%s254 + $0x768] sm:$0xff]
        %v542 = vld [vmem:[%s254 + $0x770] sm:$0xff]
        %v543 = vld [vmem:[%s254 + $0x778] sm:$0xff]
        %v544 = vld [vmem:[%s254 + $0x780] sm:$0xff]
        %v545 = vld [vmem:[%s254 + $0x788] sm:$0xff]
        %v546 = vld [vmem:[%s254 + $0x790] sm:$0xff]
        %v547 = vld [vmem:[%s254 + $0x798] sm:$0xff]
        %v548 = vld [vmem:[%s254 + $0x7a0] sm:$0xff]
        %v549 = vld [vmem:[%s254 + $0x7a8] sm:$0xff]
        %v550 = vld [vmem:[%s254 + $0x7b0] sm:$0xff]
        %v551 = vld [vmem:[%s254 + $0x7b8] sm:$0xff]
        %v552 = vld [vmem:[%s254 + $0x7c0] sm:$0xff]
        %v553 = vld [vmem:[%s254 + $0x7c8] sm:$0xff]
        %v554 = vld [vmem:[%s254 + $0x7d0] sm:$0xff]
        %v555 = vld [vmem:[%s254 + $0x7d8] sm:$0xff]
        %v556 = vld [vmem:[%s254 + $0x7e0] sm:$0xff]
        %v557 = vld [vmem:[%s254 + $0x7e8] sm:$0xff]
        %v558 = vld [vmem:[%s254 + $0x7f0] sm:$0xff]
        %v559 = vld [vmem:[%s254 + $0x7f8] sm:$0xff]
        %v560 = vpack.c.bf16 %v312, %v304
        %v561 = vpack.c.bf16 %v313, %v305
        %v562 = vpack.c.bf16 %v314, %v306
        %v563 = vpack.c.bf16 %v315, %v307
        %v564 = vpack.c.bf16 %v316, %v308
        %v565 = vpack.c.bf16 %v317, %v309
        %v566 = vpack.c.bf16 %v318, %v310
        %v567 = vpack.c.bf16 %v319, %v311
        %v568 = vpack.c.bf16 %v328, %v320
        %v569 = vpack.c.bf16 %v329, %v321
        %v570 = vpack.c.bf16 %v330, %v322
        %v571 = vpack.c.bf16 %v331, %v323
        %v572 = vpack.c.bf16 %v332, %v324
        %v573 = vpack.c.bf16 %v333, %v325
        %v574 = vpack.c.bf16 %v334, %v326
        %v575 = vpack.c.bf16 %v335, %v327
        %v576 = vpack.c.bf16 %v344, %v336
        %v577 = vpack.c.bf16 %v345, %v337
        %v578 = vpack.c.bf16 %v346, %v338
        %v579 = vpack.c.bf16 %v347, %v339
        %v580 = vpack.c.bf16 %v348, %v340
        %v581 = vpack.c.bf16 %v349, %v341
        %v582 = vpack.c.bf16 %v350, %v342
        %v583 = vpack.c.bf16 %v351, %v343
        %v584 = vpack.c.bf16 %v360, %v352
        %v585 = vpack.c.bf16 %v361, %v353
        %v586 = vpack.c.bf16 %v362, %v354
        %v587 = vpack.c.bf16 %v363, %v355
        %v588 = vpack.c.bf16 %v364, %v356
        %v589 = vpack.c.bf16 %v365, %v357
        %v590 = vpack.c.bf16 %v366, %v358
        %v591 = vpack.c.bf16 %v367, %v359
        %v592 = vpack.c.bf16 %v376, %v368
        %v593 = vpack.c.bf16 %v377, %v369
        %v594 = vpack.c.bf16 %v378, %v370
        %v595 = vpack.c.bf16 %v379, %v371
        %v596 = vpack.c.bf16 %v380, %v372
        %v597 = vpack.c.bf16 %v381, %v373
        %v598 = vpack.c.bf16 %v382, %v374
        %v599 = vpack.c.bf16 %v383, %v375
        %v600 = vpack.c.bf16 %v392, %v384
        %v601 = vpack.c.bf16 %v393, %v385
        %v602 = vpack.c.bf16 %v394, %v386
        %v603 = vpack.c.bf16 %v395, %v387
        %v604 = vpack.c.bf16 %v396, %v388
        %v605 = vpack.c.bf16 %v397, %v389
        %v606 = vpack.c.bf16 %v398, %v390
        %v607 = vpack.c.bf16 %v399, %v391
        %v608 = vpack.c.bf16 %v408, %v400
        %v609 = vpack.c.bf16 %v409, %v401
        %v610 = vpack.c.bf16 %v410, %v402
        %v611 = vpack.c.bf16 %v411, %v403
        %v612 = vpack.c.bf16 %v412, %v404
        %v613 = vpack.c.bf16 %v413, %v405
        %v614 = vpack.c.bf16 %v414, %v406
        %v615 = vpack.c.bf16 %v415, %v407
        %v616 = vpack.c.bf16 %v424, %v416
        %v617 = vpack.c.bf16 %v425, %v417
        %v618 = vpack.c.bf16 %v426, %v418
        %v619 = vpack.c.bf16 %v427, %v419
        %v620 = vpack.c.bf16 %v428, %v420
        %v621 = vpack.c.bf16 %v429, %v421
        %v622 = vpack.c.bf16 %v430, %v422
        %v623 = vpack.c.bf16 %v431, %v423
        %v624 = vpack.c.bf16 %v440, %v432
        %v625 = vpack.c.bf16 %v441, %v433
        %v626 = vpack.c.bf16 %v442, %v434
        %v627 = vpack.c.bf16 %v443, %v435
        %v628 = vpack.c.bf16 %v444, %v436
        %v629 = vpack.c.bf16 %v445, %v437
        %v630 = vpack.c.bf16 %v446, %v438
        %v631 = vpack.c.bf16 %v447, %v439
        %v632 = vpack.c.bf16 %v456, %v448
        %v633 = vpack.c.bf16 %v457, %v449
        %v634 = vpack.c.bf16 %v458, %v450
        %v635 = vpack.c.bf16 %v459, %v451
        %v636 = vpack.c.bf16 %v460, %v452
        %v637 = vpack.c.bf16 %v461, %v453
        %v638 = vpack.c.bf16 %v462, %v454
        %v639 = vpack.c.bf16 %v463, %v455
        %v640 = vpack.c.bf16 %v472, %v464
        %v641 = vpack.c.bf16 %v473, %v465
        %v642 = vpack.c.bf16 %v474, %v466
        %v643 = vpack.c.bf16 %v475, %v467
        %v644 = vpack.c.bf16 %v476, %v468
        %v645 = vpack.c.bf16 %v477, %v469
        %v646 = vpack.c.bf16 %v478, %v470
        %v647 = vpack.c.bf16 %v479, %v471
        %v648 = vpack.c.bf16 %v488, %v480
        %v649 = vpack.c.bf16 %v489, %v481
        %v650 = vpack.c.bf16 %v490, %v482
        %v651 = vpack.c.bf16 %v491, %v483
        %v652 = vpack.c.bf16 %v492, %v484
        %v653 = vpack.c.bf16 %v493, %v485
        %v654 = vpack.c.bf16 %v494, %v486
        %v655 = vpack.c.bf16 %v495, %v487
        %v656 = vpack.c.bf16 %v504, %v496
        %v657 = vpack.c.bf16 %v505, %v497
        %v658 = vpack.c.bf16 %v506, %v498
        %v659 = vpack.c.bf16 %v507, %v499
        %v660 = vpack.c.bf16 %v508, %v500
        %v661 = vpack.c.bf16 %v509, %v501
        %v662 = vpack.c.bf16 %v510, %v502
        %v663 = vpack.c.bf16 %v511, %v503
        %v664 = vpack.c.bf16 %v520, %v512
        %v665 = vpack.c.bf16 %v521, %v513
        %v666 = vpack.c.bf16 %v522, %v514
        %v667 = vpack.c.bf16 %v523, %v515
        %v668 = vpack.c.bf16 %v524, %v516
        %v669 = vpack.c.bf16 %v525, %v517
        %v670 = vpack.c.bf16 %v526, %v518
        %v671 = vpack.c.bf16 %v527, %v519
        %v672 = vpack.c.bf16 %v536, %v528
        %v673 = vpack.c.bf16 %v537, %v529
        %v674 = vpack.c.bf16 %v538, %v530
        %v675 = vpack.c.bf16 %v539, %v531
        %v676 = vpack.c.bf16 %v540, %v532
        %v677 = vpack.c.bf16 %v541, %v533
        %v678 = vpack.c.bf16 %v542, %v534
        %v679 = vpack.c.bf16 %v543, %v535
        %v680 = vpack.c.bf16 %v552, %v544
        %v681 = vpack.c.bf16 %v553, %v545
        %v682 = vpack.c.bf16 %v554, %v546
        %v683 = vpack.c.bf16 %v555, %v547
        %v684 = vpack.c.bf16 %v556, %v548
        %v685 = vpack.c.bf16 %v557, %v549
        %v686 = vpack.c.bf16 %v558, %v550
        %v687 = vpack.c.bf16 %v559, %v551
        %v688 = vld [vmem:[#allocation6] sm:$0xff]
        %v689 = vld [vmem:[#allocation6 + $0x8] sm:$0xff]
        %v690 = vld [vmem:[#allocation6 + $0x10] sm:$0xff]
        %v691 = vld [vmem:[#allocation6 + $0x18] sm:$0xff]
        %v692 = vld [vmem:[#allocation6 + $0x20] sm:$0xff]
        %v693 = vld [vmem:[#allocation6 + $0x28] sm:$0xff]
        %v694 = vld [vmem:[#allocation6 + $0x30] sm:$0xff]
        %v695 = vld [vmem:[#allocation6 + $0x38] sm:$0xff]
        %v696 = vld [vmem:[#allocation6 + $0x40] sm:$0xff]
        %v697 = vld [vmem:[#allocation6 + $0x48] sm:$0xff]
        %v698 = vld [vmem:[#allocation6 + $0x50] sm:$0xff]
        %v699 = vld [vmem:[#allocation6 + $0x58] sm:$0xff]
        %v700 = vld [vmem:[#allocation6 + $0x60] sm:$0xff]
        %v701 = vld [vmem:[#allocation6 + $0x68] sm:$0xff]
        %v702 = vld [vmem:[#allocation6 + $0x70] sm:$0xff]
        %v703 = vld [vmem:[#allocation6 + $0x78] sm:$0xff]
        %v704 = vld [vmem:[#allocation6 + $0x80] sm:$0xff]
        %v705 = vld [vmem:[#allocation6 + $0x88] sm:$0xff]
        %v706 = vld [vmem:[#allocation6 + $0x90] sm:$0xff]
        %v707 = vld [vmem:[#allocation6 + $0x98] sm:$0xff]
        %v708 = vld [vmem:[#allocation6 + $0xa0] sm:$0xff]
        %v709 = vld [vmem:[#allocation6 + $0xa8] sm:$0xff]
        %v710 = vld [vmem:[#allocation6 + $0xb0] sm:$0xff]
        %v711 = vld [vmem:[#allocation6 + $0xb8] sm:$0xff]
        %v712 = vld [vmem:[#allocation6 + $0xc0] sm:$0xff]
        %v713 = vld [vmem:[#allocation6 + $0xc8] sm:$0xff]
        %v714 = vld [vmem:[#allocation6 + $0xd0] sm:$0xff]
        %v715 = vld [vmem:[#allocation6 + $0xd8] sm:$0xff]
        %v716 = vld [vmem:[#allocation6 + $0xe0] sm:$0xff]
        %v717 = vld [vmem:[#allocation6 + $0xe8] sm:$0xff]
        %v718 = vld [vmem:[#allocation6 + $0xf0] sm:$0xff]
        %v719 = vld [vmem:[#allocation6 + $0xf8] sm:$0xff]
        %v720 = vld [vmem:[#allocation6 + $0x100] sm:$0xff]
        %v721 = vld [vmem:[#allocation6 + $0x108] sm:$0xff]
        %v722 = vld [vmem:[#allocation6 + $0x110] sm:$0xff]
        %v723 = vld [vmem:[#allocation6 + $0x118] sm:$0xff]
        %v724 = vld [vmem:[#allocation6 + $0x120] sm:$0xff]
        %v725 = vld [vmem:[#allocation6 + $0x128] sm:$0xff]
        %v726 = vld [vmem:[#allocation6 + $0x130] sm:$0xff]
        %v727 = vld [vmem:[#allocation6 + $0x138] sm:$0xff]
        %v728 = vld [vmem:[#allocation6 + $0x140] sm:$0xff]
        %v729 = vld [vmem:[#allocation6 + $0x148] sm:$0xff]
        %v730 = vld [vmem:[#allocation6 + $0x150] sm:$0xff]
        %v731 = vld [vmem:[#allocation6 + $0x158] sm:$0xff]
        %v732 = vld [vmem:[#allocation6 + $0x160] sm:$0xff]
        %v733 = vld [vmem:[#allocation6 + $0x168] sm:$0xff]
        %v734 = vld [vmem:[#allocation6 + $0x170] sm:$0xff]
        %v735 = vld [vmem:[#allocation6 + $0x178] sm:$0xff]
        %v736 = vld [vmem:[#allocation6 + $0x180] sm:$0xff]
        %v737 = vld [vmem:[#allocation6 + $0x188] sm:$0xff]
        %v738 = vld [vmem:[#allocation6 + $0x190] sm:$0xff]
        %v739 = vld [vmem:[#allocation6 + $0x198] sm:$0xff]
        %v740 = vld [vmem:[#allocation6 + $0x1a0] sm:$0xff]
        %v741 = vld [vmem:[#allocation6 + $0x1a8] sm:$0xff]
        %v742 = vld [vmem:[#allocation6 + $0x1b0] sm:$0xff]
        %v743 = vld [vmem:[#allocation6 + $0x1b8] sm:$0xff]
        %v744 = vld [vmem:[#allocation6 + $0x1c0] sm:$0xff]
        %v745 = vld [vmem:[#allocation6 + $0x1c8] sm:$0xff]
        %v746 = vld [vmem:[#allocation6 + $0x1d0] sm:$0xff]
        %v747 = vld [vmem:[#allocation6 + $0x1d8] sm:$0xff]
        %v748 = vld [vmem:[#allocation6 + $0x1e0] sm:$0xff]
        %v749 = vld [vmem:[#allocation6 + $0x1e8] sm:$0xff]
        %v750 = vld [vmem:[#allocation6 + $0x1f0] sm:$0xff]
        %v751 = vld [vmem:[#allocation6 + $0x1f8] sm:$0xff]
        %v752 = vld [vmem:[#allocation6 + $0x200] sm:$0xff]
        %v753 = vld [vmem:[#allocation6 + $0x208] sm:$0xff]
        %v754 = vld [vmem:[#allocation6 + $0x210] sm:$0xff]
        %v755 = vld [vmem:[#allocation6 + $0x218] sm:$0xff]
        %v756 = vld [vmem:[#allocation6 + $0x220] sm:$0xff]
        %v757 = vld [vmem:[#allocation6 + $0x228] sm:$0xff]
        %v758 = vld [vmem:[#allocation6 + $0x230] sm:$0xff]
        %v759 = vld [vmem:[#allocation6 + $0x238] sm:$0xff]
        %v760 = vld [vmem:[#allocation6 + $0x240] sm:$0xff]
        %v761 = vld [vmem:[#allocation6 + $0x248] sm:$0xff]
        %v762 = vld [vmem:[#allocation6 + $0x250] sm:$0xff]
        %v763 = vld [vmem:[#allocation6 + $0x258] sm:$0xff]
        %v764 = vld [vmem:[#allocation6 + $0x260] sm:$0xff]
        %v765 = vld [vmem:[#allocation6 + $0x268] sm:$0xff]
        %v766 = vld [vmem:[#allocation6 + $0x270] sm:$0xff]
        %v767 = vld [vmem:[#allocation6 + $0x278] sm:$0xff]
        %v768 = vld [vmem:[#allocation6 + $0x280] sm:$0xff]
        %v769 = vld [vmem:[#allocation6 + $0x288] sm:$0xff]
        %v770 = vld [vmem:[#allocation6 + $0x290] sm:$0xff]
        %v771 = vld [vmem:[#allocation6 + $0x298] sm:$0xff]
        %v772 = vld [vmem:[#allocation6 + $0x2a0] sm:$0xff]
        %v773 = vld [vmem:[#allocation6 + $0x2a8] sm:$0xff]
        %v774 = vld [vmem:[#allocation6 + $0x2b0] sm:$0xff]
        %v775 = vld [vmem:[#allocation6 + $0x2b8] sm:$0xff]
        %v776 = vld [vmem:[#allocation6 + $0x2c0] sm:$0xff]
        %v777 = vld [vmem:[#allocation6 + $0x2c8] sm:$0xff]
        %v778 = vld [vmem:[#allocation6 + $0x2d0] sm:$0xff]
        %v779 = vld [vmem:[#allocation6 + $0x2d8] sm:$0xff]
        %v780 = vld [vmem:[#allocation6 + $0x2e0] sm:$0xff]
        %v781 = vld [vmem:[#allocation6 + $0x2e8] sm:$0xff]
        %v782 = vld [vmem:[#allocation6 + $0x2f0] sm:$0xff]
        %v783 = vld [vmem:[#allocation6 + $0x2f8] sm:$0xff]
        %v784 = vld [vmem:[#allocation6 + $0x300] sm:$0xff]
        %v785 = vld [vmem:[#allocation6 + $0x308] sm:$0xff]
        %v786 = vld [vmem:[#allocation6 + $0x310] sm:$0xff]
        %v787 = vld [vmem:[#allocation6 + $0x318] sm:$0xff]
        %v788 = vld [vmem:[#allocation6 + $0x320] sm:$0xff]
        %v789 = vld [vmem:[#allocation6 + $0x328] sm:$0xff]
        %v790 = vld [vmem:[#allocation6 + $0x330] sm:$0xff]
        %v791 = vld [vmem:[#allocation6 + $0x338] sm:$0xff]
        %v792 = vld [vmem:[#allocation6 + $0x340] sm:$0xff]
        %v793 = vld [vmem:[#allocation6 + $0x348] sm:$0xff]
        %v794 = vld [vmem:[#allocation6 + $0x350] sm:$0xff]
        %v795 = vld [vmem:[#allocation6 + $0x358] sm:$0xff]
        %v796 = vld [vmem:[#allocation6 + $0x360] sm:$0xff]
        %v797 = vld [vmem:[#allocation6 + $0x368] sm:$0xff]
        %v798 = vld [vmem:[#allocation6 + $0x370] sm:$0xff]
        %v799 = vld [vmem:[#allocation6 + $0x378] sm:$0xff]
        %v800 = vld [vmem:[#allocation6 + $0x380] sm:$0xff]
        %v801 = vld [vmem:[#allocation6 + $0x388] sm:$0xff]
        %v802 = vld [vmem:[#allocation6 + $0x390] sm:$0xff]
        %v803 = vld [vmem:[#allocation6 + $0x398] sm:$0xff]
        %v804 = vld [vmem:[#allocation6 + $0x3a0] sm:$0xff]
        %v805 = vld [vmem:[#allocation6 + $0x3a8] sm:$0xff]
        %v806 = vld [vmem:[#allocation6 + $0x3b0] sm:$0xff]
        %v807 = vld [vmem:[#allocation6 + $0x3b8] sm:$0xff]
        %v808 = vld [vmem:[#allocation6 + $0x3c0] sm:$0xff]
        %v809 = vld [vmem:[#allocation6 + $0x3c8] sm:$0xff]
        %v810 = vld [vmem:[#allocation6 + $0x3d0] sm:$0xff]
        %v811 = vld [vmem:[#allocation6 + $0x3d8] sm:$0xff]
        %v812 = vld [vmem:[#allocation6 + $0x3e0] sm:$0xff]
        %v813 = vld [vmem:[#allocation6 + $0x3e8] sm:$0xff]
        %v814 = vld [vmem:[#allocation6 + $0x3f0] sm:$0xff]
        %v815 = vld [vmem:[#allocation6 + $0x3f8] sm:$0xff]
        %v816 = vld [vmem:[#allocation6 + $0x400] sm:$0xff]
        %v817 = vld [vmem:[#allocation6 + $0x408] sm:$0xff]
        %v818 = vld [vmem:[#allocation6 + $0x410] sm:$0xff]
        %v819 = vld [vmem:[#allocation6 + $0x418] sm:$0xff]
        %v820 = vld [vmem:[#allocation6 + $0x420] sm:$0xff]
        %v821 = vld [vmem:[#allocation6 + $0x428] sm:$0xff]
        %v822 = vld [vmem:[#allocation6 + $0x430] sm:$0xff]
        %v823 = vld [vmem:[#allocation6 + $0x438] sm:$0xff]
        %v824 = vld [vmem:[#allocation6 + $0x440] sm:$0xff]
        %v825 = vld [vmem:[#allocation6 + $0x448] sm:$0xff]
        %v826 = vld [vmem:[#allocation6 + $0x450] sm:$0xff]
        %v827 = vld [vmem:[#allocation6 + $0x458] sm:$0xff]
        %v828 = vld [vmem:[#allocation6 + $0x460] sm:$0xff]
        %v829 = vld [vmem:[#allocation6 + $0x468] sm:$0xff]
        %v830 = vld [vmem:[#allocation6 + $0x470] sm:$0xff]
        %v831 = vld [vmem:[#allocation6 + $0x478] sm:$0xff]
        %v832 = vld [vmem:[#allocation6 + $0x480] sm:$0xff]
        %v833 = vld [vmem:[#allocation6 + $0x488] sm:$0xff]
        %v834 = vld [vmem:[#allocation6 + $0x490] sm:$0xff]
        %v835 = vld [vmem:[#allocation6 + $0x498] sm:$0xff]
        %v836 = vld [vmem:[#allocation6 + $0x4a0] sm:$0xff]
        %v837 = vld [vmem:[#allocation6 + $0x4a8] sm:$0xff]
        %v838 = vld [vmem:[#allocation6 + $0x4b0] sm:$0xff]
        %v839 = vld [vmem:[#allocation6 + $0x4b8] sm:$0xff]
        %v840 = vld [vmem:[#allocation6 + $0x4c0] sm:$0xff]
        %v841 = vld [vmem:[#allocation6 + $0x4c8] sm:$0xff]
        %v842 = vld [vmem:[#allocation6 + $0x4d0] sm:$0xff]
        %v843 = vld [vmem:[#allocation6 + $0x4d8] sm:$0xff]
        %v844 = vld [vmem:[#allocation6 + $0x4e0] sm:$0xff]
        %v845 = vld [vmem:[#allocation6 + $0x4e8] sm:$0xff]
        %v846 = vld [vmem:[#allocation6 + $0x4f0] sm:$0xff]
        %v847 = vld [vmem:[#allocation6 + $0x4f8] sm:$0xff]
        %v848 = vld [vmem:[#allocation6 + $0x500] sm:$0xff]
        %v849 = vld [vmem:[#allocation6 + $0x508] sm:$0xff]
        %v850 = vld [vmem:[#allocation6 + $0x510] sm:$0xff]
        %v851 = vld [vmem:[#allocation6 + $0x518] sm:$0xff]
        %v852 = vld [vmem:[#allocation6 + $0x520] sm:$0xff]
        %v853 = vld [vmem:[#allocation6 + $0x528] sm:$0xff]
        %v854 = vld [vmem:[#allocation6 + $0x530] sm:$0xff]
        %v855 = vld [vmem:[#allocation6 + $0x538] sm:$0xff]
        %v856 = vld [vmem:[#allocation6 + $0x540] sm:$0xff]
        %v857 = vld [vmem:[#allocation6 + $0x548] sm:$0xff]
        %v858 = vld [vmem:[#allocation6 + $0x550] sm:$0xff]
        %v859 = vld [vmem:[#allocation6 + $0x558] sm:$0xff]
        %v860 = vld [vmem:[#allocation6 + $0x560] sm:$0xff]
        %v861 = vld [vmem:[#allocation6 + $0x568] sm:$0xff]
        %v862 = vld [vmem:[#allocation6 + $0x570] sm:$0xff]
        %v863 = vld [vmem:[#allocation6 + $0x578] sm:$0xff]
        %v864 = vld [vmem:[#allocation6 + $0x580] sm:$0xff]
        %v865 = vld [vmem:[#allocation6 + $0x588] sm:$0xff]
        %v866 = vld [vmem:[#allocation6 + $0x590] sm:$0xff]
        %v867 = vld [vmem:[#allocation6 + $0x598] sm:$0xff]
        %v868 = vld [vmem:[#allocation6 + $0x5a0] sm:$0xff]
        %v869 = vld [vmem:[#allocation6 + $0x5a8] sm:$0xff]
        %v870 = vld [vmem:[#allocation6 + $0x5b0] sm:$0xff]
        %v871 = vld [vmem:[#allocation6 + $0x5b8] sm:$0xff]
        %v872 = vld [vmem:[#allocation6 + $0x5c0] sm:$0xff]
        %v873 = vld [vmem:[#allocation6 + $0x5c8] sm:$0xff]
        %v874 = vld [vmem:[#allocation6 + $0x5d0] sm:$0xff]
        %v875 = vld [vmem:[#allocation6 + $0x5d8] sm:$0xff]
        %v876 = vld [vmem:[#allocation6 + $0x5e0] sm:$0xff]
        %v877 = vld [vmem:[#allocation6 + $0x5e8] sm:$0xff]
        %v878 = vld [vmem:[#allocation6 + $0x5f0] sm:$0xff]
        %v879 = vld [vmem:[#allocation6 + $0x5f8] sm:$0xff]
        %v880 = vld [vmem:[#allocation6 + $0x600] sm:$0xff]
        %v881 = vld [vmem:[#allocation6 + $0x608] sm:$0xff]
        %v882 = vld [vmem:[#allocation6 + $0x610] sm:$0xff]
        %v883 = vld [vmem:[#allocation6 + $0x618] sm:$0xff]
        %v884 = vld [vmem:[#allocation6 + $0x620] sm:$0xff]
        %v885 = vld [vmem:[#allocation6 + $0x628] sm:$0xff]
        %v886 = vld [vmem:[#allocation6 + $0x630] sm:$0xff]
        %v887 = vld [vmem:[#allocation6 + $0x638] sm:$0xff]
        %v888 = vld [vmem:[#allocation6 + $0x640] sm:$0xff]
        %v889 = vld [vmem:[#allocation6 + $0x648] sm:$0xff]
        %v890 = vld [vmem:[#allocation6 + $0x650] sm:$0xff]
        %v891 = vld [vmem:[#allocation6 + $0x658] sm:$0xff]
        %v892 = vld [vmem:[#allocation6 + $0x660] sm:$0xff]
        %v893 = vld [vmem:[#allocation6 + $0x668] sm:$0xff]
        %v894 = vld [vmem:[#allocation6 + $0x670] sm:$0xff]
        %v895 = vld [vmem:[#allocation6 + $0x678] sm:$0xff]
        %v896 = vld [vmem:[#allocation6 + $0x680] sm:$0xff]
        %v897 = vld [vmem:[#allocation6 + $0x688] sm:$0xff]
        %v898 = vld [vmem:[#allocation6 + $0x690] sm:$0xff]
        %v899 = vld [vmem:[#allocation6 + $0x698] sm:$0xff]
        %v900 = vld [vmem:[#allocation6 + $0x6a0] sm:$0xff]
        %v901 = vld [vmem:[#allocation6 + $0x6a8] sm:$0xff]
        %v902 = vld [vmem:[#allocation6 + $0x6b0] sm:$0xff]
        %v903 = vld [vmem:[#allocation6 + $0x6b8] sm:$0xff]
        %v904 = vld [vmem:[#allocation6 + $0x6c0] sm:$0xff]
        %v905 = vld [vmem:[#allocation6 + $0x6c8] sm:$0xff]
        %v906 = vld [vmem:[#allocation6 + $0x6d0] sm:$0xff]
        %v907 = vld [vmem:[#allocation6 + $0x6d8] sm:$0xff]
        %v908 = vld [vmem:[#allocation6 + $0x6e0] sm:$0xff]
        %v909 = vld [vmem:[#allocation6 + $0x6e8] sm:$0xff]
        %v910 = vld [vmem:[#allocation6 + $0x6f0] sm:$0xff]
        %v911 = vld [vmem:[#allocation6 + $0x6f8] sm:$0xff]
        %v912 = vld [vmem:[#allocation6 + $0x700] sm:$0xff]
        %v913 = vld [vmem:[#allocation6 + $0x708] sm:$0xff]
        %v914 = vld [vmem:[#allocation6 + $0x710] sm:$0xff]
        %v915 = vld [vmem:[#allocation6 + $0x718] sm:$0xff]
        %v916 = vld [vmem:[#allocation6 + $0x720] sm:$0xff]
        %v917 = vld [vmem:[#allocation6 + $0x728] sm:$0xff]
        %v918 = vld [vmem:[#allocation6 + $0x730] sm:$0xff]
        %v919 = vld [vmem:[#allocation6 + $0x738] sm:$0xff]
        %v920 = vld [vmem:[#allocation6 + $0x740] sm:$0xff]
        %v921 = vld [vmem:[#allocation6 + $0x748] sm:$0xff]
        %v922 = vld [vmem:[#allocation6 + $0x750] sm:$0xff]
        %v923 = vld [vmem:[#allocation6 + $0x758] sm:$0xff]
        %v924 = vld [vmem:[#allocation6 + $0x760] sm:$0xff]
        %v925 = vld [vmem:[#allocation6 + $0x768] sm:$0xff]
        %v926 = vld [vmem:[#allocation6 + $0x770] sm:$0xff]
        %v927 = vld [vmem:[#allocation6 + $0x778] sm:$0xff]
        %v928 = vld [vmem:[#allocation6 + $0x780] sm:$0xff]
        %v929 = vld [vmem:[#allocation6 + $0x788] sm:$0xff]
        %v930 = vld [vmem:[#allocation6 + $0x790] sm:$0xff]
        %v931 = vld [vmem:[#allocation6 + $0x798] sm:$0xff]
        %v932 = vld [vmem:[#allocation6 + $0x7a0] sm:$0xff]
        %v933 = vld [vmem:[#allocation6 + $0x7a8] sm:$0xff]
        %v934 = vld [vmem:[#allocation6 + $0x7b0] sm:$0xff]
        %v935 = vld [vmem:[#allocation6 + $0x7b8] sm:$0xff]
        %v936 = vld [vmem:[#allocation6 + $0x7c0] sm:$0xff]
        %v937 = vld [vmem:[#allocation6 + $0x7c8] sm:$0xff]
        %v938 = vld [vmem:[#allocation6 + $0x7d0] sm:$0xff]
        %v939 = vld [vmem:[#allocation6 + $0x7d8] sm:$0xff]
        %v940 = vld [vmem:[#allocation6 + $0x7e0] sm:$0xff]
        %v941 = vld [vmem:[#allocation6 + $0x7e8] sm:$0xff]
        %v942 = vld [vmem:[#allocation6 + $0x7f0] sm:$0xff]
        %v943 = vld [vmem:[#allocation6 + $0x7f8] sm:$0xff]
        %v944 = vld [vmem:[#allocation8] sm:$0xf]
        %v946 = vlaneseq
        %v947 = vshrl.u32 %v946, 7
        %v948 = vsub.s32 0, %v947
        %v949 = vrot.slane %v944, %v948
        %v950 = vlaneseq
        %v951 = vshrl.u32 %v950, 7
        %v952 = vsub.s32 1, %v951
        %v953 = vrot.slane %v944, %v952
        %v954 = vlaneseq
        %v955 = vshrl.u32 %v954, 7
        %v956 = vsub.s32 2, %v955
        %v957 = vrot.slane %v944, %v956
        %v958 = vlaneseq
        %v959 = vshrl.u32 %v958, 7
        %v960 = vsub.s32 3, %v959
        %v961 = vrot.slane %v944, %v960
        %v1222 = vunpack.c.l.b16 %v688
        %v1223 = vunpack.c.h.b16 %v688
        %v1224 = vunpack.c.l.b16 %v689
        %v1225 = vunpack.c.h.b16 %v689
        %v1226 = vunpack.c.l.b16 %v690
        %v1227 = vunpack.c.h.b16 %v690
        %v1228 = vunpack.c.l.b16 %v691
        %v1229 = vunpack.c.h.b16 %v691
        %v1230 = vunpack.c.l.b16 %v692
        %v1231 = vunpack.c.h.b16 %v692
        %v1232 = vunpack.c.l.b16 %v693
        %v1233 = vunpack.c.h.b16 %v693
        %v1234 = vunpack.c.l.b16 %v694
        %v1235 = vunpack.c.h.b16 %v694
        %v1236 = vunpack.c.l.b16 %v695
        %v1237 = vunpack.c.h.b16 %v695
        %v1238 = vunpack.c.l.b16 %v696
        %v1239 = vunpack.c.h.b16 %v696
        %v1240 = vunpack.c.l.b16 %v697
        %v1241 = vunpack.c.h.b16 %v697
        %v1242 = vunpack.c.l.b16 %v698
        %v1243 = vunpack.c.h.b16 %v698
        %v1244 = vunpack.c.l.b16 %v699
        %v1245 = vunpack.c.h.b16 %v699
        %v1246 = vunpack.c.l.b16 %v700
        %v1247 = vunpack.c.h.b16 %v700
        %v1248 = vunpack.c.l.b16 %v701
        %v1249 = vunpack.c.h.b16 %v701
        %v1250 = vunpack.c.l.b16 %v702
        %v1251 = vunpack.c.h.b16 %v702
        %v1252 = vunpack.c.l.b16 %v703
        %v1253 = vunpack.c.h.b16 %v703
        %v1254 = vunpack.c.l.b16 %v704
        %v1255 = vunpack.c.h.b16 %v704
        %v1256 = vunpack.c.l.b16 %v705
        %v1257 = vunpack.c.h.b16 %v705
        %v1258 = vunpack.c.l.b16 %v706
        %v1259 = vunpack.c.h.b16 %v706
        %v1260 = vunpack.c.l.b16 %v707
        %v1261 = vunpack.c.h.b16 %v707
        %v1262 = vunpack.c.l.b16 %v708
        %v1263 = vunpack.c.h.b16 %v708
        %v1264 = vunpack.c.l.b16 %v709
        %v1265 = vunpack.c.h.b16 %v709
        %v1266 = vunpack.c.l.b16 %v710
        %v1267 = vunpack.c.h.b16 %v710
        %v1268 = vunpack.c.l.b16 %v711
        %v1269 = vunpack.c.h.b16 %v711
        %v1270 = vunpack.c.l.b16 %v712
        %v1271 = vunpack.c.h.b16 %v712
        %v1272 = vunpack.c.l.b16 %v713
        %v1273 = vunpack.c.h.b16 %v713
        %v1274 = vunpack.c.l.b16 %v714
        %v1275 = vunpack.c.h.b16 %v714
        %v1276 = vunpack.c.l.b16 %v715
        %v1277 = vunpack.c.h.b16 %v715
        %v1278 = vunpack.c.l.b16 %v716
        %v1279 = vunpack.c.h.b16 %v716
        %v1280 = vunpack.c.l.b16 %v717
        %v1281 = vunpack.c.h.b16 %v717
        %v1282 = vunpack.c.l.b16 %v718
        %v1283 = vunpack.c.h.b16 %v718
        %v1284 = vunpack.c.l.b16 %v719
        %v1285 = vunpack.c.h.b16 %v719
        %v1286 = vunpack.c.l.b16 %v720
        %v1287 = vunpack.c.h.b16 %v720
        %v1288 = vunpack.c.l.b16 %v721
        %v1289 = vunpack.c.h.b16 %v721
        %v1290 = vunpack.c.l.b16 %v722
        %v1291 = vunpack.c.h.b16 %v722
        %v1292 = vunpack.c.l.b16 %v723
        %v1293 = vunpack.c.h.b16 %v723
        %v1294 = vunpack.c.l.b16 %v724
        %v1295 = vunpack.c.h.b16 %v724
        %v1296 = vunpack.c.l.b16 %v725
        %v1297 = vunpack.c.h.b16 %v725
        %v1298 = vunpack.c.l.b16 %v726
        %v1299 = vunpack.c.h.b16 %v726
        %v1300 = vunpack.c.l.b16 %v727
        %v1301 = vunpack.c.h.b16 %v727
        %v1302 = vunpack.c.l.b16 %v728
        %v1303 = vunpack.c.h.b16 %v728
        %v1304 = vunpack.c.l.b16 %v729
        %v1305 = vunpack.c.h.b16 %v729
        %v1306 = vunpack.c.l.b16 %v730
        %v1307 = vunpack.c.h.b16 %v730
        %v1308 = vunpack.c.l.b16 %v731
        %v1309 = vunpack.c.h.b16 %v731
        %v1310 = vunpack.c.l.b16 %v732
        %v1311 = vunpack.c.h.b16 %v732
        %v1312 = vunpack.c.l.b16 %v733
        %v1313 = vunpack.c.h.b16 %v733
        %v1314 = vunpack.c.l.b16 %v734
        %v1315 = vunpack.c.h.b16 %v734
        %v1316 = vunpack.c.l.b16 %v735
        %v1317 = vunpack.c.h.b16 %v735
        %v1318 = vunpack.c.l.b16 %v736
        %v1319 = vunpack.c.h.b16 %v736
        %v1320 = vunpack.c.l.b16 %v737
        %v1321 = vunpack.c.h.b16 %v737
        %v1322 = vunpack.c.l.b16 %v738
        %v1323 = vunpack.c.h.b16 %v738
        %v1324 = vunpack.c.l.b16 %v739
        %v1325 = vunpack.c.h.b16 %v739
        %v1326 = vunpack.c.l.b16 %v740
        %v1327 = vunpack.c.h.b16 %v740
        %v1328 = vunpack.c.l.b16 %v741
        %v1329 = vunpack.c.h.b16 %v741
        %v1330 = vunpack.c.l.b16 %v742
        %v1331 = vunpack.c.h.b16 %v742
        %v1332 = vunpack.c.l.b16 %v743
        %v1333 = vunpack.c.h.b16 %v743
        %v1334 = vunpack.c.l.b16 %v744
        %v1335 = vunpack.c.h.b16 %v744
        %v1336 = vunpack.c.l.b16 %v745
        %v1337 = vunpack.c.h.b16 %v745
        %v1338 = vunpack.c.l.b16 %v746
        %v1339 = vunpack.c.h.b16 %v746
        %v1340 = vunpack.c.l.b16 %v747
        %v1341 = vunpack.c.h.b16 %v747
        %v1342 = vunpack.c.l.b16 %v748
        %v1343 = vunpack.c.h.b16 %v748
        %v1344 = vunpack.c.l.b16 %v749
        %v1345 = vunpack.c.h.b16 %v749
        %v1346 = vunpack.c.l.b16 %v750
        %v1347 = vunpack.c.h.b16 %v750
        %v1348 = vunpack.c.l.b16 %v751
        %v1349 = vunpack.c.h.b16 %v751
        %v1350 = vunpack.c.l.b16 %v752
        %v1351 = vunpack.c.h.b16 %v752
        %v1352 = vunpack.c.l.b16 %v753
        %v1353 = vunpack.c.h.b16 %v753
        %v1354 = vunpack.c.l.b16 %v754
        %v1355 = vunpack.c.h.b16 %v754
        %v1356 = vunpack.c.l.b16 %v755
        %v1357 = vunpack.c.h.b16 %v755
        %v1358 = vunpack.c.l.b16 %v756
        %v1359 = vunpack.c.h.b16 %v756
        %v1360 = vunpack.c.l.b16 %v757
        %v1361 = vunpack.c.h.b16 %v757
        %v1362 = vunpack.c.l.b16 %v758
        %v1363 = vunpack.c.h.b16 %v758
        %v1364 = vunpack.c.l.b16 %v759
        %v1365 = vunpack.c.h.b16 %v759
        %v1366 = vunpack.c.l.b16 %v760
        %v1367 = vunpack.c.h.b16 %v760
        %v1368 = vunpack.c.l.b16 %v761
        %v1369 = vunpack.c.h.b16 %v761
        %v1370 = vunpack.c.l.b16 %v762
        %v1371 = vunpack.c.h.b16 %v762
        %v1372 = vunpack.c.l.b16 %v763
        %v1373 = vunpack.c.h.b16 %v763
        %v1374 = vunpack.c.l.b16 %v764
        %v1375 = vunpack.c.h.b16 %v764
        %v1376 = vunpack.c.l.b16 %v765
        %v1377 = vunpack.c.h.b16 %v765
        %v1378 = vunpack.c.l.b16 %v766
        %v1379 = vunpack.c.h.b16 %v766
        %v1380 = vunpack.c.l.b16 %v767
        %v1381 = vunpack.c.h.b16 %v767
        %v1382 = vunpack.c.l.b16 %v768
        %v1383 = vunpack.c.h.b16 %v768
        %v1384 = vunpack.c.l.b16 %v769
        %v1385 = vunpack.c.h.b16 %v769
        %v1386 = vunpack.c.l.b16 %v770
        %v1387 = vunpack.c.h.b16 %v770
        %v1388 = vunpack.c.l.b16 %v771
        %v1389 = vunpack.c.h.b16 %v771
        %v1390 = vunpack.c.l.b16 %v772
        %v1391 = vunpack.c.h.b16 %v772
        %v1392 = vunpack.c.l.b16 %v773
        %v1393 = vunpack.c.h.b16 %v773
        %v1394 = vunpack.c.l.b16 %v774
        %v1395 = vunpack.c.h.b16 %v774
        %v1396 = vunpack.c.l.b16 %v775
        %v1397 = vunpack.c.h.b16 %v775
        %v1398 = vunpack.c.l.b16 %v776
        %v1399 = vunpack.c.h.b16 %v776
        %v1400 = vunpack.c.l.b16 %v777
        %v1401 = vunpack.c.h.b16 %v777
        %v1402 = vunpack.c.l.b16 %v778
        %v1403 = vunpack.c.h.b16 %v778
        %v1404 = vunpack.c.l.b16 %v779
        %v1405 = vunpack.c.h.b16 %v779
        %v1406 = vunpack.c.l.b16 %v780
        %v1407 = vunpack.c.h.b16 %v780
        %v1408 = vunpack.c.l.b16 %v781
        %v1409 = vunpack.c.h.b16 %v781
        %v1410 = vunpack.c.l.b16 %v782
        %v1411 = vunpack.c.h.b16 %v782
        %v1412 = vunpack.c.l.b16 %v783
        %v1413 = vunpack.c.h.b16 %v783
        %v1414 = vunpack.c.l.b16 %v784
        %v1415 = vunpack.c.h.b16 %v784
        %v1416 = vunpack.c.l.b16 %v785
        %v1417 = vunpack.c.h.b16 %v785
        %v1418 = vunpack.c.l.b16 %v786
        %v1419 = vunpack.c.h.b16 %v786
        %v1420 = vunpack.c.l.b16 %v787
        %v1421 = vunpack.c.h.b16 %v787
        %v1422 = vunpack.c.l.b16 %v788
        %v1423 = vunpack.c.h.b16 %v788
        %v1424 = vunpack.c.l.b16 %v789
        %v1425 = vunpack.c.h.b16 %v789
        %v1426 = vunpack.c.l.b16 %v790
        %v1427 = vunpack.c.h.b16 %v790
        %v1428 = vunpack.c.l.b16 %v791
        %v1429 = vunpack.c.h.b16 %v791
        %v1430 = vunpack.c.l.b16 %v792
        %v1431 = vunpack.c.h.b16 %v792
        %v1432 = vunpack.c.l.b16 %v793
        %v1433 = vunpack.c.h.b16 %v793
        %v1434 = vunpack.c.l.b16 %v794
        %v1435 = vunpack.c.h.b16 %v794
        %v1436 = vunpack.c.l.b16 %v795
        %v1437 = vunpack.c.h.b16 %v795
        %v1438 = vunpack.c.l.b16 %v796
        %v1439 = vunpack.c.h.b16 %v796
        %v1440 = vunpack.c.l.b16 %v797
        %v1441 = vunpack.c.h.b16 %v797
        %v1442 = vunpack.c.l.b16 %v798
        %v1443 = vunpack.c.h.b16 %v798
        %v1444 = vunpack.c.l.b16 %v799
        %v1445 = vunpack.c.h.b16 %v799
        %v1446 = vunpack.c.l.b16 %v800
        %v1447 = vunpack.c.h.b16 %v800
        %v1448 = vunpack.c.l.b16 %v801
        %v1449 = vunpack.c.h.b16 %v801
        %v1450 = vunpack.c.l.b16 %v802
        %v1451 = vunpack.c.h.b16 %v802
        %v1452 = vunpack.c.l.b16 %v803
        %v1453 = vunpack.c.h.b16 %v803
        %v1454 = vunpack.c.l.b16 %v804
        %v1455 = vunpack.c.h.b16 %v804
        %v1456 = vunpack.c.l.b16 %v805
        %v1457 = vunpack.c.h.b16 %v805
        %v1458 = vunpack.c.l.b16 %v806
        %v1459 = vunpack.c.h.b16 %v806
        %v1460 = vunpack.c.l.b16 %v807
        %v1461 = vunpack.c.h.b16 %v807
        %v1462 = vunpack.c.l.b16 %v808
        %v1463 = vunpack.c.h.b16 %v808
        %v1464 = vunpack.c.l.b16 %v809
        %v1465 = vunpack.c.h.b16 %v809
        %v1466 = vunpack.c.l.b16 %v810
        %v1467 = vunpack.c.h.b16 %v810
        %v1468 = vunpack.c.l.b16 %v811
        %v1469 = vunpack.c.h.b16 %v811
        %v1470 = vunpack.c.l.b16 %v812
        %v1471 = vunpack.c.h.b16 %v812
        %v1472 = vunpack.c.l.b16 %v813
        %v1473 = vunpack.c.h.b16 %v813
        %v1474 = vunpack.c.l.b16 %v814
        %v1475 = vunpack.c.h.b16 %v814
        %v1476 = vunpack.c.l.b16 %v815
        %v1477 = vunpack.c.h.b16 %v815
        %v1478 = vunpack.c.l.b16 %v816
        %v1479 = vunpack.c.h.b16 %v816
        %v1480 = vunpack.c.l.b16 %v817
        %v1481 = vunpack.c.h.b16 %v817
        %v1482 = vunpack.c.l.b16 %v818
        %v1483 = vunpack.c.h.b16 %v818
        %v1484 = vunpack.c.l.b16 %v819
        %v1485 = vunpack.c.h.b16 %v819
        %v1486 = vunpack.c.l.b16 %v820
        %v1487 = vunpack.c.h.b16 %v820
        %v1488 = vunpack.c.l.b16 %v821
        %v1489 = vunpack.c.h.b16 %v821
        %v1490 = vunpack.c.l.b16 %v822
        %v1491 = vunpack.c.h.b16 %v822
        %v1492 = vunpack.c.l.b16 %v823
        %v1493 = vunpack.c.h.b16 %v823
        %v1494 = vunpack.c.l.b16 %v824
        %v1495 = vunpack.c.h.b16 %v824
        %v1496 = vunpack.c.l.b16 %v825
        %v1497 = vunpack.c.h.b16 %v825
        %v1498 = vunpack.c.l.b16 %v826
        %v1499 = vunpack.c.h.b16 %v826
        %v1500 = vunpack.c.l.b16 %v827
        %v1501 = vunpack.c.h.b16 %v827
        %v1502 = vunpack.c.l.b16 %v828
        %v1503 = vunpack.c.h.b16 %v828
        %v1504 = vunpack.c.l.b16 %v829
        %v1505 = vunpack.c.h.b16 %v829
        %v1506 = vunpack.c.l.b16 %v830
        %v1507 = vunpack.c.h.b16 %v830
        %v1508 = vunpack.c.l.b16 %v831
        %v1509 = vunpack.c.h.b16 %v831
        %v1510 = vunpack.c.l.b16 %v832
        %v1511 = vunpack.c.h.b16 %v832
        %v1512 = vunpack.c.l.b16 %v833
        %v1513 = vunpack.c.h.b16 %v833
        %v1514 = vunpack.c.l.b16 %v834
        %v1515 = vunpack.c.h.b16 %v834
        %v1516 = vunpack.c.l.b16 %v835
        %v1517 = vunpack.c.h.b16 %v835
        %v1518 = vunpack.c.l.b16 %v836
        %v1519 = vunpack.c.h.b16 %v836
        %v1520 = vunpack.c.l.b16 %v837
        %v1521 = vunpack.c.h.b16 %v837
        %v1522 = vunpack.c.l.b16 %v838
        %v1523 = vunpack.c.h.b16 %v838
        %v1524 = vunpack.c.l.b16 %v839
        %v1525 = vunpack.c.h.b16 %v839
        %v1526 = vunpack.c.l.b16 %v840
        %v1527 = vunpack.c.h.b16 %v840
        %v1528 = vunpack.c.l.b16 %v841
        %v1529 = vunpack.c.h.b16 %v841
        %v1530 = vunpack.c.l.b16 %v842
        %v1531 = vunpack.c.h.b16 %v842
        %v1532 = vunpack.c.l.b16 %v843
        %v1533 = vunpack.c.h.b16 %v843
        %v1534 = vunpack.c.l.b16 %v844
        %v1535 = vunpack.c.h.b16 %v844
        %v1536 = vunpack.c.l.b16 %v845
        %v1537 = vunpack.c.h.b16 %v845
        %v1538 = vunpack.c.l.b16 %v846
        %v1539 = vunpack.c.h.b16 %v846
        %v1540 = vunpack.c.l.b16 %v847
        %v1541 = vunpack.c.h.b16 %v847
        %v1542 = vunpack.c.l.b16 %v848
        %v1543 = vunpack.c.h.b16 %v848
        %v1544 = vunpack.c.l.b16 %v849
        %v1545 = vunpack.c.h.b16 %v849
        %v1546 = vunpack.c.l.b16 %v850
        %v1547 = vunpack.c.h.b16 %v850
        %v1548 = vunpack.c.l.b16 %v851
        %v1549 = vunpack.c.h.b16 %v851
        %v1550 = vunpack.c.l.b16 %v852
        %v1551 = vunpack.c.h.b16 %v852
        %v1552 = vunpack.c.l.b16 %v853
        %v1553 = vunpack.c.h.b16 %v853
        %v1554 = vunpack.c.l.b16 %v854
        %v1555 = vunpack.c.h.b16 %v854
        %v1556 = vunpack.c.l.b16 %v855
        %v1557 = vunpack.c.h.b16 %v855
        %v1558 = vunpack.c.l.b16 %v856
        %v1559 = vunpack.c.h.b16 %v856
        %v1560 = vunpack.c.l.b16 %v857
        %v1561 = vunpack.c.h.b16 %v857
        %v1562 = vunpack.c.l.b16 %v858
        %v1563 = vunpack.c.h.b16 %v858
        %v1564 = vunpack.c.l.b16 %v859
        %v1565 = vunpack.c.h.b16 %v859
        %v1566 = vunpack.c.l.b16 %v860
        %v1567 = vunpack.c.h.b16 %v860
        %v1568 = vunpack.c.l.b16 %v861
        %v1569 = vunpack.c.h.b16 %v861
        %v1570 = vunpack.c.l.b16 %v862
        %v1571 = vunpack.c.h.b16 %v862
        %v1572 = vunpack.c.l.b16 %v863
        %v1573 = vunpack.c.h.b16 %v863
        %v1574 = vunpack.c.l.b16 %v864
        %v1575 = vunpack.c.h.b16 %v864
        %v1576 = vunpack.c.l.b16 %v865
        %v1577 = vunpack.c.h.b16 %v865
        %v1578 = vunpack.c.l.b16 %v866
        %v1579 = vunpack.c.h.b16 %v866
        %v1580 = vunpack.c.l.b16 %v867
        %v1581 = vunpack.c.h.b16 %v867
        %v1582 = vunpack.c.l.b16 %v868
        %v1583 = vunpack.c.h.b16 %v868
        %v1584 = vunpack.c.l.b16 %v869
        %v1585 = vunpack.c.h.b16 %v869
        %v1586 = vunpack.c.l.b16 %v870
        %v1587 = vunpack.c.h.b16 %v870
        %v1588 = vunpack.c.l.b16 %v871
        %v1589 = vunpack.c.h.b16 %v871
        %v1590 = vunpack.c.l.b16 %v872
        %v1591 = vunpack.c.h.b16 %v872
        %v1592 = vunpack.c.l.b16 %v873
        %v1593 = vunpack.c.h.b16 %v873
        %v1594 = vunpack.c.l.b16 %v874
        %v1595 = vunpack.c.h.b16 %v874
        %v1596 = vunpack.c.l.b16 %v875
        %v1597 = vunpack.c.h.b16 %v875
        %v1598 = vunpack.c.l.b16 %v876
        %v1599 = vunpack.c.h.b16 %v876
        %v1600 = vunpack.c.l.b16 %v877
        %v1601 = vunpack.c.h.b16 %v877
        %v1602 = vunpack.c.l.b16 %v878
        %v1603 = vunpack.c.h.b16 %v878
        %v1604 = vunpack.c.l.b16 %v879
        %v1605 = vunpack.c.h.b16 %v879
        %v1606 = vunpack.c.l.b16 %v880
        %v1607 = vunpack.c.h.b16 %v880
        %v1608 = vunpack.c.l.b16 %v881
        %v1609 = vunpack.c.h.b16 %v881
        %v1610 = vunpack.c.l.b16 %v882
        %v1611 = vunpack.c.h.b16 %v882
        %v1612 = vunpack.c.l.b16 %v883
        %v1613 = vunpack.c.h.b16 %v883
        %v1614 = vunpack.c.l.b16 %v884
        %v1615 = vunpack.c.h.b16 %v884
        %v1616 = vunpack.c.l.b16 %v885
        %v1617 = vunpack.c.h.b16 %v885
        %v1618 = vunpack.c.l.b16 %v886
        %v1619 = vunpack.c.h.b16 %v886
        %v1620 = vunpack.c.l.b16 %v887
        %v1621 = vunpack.c.h.b16 %v887
        %v1622 = vunpack.c.l.b16 %v888
        %v1623 = vunpack.c.h.b16 %v888
        %v1624 = vunpack.c.l.b16 %v889
        %v1625 = vunpack.c.h.b16 %v889
        %v1626 = vunpack.c.l.b16 %v890
        %v1627 = vunpack.c.h.b16 %v890
        %v1628 = vunpack.c.l.b16 %v891
        %v1629 = vunpack.c.h.b16 %v891
        %v1630 = vunpack.c.l.b16 %v892
        %v1631 = vunpack.c.h.b16 %v892
        %v1632 = vunpack.c.l.b16 %v893
        %v1633 = vunpack.c.h.b16 %v893
        %v1634 = vunpack.c.l.b16 %v894
        %v1635 = vunpack.c.h.b16 %v894
        %v1636 = vunpack.c.l.b16 %v895
        %v1637 = vunpack.c.h.b16 %v895
        %v1638 = vunpack.c.l.b16 %v896
        %v1639 = vunpack.c.h.b16 %v896
        %v1640 = vunpack.c.l.b16 %v897
        %v1641 = vunpack.c.h.b16 %v897
        %v1642 = vunpack.c.l.b16 %v898
        %v1643 = vunpack.c.h.b16 %v898
        %v1644 = vunpack.c.l.b16 %v899
        %v1645 = vunpack.c.h.b16 %v899
        %v1646 = vunpack.c.l.b16 %v900
        %v1647 = vunpack.c.h.b16 %v900
        %v1648 = vunpack.c.l.b16 %v901
        %v1649 = vunpack.c.h.b16 %v901
        %v1650 = vunpack.c.l.b16 %v902
        %v1651 = vunpack.c.h.b16 %v902
        %v1652 = vunpack.c.l.b16 %v903
        %v1653 = vunpack.c.h.b16 %v903
        %v1654 = vunpack.c.l.b16 %v904
        %v1655 = vunpack.c.h.b16 %v904
        %v1656 = vunpack.c.l.b16 %v905
        %v1657 = vunpack.c.h.b16 %v905
        %v1658 = vunpack.c.l.b16 %v906
        %v1659 = vunpack.c.h.b16 %v906
        %v1660 = vunpack.c.l.b16 %v907
        %v1661 = vunpack.c.h.b16 %v907
        %v1662 = vunpack.c.l.b16 %v908
        %v1663 = vunpack.c.h.b16 %v908
        %v1664 = vunpack.c.l.b16 %v909
        %v1665 = vunpack.c.h.b16 %v909
        %v1666 = vunpack.c.l.b16 %v910
        %v1667 = vunpack.c.h.b16 %v910
        %v1668 = vunpack.c.l.b16 %v911
        %v1669 = vunpack.c.h.b16 %v911
        %v1670 = vunpack.c.l.b16 %v912
        %v1671 = vunpack.c.h.b16 %v912
        %v1672 = vunpack.c.l.b16 %v913
        %v1673 = vunpack.c.h.b16 %v913
        %v1674 = vunpack.c.l.b16 %v914
        %v1675 = vunpack.c.h.b16 %v914
        %v1676 = vunpack.c.l.b16 %v915
        %v1677 = vunpack.c.h.b16 %v915
        %v1678 = vunpack.c.l.b16 %v916
        %v1679 = vunpack.c.h.b16 %v916
        %v1680 = vunpack.c.l.b16 %v917
        %v1681 = vunpack.c.h.b16 %v917
        %v1682 = vunpack.c.l.b16 %v918
        %v1683 = vunpack.c.h.b16 %v918
        %v1684 = vunpack.c.l.b16 %v919
        %v1685 = vunpack.c.h.b16 %v919
        %v1686 = vunpack.c.l.b16 %v920
        %v1687 = vunpack.c.h.b16 %v920
        %v1688 = vunpack.c.l.b16 %v921
        %v1689 = vunpack.c.h.b16 %v921
        %v1690 = vunpack.c.l.b16 %v922
        %v1691 = vunpack.c.h.b16 %v922
        %v1692 = vunpack.c.l.b16 %v923
        %v1693 = vunpack.c.h.b16 %v923
        %v1694 = vunpack.c.l.b16 %v924
        %v1695 = vunpack.c.h.b16 %v924
        %v1696 = vunpack.c.l.b16 %v925
        %v1697 = vunpack.c.h.b16 %v925
        %v1698 = vunpack.c.l.b16 %v926
        %v1699 = vunpack.c.h.b16 %v926
        %v1700 = vunpack.c.l.b16 %v927
        %v1701 = vunpack.c.h.b16 %v927
        %v1702 = vunpack.c.l.b16 %v928
        %v1703 = vunpack.c.h.b16 %v928
        %v1704 = vunpack.c.l.b16 %v929
        %v1705 = vunpack.c.h.b16 %v929
        %v1706 = vunpack.c.l.b16 %v930
        %v1707 = vunpack.c.h.b16 %v930
        %v1708 = vunpack.c.l.b16 %v931
        %v1709 = vunpack.c.h.b16 %v931
        %v1710 = vunpack.c.l.b16 %v932
        %v1711 = vunpack.c.h.b16 %v932
        %v1712 = vunpack.c.l.b16 %v933
        %v1713 = vunpack.c.h.b16 %v933
        %v1714 = vunpack.c.l.b16 %v934
        %v1715 = vunpack.c.h.b16 %v934
        %v1716 = vunpack.c.l.b16 %v935
        %v1717 = vunpack.c.h.b16 %v935
        %v1718 = vunpack.c.l.b16 %v936
        %v1719 = vunpack.c.h.b16 %v936
        %v1720 = vunpack.c.l.b16 %v937
        %v1721 = vunpack.c.h.b16 %v937
        %v1722 = vunpack.c.l.b16 %v938
        %v1723 = vunpack.c.h.b16 %v938
        %v1724 = vunpack.c.l.b16 %v939
        %v1725 = vunpack.c.h.b16 %v939
        %v1726 = vunpack.c.l.b16 %v940
        %v1727 = vunpack.c.h.b16 %v940
        %v1728 = vunpack.c.l.b16 %v941
        %v1729 = vunpack.c.h.b16 %v941
        %v1730 = vunpack.c.l.b16 %v942
        %v1731 = vunpack.c.h.b16 %v942
        %v1732 = vunpack.c.l.b16 %v943
        %v1733 = vunpack.c.h.b16 %v943
        %v1734 = vpack.c.b16 %v1226, %v1222
        %v1735 = vpack.c.b16 %v1227, %v1223
        %v1736 = vpack.c.b16 %v1228, %v1224
        %v1737 = vpack.c.b16 %v1229, %v1225
        %v1738 = vpack.c.b16 %v1234, %v1230
        %v1739 = vpack.c.b16 %v1235, %v1231
        %v1740 = vpack.c.b16 %v1236, %v1232
        %v1741 = vpack.c.b16 %v1237, %v1233
        %v1742 = vpack.c.b16 %v1242, %v1238
        %v1743 = vpack.c.b16 %v1243, %v1239
        %v1744 = vpack.c.b16 %v1244, %v1240
        %v1745 = vpack.c.b16 %v1245, %v1241
        %v1746 = vpack.c.b16 %v1250, %v1246
        %v1747 = vpack.c.b16 %v1251, %v1247
        %v1748 = vpack.c.b16 %v1252, %v1248
        %v1749 = vpack.c.b16 %v1253, %v1249
        %v1750 = vpack.c.b16 %v1258, %v1254
        %v1751 = vpack.c.b16 %v1259, %v1255
        %v1752 = vpack.c.b16 %v1260, %v1256
        %v1753 = vpack.c.b16 %v1261, %v1257
        %v1754 = vpack.c.b16 %v1266, %v1262
        %v1755 = vpack.c.b16 %v1267, %v1263
        %v1756 = vpack.c.b16 %v1268, %v1264
        %v1757 = vpack.c.b16 %v1269, %v1265
        %v1758 = vpack.c.b16 %v1274, %v1270
        %v1759 = vpack.c.b16 %v1275, %v1271
        %v1760 = vpack.c.b16 %v1276, %v1272
        %v1761 = vpack.c.b16 %v1277, %v1273
        %v1762 = vpack.c.b16 %v1282, %v1278
        %v1763 = vpack.c.b16 %v1283, %v1279
        %v1764 = vpack.c.b16 %v1284, %v1280
        %v1765 = vpack.c.b16 %v1285, %v1281
        %v1766 = vpack.c.b16 %v1290, %v1286
        %v1767 = vpack.c.b16 %v1291, %v1287
        %v1768 = vpack.c.b16 %v1292, %v1288
        %v1769 = vpack.c.b16 %v1293, %v1289
        %v1770 = vpack.c.b16 %v1298, %v1294
        %v1771 = vpack.c.b16 %v1299, %v1295
        %v1772 = vpack.c.b16 %v1300, %v1296
        %v1773 = vpack.c.b16 %v1301, %v1297
        %v1774 = vpack.c.b16 %v1306, %v1302
        %v1775 = vpack.c.b16 %v1307, %v1303
        %v1776 = vpack.c.b16 %v1308, %v1304
        %v1777 = vpack.c.b16 %v1309, %v1305
        %v1778 = vpack.c.b16 %v1314, %v1310
        %v1779 = vpack.c.b16 %v1315, %v1311
        %v1780 = vpack.c.b16 %v1316, %v1312
        %v1781 = vpack.c.b16 %v1317, %v1313
        %v1782 = vpack.c.b16 %v1322, %v1318
        %v1783 = vpack.c.b16 %v1323, %v1319
        %v1784 = vpack.c.b16 %v1324, %v1320
        %v1785 = vpack.c.b16 %v1325, %v1321
        %v1786 = vpack.c.b16 %v1330, %v1326
        %v1787 = vpack.c.b16 %v1331, %v1327
        %v1788 = vpack.c.b16 %v1332, %v1328
        %v1789 = vpack.c.b16 %v1333, %v1329
        %v1790 = vpack.c.b16 %v1338, %v1334
        %v1791 = vpack.c.b16 %v1339, %v1335
        %v1792 = vpack.c.b16 %v1340, %v1336
        %v1793 = vpack.c.b16 %v1341, %v1337
        %v1794 = vpack.c.b16 %v1346, %v1342
        %v1795 = vpack.c.b16 %v1347, %v1343
        %v1796 = vpack.c.b16 %v1348, %v1344
        %v1797 = vpack.c.b16 %v1349, %v1345
        %v1798 = vpack.c.b16 %v1354, %v1350
        %v1799 = vpack.c.b16 %v1355, %v1351
        %v1800 = vpack.c.b16 %v1356, %v1352
        %v1801 = vpack.c.b16 %v1357, %v1353
        %v1802 = vpack.c.b16 %v1362, %v1358
        %v1803 = vpack.c.b16 %v1363, %v1359
        %v1804 = vpack.c.b16 %v1364, %v1360
        %v1805 = vpack.c.b16 %v1365, %v1361
        %v1806 = vpack.c.b16 %v1370, %v1366
        %v1807 = vpack.c.b16 %v1371, %v1367
        %v1808 = vpack.c.b16 %v1372, %v1368
        %v1809 = vpack.c.b16 %v1373, %v1369
        %v1810 = vpack.c.b16 %v1378, %v1374
        %v1811 = vpack.c.b16 %v1379, %v1375
        %v1812 = vpack.c.b16 %v1380, %v1376
        %v1813 = vpack.c.b16 %v1381, %v1377
        %v1814 = vpack.c.b16 %v1386, %v1382
        %v1815 = vpack.c.b16 %v1387, %v1383
        %v1816 = vpack.c.b16 %v1388, %v1384
        %v1817 = vpack.c.b16 %v1389, %v1385
        %v1818 = vpack.c.b16 %v1394, %v1390
        %v1819 = vpack.c.b16 %v1395, %v1391
        %v1820 = vpack.c.b16 %v1396, %v1392
        %v1821 = vpack.c.b16 %v1397, %v1393
        %v1822 = vpack.c.b16 %v1402, %v1398
        %v1823 = vpack.c.b16 %v1403, %v1399
        %v1824 = vpack.c.b16 %v1404, %v1400
        %v1825 = vpack.c.b16 %v1405, %v1401
        %v1826 = vpack.c.b16 %v1410, %v1406
        %v1827 = vpack.c.b16 %v1411, %v1407
        %v1828 = vpack.c.b16 %v1412, %v1408
        %v1829 = vpack.c.b16 %v1413, %v1409
        %v1830 = vpack.c.b16 %v1418, %v1414
        %v1831 = vpack.c.b16 %v1419, %v1415
        %v1832 = vpack.c.b16 %v1420, %v1416
        %v1833 = vpack.c.b16 %v1421, %v1417
        %v1834 = vpack.c.b16 %v1426, %v1422
        %v1835 = vpack.c.b16 %v1427, %v1423
        %v1836 = vpack.c.b16 %v1428, %v1424
        %v1837 = vpack.c.b16 %v1429, %v1425
        %v1838 = vpack.c.b16 %v1434, %v1430
        %v1839 = vpack.c.b16 %v1435, %v1431
        %v1840 = vpack.c.b16 %v1436, %v1432
        %v1841 = vpack.c.b16 %v1437, %v1433
        %v1842 = vpack.c.b16 %v1442, %v1438
        %v1843 = vpack.c.b16 %v1443, %v1439
        %v1844 = vpack.c.b16 %v1444, %v1440
        %v1845 = vpack.c.b16 %v1445, %v1441
        %v1846 = vpack.c.b16 %v1450, %v1446
        %v1847 = vpack.c.b16 %v1451, %v1447
        %v1848 = vpack.c.b16 %v1452, %v1448
        %v1849 = vpack.c.b16 %v1453, %v1449
        %v1850 = vpack.c.b16 %v1458, %v1454
        %v1851 = vpack.c.b16 %v1459, %v1455
        %v1852 = vpack.c.b16 %v1460, %v1456
        %v1853 = vpack.c.b16 %v1461, %v1457
        %v1854 = vpack.c.b16 %v1466, %v1462
        %v1855 = vpack.c.b16 %v1467, %v1463
        %v1856 = vpack.c.b16 %v1468, %v1464
        %v1857 = vpack.c.b16 %v1469, %v1465
        %v1858 = vpack.c.b16 %v1474, %v1470
        %v1859 = vpack.c.b16 %v1475, %v1471
        %v1860 = vpack.c.b16 %v1476, %v1472
        %v1861 = vpack.c.b16 %v1477, %v1473
        %v1862 = vpack.c.b16 %v1482, %v1478
        %v1863 = vpack.c.b16 %v1483, %v1479
        %v1864 = vpack.c.b16 %v1484, %v1480
        %v1865 = vpack.c.b16 %v1485, %v1481
        %v1866 = vpack.c.b16 %v1490, %v1486
        %v1867 = vpack.c.b16 %v1491, %v1487
        %v1868 = vpack.c.b16 %v1492, %v1488
        %v1869 = vpack.c.b16 %v1493, %v1489
        %v1870 = vpack.c.b16 %v1498, %v1494
        %v1871 = vpack.c.b16 %v1499, %v1495
        %v1872 = vpack.c.b16 %v1500, %v1496
        %v1873 = vpack.c.b16 %v1501, %v1497
        %v1874 = vpack.c.b16 %v1506, %v1502
        %v1875 = vpack.c.b16 %v1507, %v1503
        %v1876 = vpack.c.b16 %v1508, %v1504
        %v1877 = vpack.c.b16 %v1509, %v1505
        %v1878 = vpack.c.b16 %v1514, %v1510
        %v1879 = vpack.c.b16 %v1515, %v1511
        %v1880 = vpack.c.b16 %v1516, %v1512
        %v1881 = vpack.c.b16 %v1517, %v1513
        %v1882 = vpack.c.b16 %v1522, %v1518
        %v1883 = vpack.c.b16 %v1523, %v1519
        %v1884 = vpack.c.b16 %v1524, %v1520
        %v1885 = vpack.c.b16 %v1525, %v1521
        %v1886 = vpack.c.b16 %v1530, %v1526
        %v1887 = vpack.c.b16 %v1531, %v1527
        %v1888 = vpack.c.b16 %v1532, %v1528
        %v1889 = vpack.c.b16 %v1533, %v1529
        %v1890 = vpack.c.b16 %v1538, %v1534
        %v1891 = vpack.c.b16 %v1539, %v1535
        %v1892 = vpack.c.b16 %v1540, %v1536
        %v1893 = vpack.c.b16 %v1541, %v1537
        %v1894 = vpack.c.b16 %v1546, %v1542
        %v1895 = vpack.c.b16 %v1547, %v1543
        %v1896 = vpack.c.b16 %v1548, %v1544
        %v1897 = vpack.c.b16 %v1549, %v1545
        %v1898 = vpack.c.b16 %v1554, %v1550
        %v1899 = vpack.c.b16 %v1555, %v1551
        %v1900 = vpack.c.b16 %v1556, %v1552
        %v1901 = vpack.c.b16 %v1557, %v1553
        %v1902 = vpack.c.b16 %v1562, %v1558
        %v1903 = vpack.c.b16 %v1563, %v1559
        %v1904 = vpack.c.b16 %v1564, %v1560
        %v1905 = vpack.c.b16 %v1565, %v1561
        %v1906 = vpack.c.b16 %v1570, %v1566
        %v1907 = vpack.c.b16 %v1571, %v1567
        %v1908 = vpack.c.b16 %v1572, %v1568
        %v1909 = vpack.c.b16 %v1573, %v1569
        %v1910 = vpack.c.b16 %v1578, %v1574
        %v1911 = vpack.c.b16 %v1579, %v1575
        %v1912 = vpack.c.b16 %v1580, %v1576
        %v1913 = vpack.c.b16 %v1581, %v1577
        %v1914 = vpack.c.b16 %v1586, %v1582
        %v1915 = vpack.c.b16 %v1587, %v1583
        %v1916 = vpack.c.b16 %v1588, %v1584
        %v1917 = vpack.c.b16 %v1589, %v1585
        %v1918 = vpack.c.b16 %v1594, %v1590
        %v1919 = vpack.c.b16 %v1595, %v1591
        %v1920 = vpack.c.b16 %v1596, %v1592
        %v1921 = vpack.c.b16 %v1597, %v1593
        %v1922 = vpack.c.b16 %v1602, %v1598
        %v1923 = vpack.c.b16 %v1603, %v1599
        %v1924 = vpack.c.b16 %v1604, %v1600
        %v1925 = vpack.c.b16 %v1605, %v1601
        %v1926 = vpack.c.b16 %v1610, %v1606
        %v1927 = vpack.c.b16 %v1611, %v1607
        %v1928 = vpack.c.b16 %v1612, %v1608
        %v1929 = vpack.c.b16 %v1613, %v1609
        %v1930 = vpack.c.b16 %v1618, %v1614
        %v1931 = vpack.c.b16 %v1619, %v1615
        %v1932 = vpack.c.b16 %v1620, %v1616
        %v1933 = vpack.c.b16 %v1621, %v1617
        %v1934 = vpack.c.b16 %v1626, %v1622
        %v1935 = vpack.c.b16 %v1627, %v1623
        %v1936 = vpack.c.b16 %v1628, %v1624
        %v1937 = vpack.c.b16 %v1629, %v1625
        %v1938 = vpack.c.b16 %v1634, %v1630
        %v1939 = vpack.c.b16 %v1635, %v1631
        %v1940 = vpack.c.b16 %v1636, %v1632
        %v1941 = vpack.c.b16 %v1637, %v1633
        %v1942 = vpack.c.b16 %v1642, %v1638
        %v1943 = vpack.c.b16 %v1643, %v1639
        %v1944 = vpack.c.b16 %v1644, %v1640
        %v1945 = vpack.c.b16 %v1645, %v1641
        %v1946 = vpack.c.b16 %v1650, %v1646
        %v1947 = vpack.c.b16 %v1651, %v1647
        %v1948 = vpack.c.b16 %v1652, %v1648
        %v1949 = vpack.c.b16 %v1653, %v1649
        %v1950 = vpack.c.b16 %v1658, %v1654
        %v1951 = vpack.c.b16 %v1659, %v1655
        %v1952 = vpack.c.b16 %v1660, %v1656
        %v1953 = vpack.c.b16 %v1661, %v1657
        %v1954 = vpack.c.b16 %v1666, %v1662
        %v1955 = vpack.c.b16 %v1667, %v1663
        %v1956 = vpack.c.b16 %v1668, %v1664
        %v1957 = vpack.c.b16 %v1669, %v1665
        %v1958 = vpack.c.b16 %v1674, %v1670
        %v1959 = vpack.c.b16 %v1675, %v1671
        %v1960 = vpack.c.b16 %v1676, %v1672
        %v1961 = vpack.c.b16 %v1677, %v1673
        %v1962 = vpack.c.b16 %v1682, %v1678
        %v1963 = vpack.c.b16 %v1683, %v1679
        %v1964 = vpack.c.b16 %v1684, %v1680
        %v1965 = vpack.c.b16 %v1685, %v1681
        %v1966 = vpack.c.b16 %v1690, %v1686
        %v1967 = vpack.c.b16 %v1691, %v1687
        %v1968 = vpack.c.b16 %v1692, %v1688
        %v1969 = vpack.c.b16 %v1693, %v1689
        %v1970 = vpack.c.b16 %v1698, %v1694
        %v1971 = vpack.c.b16 %v1699, %v1695
        %v1972 = vpack.c.b16 %v1700, %v1696
        %v1973 = vpack.c.b16 %v1701, %v1697
        %v1974 = vpack.c.b16 %v1706, %v1702
        %v1975 = vpack.c.b16 %v1707, %v1703
        %v1976 = vpack.c.b16 %v1708, %v1704
        %v1977 = vpack.c.b16 %v1709, %v1705
        %v1978 = vpack.c.b16 %v1714, %v1710
        %v1979 = vpack.c.b16 %v1715, %v1711
        %v1980 = vpack.c.b16 %v1716, %v1712
        %v1981 = vpack.c.b16 %v1717, %v1713
        %v1982 = vpack.c.b16 %v1722, %v1718
        %v1983 = vpack.c.b16 %v1723, %v1719
        %v1984 = vpack.c.b16 %v1724, %v1720
        %v1985 = vpack.c.b16 %v1725, %v1721
        %v1986 = vpack.c.b16 %v1730, %v1726
        %v1987 = vpack.c.b16 %v1731, %v1727
        %v1988 = vpack.c.b16 %v1732, %v1728
        %v1989 = vpack.c.b16 %v1733, %v1729
        %2246 = vmatprep.subr.bf16.mxu0 %v1735
        %2247 = vmatpush1.bf16.msra.mxu0 %v1734
        %2248 = vmatprep.subr.bf16.mxu0 %v1739
        %2249 = vmatpush1.bf16.msra.mxu0 %v1738
        %2250 = vmatprep.subr.bf16.mxu0 %v1743
        %2251 = vmatpush1.bf16.msra.mxu0 %v1742
        %2252 = vmatprep.subr.bf16.mxu0 %v1747
        %2253 = vmatpush1.bf16.msra.mxu0 %v1746
        %2254 = vmatprep.subr.bf16.mxu0 %v1751
        %2255 = vmatpush1.bf16.msra.mxu0 %v1750
        %2256 = vmatprep.subr.bf16.mxu0 %v1755
        %2257 = vmatpush1.bf16.msra.mxu0 %v1754
        %2258 = vmatprep.subr.bf16.mxu0 %v1759
        %2259 = vmatpush1.bf16.msra.mxu0 %v1758
        %2260 = vmatprep.subr.bf16.mxu0 %v1763
        %2261 = vmatpush1.bf16.msra.mxu0 %v1762
        %2262 = vmatprep.subr.bf16.mxu0 %v1767
        %2263 = vmatpush1.bf16.msra.mxu0 %v1766
        %2264 = vmatprep.subr.bf16.mxu0 %v1771
        %2265 = vmatpush1.bf16.msra.mxu0 %v1770
        %2266 = vmatprep.subr.bf16.mxu0 %v1775
        %2267 = vmatpush1.bf16.msra.mxu0 %v1774
        %2268 = vmatprep.subr.bf16.mxu0 %v1779
        %2269 = vmatpush1.bf16.msra.mxu0 %v1778
        %2270 = vmatprep.subr.bf16.mxu0 %v1783
        %2271 = vmatpush1.bf16.msra.mxu0 %v1782
        %2272 = vmatprep.subr.bf16.mxu0 %v1787
        %2273 = vmatpush1.bf16.msra.mxu0 %v1786
        %2274 = vmatprep.subr.bf16.mxu0 %v1791
        %2275 = vmatpush1.bf16.msra.mxu0 %v1790
        %2276 = vmatprep.subr.bf16.mxu0 %v1795
        %2277 = vmatpush1.bf16.msra.mxu0 %v1794
        %2278 = vmatprep.mubr.bf16.mxu0 %v561
        %2279 = vmatmul.mubr.bf16.gmra.mrb[0].mxu0 %v560
        %v2280 = vpop.f32.mrb[0].mxu0
        %v2281 = vadd.f32 %v949, %v2280
        %v2282 = vpop.f32.mrb[0].mxu0
        %v2283 = vadd.f32 %v953, %v2282
        %v2284 = vpop.f32.mrb[0].mxu0
        %v2285 = vadd.f32 %v949, %v2284
        %v2286 = vpop.f32.mrb[0].mxu0
        %v2287 = vadd.f32 %v953, %v2286
        %2288 = vmatprep.mubr.bf16.mxu0 %v569
        %2289 = vmatmul.mubr.bf16.gmra.mrb[0].mxu0 %v568
        %v2290 = vpop.f32.mrb[0].mxu0
        %v2291 = vadd.f32 %v949, %v2290
        %v2292 = vpop.f32.mrb[0].mxu0
        %v2293 = vadd.f32 %v953, %v2292
        %v2294 = vpop.f32.mrb[0].mxu0
        %v2295 = vadd.f32 %v949, %v2294
        %v2296 = vpop.f32.mrb[0].mxu0
        %v2297 = vadd.f32 %v953, %v2296
        %2298 = vmatprep.mubr.bf16.mxu0 %v577
        %2299 = vmatmul.mubr.bf16.gmra.mrb[0].mxu0 %v576
        %v2300 = vpop.f32.mrb[0].mxu0
        %v2301 = vadd.f32 %v949, %v2300
        %v2302 = vpop.f32.mrb[0].mxu0
        %v2303 = vadd.f32 %v953, %v2302
        %v2304 = vpop.f32.mrb[0].mxu0
        %v2305 = vadd.f32 %v949, %v2304
        %v2306 = vpop.f32.mrb[0].mxu0
        %v2307 = vadd.f32 %v953, %v2306
        %2308 = vmatprep.mubr.bf16.mxu0 %v585
        %2309 = vmatmul.mubr.bf16.gmra.mrb[0].mxu0 %v584
        %v2310 = vpop.f32.mrb[0].mxu0
        %v2311 = vadd.f32 %v949, %v2310
        %v2312 = vpop.f32.mrb[0].mxu0
        %v2313 = vadd.f32 %v953, %v2312
        %v2314 = vpop.f32.mrb[0].mxu0
        %v2315 = vadd.f32 %v949, %v2314
        %v2316 = vpop.f32.mrb[0].mxu0
        %v2317 = vadd.f32 %v953, %v2316
        %2318 = vmatprep.mubr.bf16.mxu0 %v593
        %2319 = vmatmul.mubr.bf16.gmra.mrb[0].mxu0 %v592
        %v2320 = vpop.f32.mrb[0].mxu0
        %v2321 = vadd.f32 %v949, %v2320
        %v2322 = vpop.f32.mrb[0].mxu0
        %v2323 = vadd.f32 %v953, %v2322
        %v2324 = vpop.f32.mrb[0].mxu0
        %v2325 = vadd.f32 %v949, %v2324
        %v2326 = vpop.f32.mrb[0].mxu0
        %v2327 = vadd.f32 %v953, %v2326
        %2328 = vmatprep.mubr.bf16.mxu0 %v601
        %2329 = vmatmul.mubr.bf16.gmra.mrb[0].mxu0 %v600
        %v2330 = vpop.f32.mrb[0].mxu0
        %v2331 = vadd.f32 %v949, %v2330
        %v2332 = vpop.f32.mrb[0].mxu0
        %v2333 = vadd.f32 %v953, %v2332
        %v2334 = vpop.f32.mrb[0].mxu0
        %v2335 = vadd.f32 %v949, %v2334
        %v2336 = vpop.f32.mrb[0].mxu0
        %v2337 = vadd.f32 %v953, %v2336
        %2338 = vmatprep.mubr.bf16.mxu0 %v609
        %2339 = vmatmul.mubr.bf16.gmra.mrb[0].mxu0 %v608
        %v2340 = vpop.f32.mrb[0].mxu0
        %v2341 = vadd.f32 %v949, %v2340
        %v2342 = vpop.f32.mrb[0].mxu0
        %v2343 = vadd.f32 %v953, %v2342
        %v2344 = vpop.f32.mrb[0].mxu0
        %v2345 = vadd.f32 %v949, %v2344
        %v2346 = vpop.f32.mrb[0].mxu0
        %v2347 = vadd.f32 %v953, %v2346
        %2348 = vmatprep.mubr.bf16.mxu0 %v617
        %2349 = vmatmul.mubr.bf16.gmra.mrb[0].mxu0 %v616
        %v2350 = vpop.f32.mrb[0].mxu0
        %v2351 = vadd.f32 %v949, %v2350
        %v2352 = vpop.f32.mrb[0].mxu0
        %v2353 = vadd.f32 %v953, %v2352
        %v2354 = vpop.f32.mrb[0].mxu0
        %v2355 = vadd.f32 %v949, %v2354
        %v2356 = vpop.f32.mrb[0].mxu0
        %v2357 = vadd.f32 %v953, %v2356
        %2358 = vmatprep.mubr.bf16.mxu0 %v625
        %2359 = vmatmul.mubr.bf16.gmra.mrb[0].mxu0 %v624
        %v2360 = vpop.f32.mrb[0].mxu0
        %v2361 = vadd.f32 %v949, %v2360
        %v2362 = vpop.f32.mrb[0].mxu0
        %v2363 = vadd.f32 %v953, %v2362
        %v2364 = vpop.f32.mrb[0].mxu0
        %v2365 = vadd.f32 %v949, %v2364
        %v2366 = vpop.f32.mrb[0].mxu0
        %v2367 = vadd.f32 %v953, %v2366
        %2368 = vmatprep.mubr.bf16.mxu0 %v633
        %2369 = vmatmul.mubr.bf16.gmra.mrb[0].mxu0 %v632
        %v2370 = vpop.f32.mrb[0].mxu0
        %v2371 = vadd.f32 %v949, %v2370
        %v2372 = vpop.f32.mrb[0].mxu0
        %v2373 = vadd.f32 %v953, %v2372
        %v2374 = vpop.f32.mrb[0].mxu0
        %v2375 = vadd.f32 %v949, %v2374
        %v2376 = vpop.f32.mrb[0].mxu0
        %v2377 = vadd.f32 %v953, %v2376
        %2378 = vmatprep.mubr.bf16.mxu0 %v641
        %2379 = vmatmul.mubr.bf16.gmra.mrb[0].mxu0 %v640
        %v2380 = vpop.f32.mrb[0].mxu0
        %v2381 = vadd.f32 %v949, %v2380
        %v2382 = vpop.f32.mrb[0].mxu0
        %v2383 = vadd.f32 %v953, %v2382
        %v2384 = vpop.f32.mrb[0].mxu0
        %v2385 = vadd.f32 %v949, %v2384
        %v2386 = vpop.f32.mrb[0].mxu0
        %v2387 = vadd.f32 %v953, %v2386
        %2388 = vmatprep.mubr.bf16.mxu0 %v649
        %2389 = vmatmul.mubr.bf16.gmra.mrb[0].mxu0 %v648
        %v2390 = vpop.f32.mrb[0].mxu0
        %v2391 = vadd.f32 %v949, %v2390
        %v2392 = vpop.f32.mrb[0].mxu0
        %v2393 = vadd.f32 %v953, %v2392
        %v2394 = vpop.f32.mrb[0].mxu0
        %v2395 = vadd.f32 %v949, %v2394
        %v2396 = vpop.f32.mrb[0].mxu0
        %v2397 = vadd.f32 %v953, %v2396
        %2398 = vmatprep.mubr.bf16.mxu0 %v657
        %2399 = vmatmul.mubr.bf16.gmra.mrb[0].mxu0 %v656
        %v2400 = vpop.f32.mrb[0].mxu0
        %v2401 = vadd.f32 %v949, %v2400
        %v2402 = vpop.f32.mrb[0].mxu0
        %v2403 = vadd.f32 %v953, %v2402
        %v2404 = vpop.f32.mrb[0].mxu0
        %v2405 = vadd.f32 %v949, %v2404
        %v2406 = vpop.f32.mrb[0].mxu0
        %v2407 = vadd.f32 %v953, %v2406
        %2408 = vmatprep.mubr.bf16.mxu0 %v665
        %2409 = vmatmul.mubr.bf16.gmra.mrb[0].mxu0 %v664
        %v2410 = vpop.f32.mrb[0].mxu0
        %v2411 = vadd.f32 %v949, %v2410
        %v2412 = vpop.f32.mrb[0].mxu0
        %v2413 = vadd.f32 %v953, %v2412
        %v2414 = vpop.f32.mrb[0].mxu0
        %v2415 = vadd.f32 %v949, %v2414
        %v2416 = vpop.f32.mrb[0].mxu0
        %v2417 = vadd.f32 %v953, %v2416
        %2418 = vmatprep.mubr.bf16.mxu0 %v673
        %2419 = vmatmul.mubr.bf16.gmra.mrb[0].mxu0 %v672
        %v2420 = vpop.f32.mrb[0].mxu0
        %v2421 = vadd.f32 %v949, %v2420
        %v2422 = vpop.f32.mrb[0].mxu0
        %v2423 = vadd.f32 %v953, %v2422
        %v2424 = vpop.f32.mrb[0].mxu0
        %v2425 = vadd.f32 %v949, %v2424
        %v2426 = vpop.f32.mrb[0].mxu0
        %v2427 = vadd.f32 %v953, %v2426
        %2428 = vmatprep.mubr.bf16.mxu0 %v681
        %2429 = vmatmul.mubr.bf16.gmra.mrb[0].mxu0 %v680
        %v2430 = vpop.f32.mrb[0].mxu0
        %v2431 = vadd.f32 %v949, %v2430
        %v2432 = vpop.f32.mrb[0].mxu0
        %v2433 = vadd.f32 %v953, %v2432
        %v2434 = vpop.f32.mrb[0].mxu0
        %v2435 = vadd.f32 %v949, %v2434
        %v2436 = vpop.f32.mrb[0].mxu0
        %v2437 = vadd.f32 %v953, %v2436
        %2438 = vdwg.mxu0
        %2439 = vmatprep.subr.bf16.mxu0 %v1799
        %2440 = vmatpush1.bf16.msra.mxu0 %v1798
        %2441 = vmatprep.subr.bf16.mxu0 %v1803
        %2442 = vmatpush1.bf16.msra.mxu0 %v1802
        %2443 = vmatprep.subr.bf16.mxu0 %v1807
        %2444 = vmatpush1.bf16.msra.mxu0 %v1806
        %2445 = vmatprep.subr.bf16.mxu0 %v1811
        %2446 = vmatpush1.bf16.msra.mxu0 %v1810
        %2447 = vmatprep.subr.bf16.mxu0 %v1815
        %2448 = vmatpush1.bf16.msra.mxu0 %v1814
        %2449 = vmatprep.subr.bf16.mxu0 %v1819
        %2450 = vmatpush1.bf16.msra.mxu0 %v1818
        %2451 = vmatprep.subr.bf16.mxu0 %v1823
        %2452 = vmatpush1.bf16.msra.mxu0 %v1822
        %2453 = vmatprep.subr.bf16.mxu0 %v1827
        %2454 = vmatpush1.bf16.msra.mxu0 %v1826
        %2455 = vmatprep.subr.bf16.mxu0 %v1831
        %2456 = vmatpush1.bf16.msra.mxu0 %v1830
        %2457 = vmatprep.subr.bf16.mxu0 %v1835
        %2458 = vmatpush1.bf16.msra.mxu0 %v1834
        %2459 = vmatprep.subr.bf16.mxu0 %v1839
        %2460 = vmatpush1.bf16.msra.mxu0 %v1838
        %2461 = vmatprep.subr.bf16.mxu0 %v1843
        %2462 = vmatpush1.bf16.msra.mxu0 %v1842
        %2463 = vmatprep.subr.bf16.mxu0 %v1847
        %2464 = vmatpush1.bf16.msra.mxu0 %v1846
        %2465 = vmatprep.subr.bf16.mxu0 %v1851
        %2466 = vmatpush1.bf16.msra.mxu0 %v1850
        %2467 = vmatprep.subr.bf16.mxu0 %v1855
        %2468 = vmatpush1.bf16.msra.mxu0 %v1854
        %2469 = vmatprep.subr.bf16.mxu0 %v1859
        %2470 = vmatpush1.bf16.msra.mxu0 %v1858
        %2471 = vmatprep.mubr.bf16.mxu0 %v563
        %2472 = vmatmul.mubr.bf16.gmra.mrb[0].mxu0 %v562
        %v2473 = vpop.f32.mrb[0].mxu0
        %v2474 = vadd.f32 %v2281, %v2473
        %v2475 = vpop.f32.mrb[0].mxu0
        %v2476 = vadd.f32 %v2283, %v2475
        %v2477 = vpop.f32.mrb[0].mxu0
        %v2478 = vadd.f32 %v2285, %v2477
        %v2479 = vpop.f32.mrb[0].mxu0
        %v2480 = vadd.f32 %v2287, %v2479
        %2481 = vmatprep.mubr.bf16.mxu0 %v571
        %2482 = vmatmul.mubr.bf16.gmra.mrb[0].mxu0 %v570
        %v2483 = vpop.f32.mrb[0].mxu0
        %v2484 = vadd.f32 %v2291, %v2483
        %v2485 = vpop.f32.mrb[0].mxu0
        %v2486 = vadd.f32 %v2293, %v2485
        %v2487 = vpop.f32.mrb[0].mxu0
        %v2488 = vadd.f32 %v2295, %v2487
        %v2489 = vpop.f32.mrb[0].mxu0
        %v2490 = vadd.f32 %v2297, %v2489
        %2491 = vmatprep.mubr.bf16.mxu0 %v579
        %2492 = vmatmul.mubr.bf16.gmra.mrb[0].mxu0 %v578
        %v2493 = vpop.f32.mrb[0].mxu0
        %v2494 = vadd.f32 %v2301, %v2493
        %v2495 = vpop.f32.mrb[0].mxu0
        %v2496 = vadd.f32 %v2303, %v2495
        %v2497 = vpop.f32.mrb[0].mxu0
        %v2498 = vadd.f32 %v2305, %v2497
        %v2499 = vpop.f32.mrb[0].mxu0
        %v2500 = vadd.f32 %v2307, %v2499
        %2501 = vmatprep.mubr.bf16.mxu0 %v587
        %2502 = vmatmul.mubr.bf16.gmra.mrb[0].mxu0 %v586
        %v2503 = vpop.f32.mrb[0].mxu0
        %v2504 = vadd.f32 %v2311, %v2503
        %v2505 = vpop.f32.mrb[0].mxu0
        %v2506 = vadd.f32 %v2313, %v2505
        %v2507 = vpop.f32.mrb[0].mxu0
        %v2508 = vadd.f32 %v2315, %v2507
        %v2509 = vpop.f32.mrb[0].mxu0
        %v2510 = vadd.f32 %v2317, %v2509
        %2511 = vmatprep.mubr.bf16.mxu0 %v595
        %2512 = vmatmul.mubr.bf16.gmra.mrb[0].mxu0 %v594
        %v2513 = vpop.f32.mrb[0].mxu0
        %v2514 = vadd.f32 %v2321, %v2513
        %v2515 = vpop.f32.mrb[0].mxu0
        %v2516 = vadd.f32 %v2323, %v2515
        %v2517 = vpop.f32.mrb[0].mxu0
        %v2518 = vadd.f32 %v2325, %v2517
        %v2519 = vpop.f32.mrb[0].mxu0
        %v2520 = vadd.f32 %v2327, %v2519
        %2521 = vmatprep.mubr.bf16.mxu0 %v603
        %2522 = vmatmul.mubr.bf16.gmra.mrb[0].mxu0 %v602
        %v2523 = vpop.f32.mrb[0].mxu0
        %v2524 = vadd.f32 %v2331, %v2523
        %v2525 = vpop.f32.mrb[0].mxu0
        %v2526 = vadd.f32 %v2333, %v2525
        %v2527 = vpop.f32.mrb[0].mxu0
        %v2528 = vadd.f32 %v2335, %v2527
        %v2529 = vpop.f32.mrb[0].mxu0
        %v2530 = vadd.f32 %v2337, %v2529
        %2531 = vmatprep.mubr.bf16.mxu0 %v611
        %2532 = vmatmul.mubr.bf16.gmra.mrb[0].mxu0 %v610
        %v2533 = vpop.f32.mrb[0].mxu0
        %v2534 = vadd.f32 %v2341, %v2533
        %v2535 = vpop.f32.mrb[0].mxu0
        %v2536 = vadd.f32 %v2343, %v2535
        %v2537 = vpop.f32.mrb[0].mxu0
        %v2538 = vadd.f32 %v2345, %v2537
        %v2539 = vpop.f32.mrb[0].mxu0
        %v2540 = vadd.f32 %v2347, %v2539
        %2541 = vmatprep.mubr.bf16.mxu0 %v619
        %2542 = vmatmul.mubr.bf16.gmra.mrb[0].mxu0 %v618
        %v2543 = vpop.f32.mrb[0].mxu0
        %v2544 = vadd.f32 %v2351, %v2543
        %v2545 = vpop.f32.mrb[0].mxu0
        %v2546 = vadd.f32 %v2353, %v2545
        %v2547 = vpop.f32.mrb[0].mxu0
        %v2548 = vadd.f32 %v2355, %v2547
        %v2549 = vpop.f32.mrb[0].mxu0
        %v2550 = vadd.f32 %v2357, %v2549
        %2551 = vmatprep.mubr.bf16.mxu0 %v627
        %2552 = vmatmul.mubr.bf16.gmra.mrb[0].mxu0 %v626
        %v2553 = vpop.f32.mrb[0].mxu0
        %v2554 = vadd.f32 %v2361, %v2553
        %v2555 = vpop.f32.mrb[0].mxu0
        %v2556 = vadd.f32 %v2363, %v2555
        %v2557 = vpop.f32.mrb[0].mxu0
        %v2558 = vadd.f32 %v2365, %v2557
        %v2559 = vpop.f32.mrb[0].mxu0
        %v2560 = vadd.f32 %v2367, %v2559
        %2561 = vmatprep.mubr.bf16.mxu0 %v635
        %2562 = vmatmul.mubr.bf16.gmra.mrb[0].mxu0 %v634
        %v2563 = vpop.f32.mrb[0].mxu0
        %v2564 = vadd.f32 %v2371, %v2563
        %v2565 = vpop.f32.mrb[0].mxu0
        %v2566 = vadd.f32 %v2373, %v2565
        %v2567 = vpop.f32.mrb[0].mxu0
        %v2568 = vadd.f32 %v2375, %v2567
        %v2569 = vpop.f32.mrb[0].mxu0
        %v2570 = vadd.f32 %v2377, %v2569
        %2571 = vmatprep.mubr.bf16.mxu0 %v643
        %2572 = vmatmul.mubr.bf16.gmra.mrb[0].mxu0 %v642
        %v2573 = vpop.f32.mrb[0].mxu0
        %v2574 = vadd.f32 %v2381, %v2573
        %v2575 = vpop.f32.mrb[0].mxu0
        %v2576 = vadd.f32 %v2383, %v2575
        %v2577 = vpop.f32.mrb[0].mxu0
        %v2578 = vadd.f32 %v2385, %v2577
        %v2579 = vpop.f32.mrb[0].mxu0
        %v2580 = vadd.f32 %v2387, %v2579
        %2581 = vmatprep.mubr.bf16.mxu0 %v651
        %2582 = vmatmul.mubr.bf16.gmra.mrb[0].mxu0 %v650
        %v2583 = vpop.f32.mrb[0].mxu0
        %v2584 = vadd.f32 %v2391, %v2583
        %v2585 = vpop.f32.mrb[0].mxu0
        %v2586 = vadd.f32 %v2393, %v2585
        %v2587 = vpop.f32.mrb[0].mxu0
        %v2588 = vadd.f32 %v2395, %v2587
        %v2589 = vpop.f32.mrb[0].mxu0
        %v2590 = vadd.f32 %v2397, %v2589
        %2591 = vmatprep.mubr.bf16.mxu0 %v659
        %2592 = vmatmul.mubr.bf16.gmra.mrb[0].mxu0 %v658
        %v2593 = vpop.f32.mrb[0].mxu0
        %v2594 = vadd.f32 %v2401, %v2593
        %v2595 = vpop.f32.mrb[0].mxu0
        %v2596 = vadd.f32 %v2403, %v2595
        %v2597 = vpop.f32.mrb[0].mxu0
        %v2598 = vadd.f32 %v2405, %v2597
        %v2599 = vpop.f32.mrb[0].mxu0
        %v2600 = vadd.f32 %v2407, %v2599
        %2601 = vmatprep.mubr.bf16.mxu0 %v667
        %2602 = vmatmul.mubr.bf16.gmra.mrb[0].mxu0 %v666
        %v2603 = vpop.f32.mrb[0].mxu0
        %v2604 = vadd.f32 %v2411, %v2603
        %v2605 = vpop.f32.mrb[0].mxu0
        %v2606 = vadd.f32 %v2413, %v2605
        %v2607 = vpop.f32.mrb[0].mxu0
        %v2608 = vadd.f32 %v2415, %v2607
        %v2609 = vpop.f32.mrb[0].mxu0
        %v2610 = vadd.f32 %v2417, %v2609
        %2611 = vmatprep.mubr.bf16.mxu0 %v675
        %2612 = vmatmul.mubr.bf16.gmra.mrb[0].mxu0 %v674
        %v2613 = vpop.f32.mrb[0].mxu0
        %v2614 = vadd.f32 %v2421, %v2613
        %v2615 = vpop.f32.mrb[0].mxu0
        %v2616 = vadd.f32 %v2423, %v2615
        %v2617 = vpop.f32.mrb[0].mxu0
        %v2618 = vadd.f32 %v2425, %v2617
        %v2619 = vpop.f32.mrb[0].mxu0
        %v2620 = vadd.f32 %v2427, %v2619
        %2621 = vmatprep.mubr.bf16.mxu0 %v683
        %2622 = vmatmul.mubr.bf16.gmra.mrb[0].mxu0 %v682
        %v2623 = vpop.f32.mrb[0].mxu0
        %v2624 = vadd.f32 %v2431, %v2623
        %v2625 = vpop.f32.mrb[0].mxu0
        %v2626 = vadd.f32 %v2433, %v2625
        %v2627 = vpop.f32.mrb[0].mxu0
        %v2628 = vadd.f32 %v2435, %v2627
        %v2629 = vpop.f32.mrb[0].mxu0
        %v2630 = vadd.f32 %v2437, %v2629
        %2631 = vdwg.mxu0
        %2632 = vmatprep.subr.bf16.mxu0 %v1863
        %2633 = vmatpush1.bf16.msra.mxu0 %v1862
        %2634 = vmatprep.subr.bf16.mxu0 %v1867
        %2635 = vmatpush1.bf16.msra.mxu0 %v1866
        %2636 = vmatprep.subr.bf16.mxu0 %v1871
        %2637 = vmatpush1.bf16.msra.mxu0 %v1870
        %2638 = vmatprep.subr.bf16.mxu0 %v1875
        %2639 = vmatpush1.bf16.msra.mxu0 %v1874
        %2640 = vmatprep.subr.bf16.mxu0 %v1879
        %2641 = vmatpush1.bf16.msra.mxu0 %v1878
        %2642 = vmatprep.subr.bf16.mxu0 %v1883
        %2643 = vmatpush1.bf16.msra.mxu0 %v1882
        %2644 = vmatprep.subr.bf16.mxu0 %v1887
        %2645 = vmatpush1.bf16.msra.mxu0 %v1886
        %2646 = vmatprep.subr.bf16.mxu0 %v1891
        %2647 = vmatpush1.bf16.msra.mxu0 %v1890
        %2648 = vmatprep.subr.bf16.mxu0 %v1895
        %2649 = vmatpush1.bf16.msra.mxu0 %v1894
        %2650 = vmatprep.subr.bf16.mxu0 %v1899
        %2651 = vmatpush1.bf16.msra.mxu0 %v1898
        %2652 = vmatprep.subr.bf16.mxu0 %v1903
        %2653 = vmatpush1.bf16.msra.mxu0 %v1902
        %2654 = vmatprep.subr.bf16.mxu0 %v1907
        %2655 = vmatpush1.bf16.msra.mxu0 %v1906
        %2656 = vmatprep.subr.bf16.mxu0 %v1911
        %2657 = vmatpush1.bf16.msra.mxu0 %v1910
        %2658 = vmatprep.subr.bf16.mxu0 %v1915
        %2659 = vmatpush1.bf16.msra.mxu0 %v1914
        %2660 = vmatprep.subr.bf16.mxu0 %v1919
        %2661 = vmatpush1.bf16.msra.mxu0 %v1918
        %2662 = vmatprep.subr.bf16.mxu0 %v1923
        %2663 = vmatpush1.bf16.msra.mxu0 %v1922
        %2664 = vmatprep.mubr.bf16.mxu0 %v565
        %2665 = vmatmul.mubr.bf16.gmra.mrb[0].mxu0 %v564
        %v2666 = vpop.f32.mrb[0].mxu0
        %v2667 = vadd.f32 %v2474, %v2666
        %v2668 = vpop.f32.mrb[0].mxu0
        %v2669 = vadd.f32 %v2476, %v2668
        %v2670 = vpop.f32.mrb[0].mxu0
        %v2671 = vadd.f32 %v2478, %v2670
        %v2672 = vpop.f32.mrb[0].mxu0
        %v2673 = vadd.f32 %v2480, %v2672
        %2674 = vmatprep.mubr.bf16.mxu0 %v573
        %2675 = vmatmul.mubr.bf16.gmra.mrb[0].mxu0 %v572
        %v2676 = vpop.f32.mrb[0].mxu0
        %v2677 = vadd.f32 %v2484, %v2676
        %v2678 = vpop.f32.mrb[0].mxu0
        %v2679 = vadd.f32 %v2486, %v2678
        %v2680 = vpop.f32.mrb[0].mxu0
        %v2681 = vadd.f32 %v2488, %v2680
        %v2682 = vpop.f32.mrb[0].mxu0
        %v2683 = vadd.f32 %v2490, %v2682
        %2684 = vmatprep.mubr.bf16.mxu0 %v581
        %2685 = vmatmul.mubr.bf16.gmra.mrb[0].mxu0 %v580
        %v2686 = vpop.f32.mrb[0].mxu0
        %v2687 = vadd.f32 %v2494, %v2686
        %v2688 = vpop.f32.mrb[0].mxu0
        %v2689 = vadd.f32 %v2496, %v2688
        %v2690 = vpop.f32.mrb[0].mxu0
        %v2691 = vadd.f32 %v2498, %v2690
        %v2692 = vpop.f32.mrb[0].mxu0
        %v2693 = vadd.f32 %v2500, %v2692
        %2694 = vmatprep.mubr.bf16.mxu0 %v589
        %2695 = vmatmul.mubr.bf16.gmra.mrb[0].mxu0 %v588
        %v2696 = vpop.f32.mrb[0].mxu0
        %v2697 = vadd.f32 %v2504, %v2696
        %v2698 = vpop.f32.mrb[0].mxu0
        %v2699 = vadd.f32 %v2506, %v2698
        %v2700 = vpop.f32.mrb[0].mxu0
        %v2701 = vadd.f32 %v2508, %v2700
        %v2702 = vpop.f32.mrb[0].mxu0
        %v2703 = vadd.f32 %v2510, %v2702
        %2704 = vmatprep.mubr.bf16.mxu0 %v597
        %2705 = vmatmul.mubr.bf16.gmra.mrb[0].mxu0 %v596
        %v2706 = vpop.f32.mrb[0].mxu0
        %v2707 = vadd.f32 %v2514, %v2706
        %v2708 = vpop.f32.mrb[0].mxu0
        %v2709 = vadd.f32 %v2516, %v2708
        %v2710 = vpop.f32.mrb[0].mxu0
        %v2711 = vadd.f32 %v2518, %v2710
        %v2712 = vpop.f32.mrb[0].mxu0
        %v2713 = vadd.f32 %v2520, %v2712
        %2714 = vmatprep.mubr.bf16.mxu0 %v605
        %2715 = vmatmul.mubr.bf16.gmra.mrb[0].mxu0 %v604
        %v2716 = vpop.f32.mrb[0].mxu0
        %v2717 = vadd.f32 %v2524, %v2716
        %v2718 = vpop.f32.mrb[0].mxu0
        %v2719 = vadd.f32 %v2526, %v2718
        %v2720 = vpop.f32.mrb[0].mxu0
        %v2721 = vadd.f32 %v2528, %v2720
        %v2722 = vpop.f32.mrb[0].mxu0
        %v2723 = vadd.f32 %v2530, %v2722
        %2724 = vmatprep.mubr.bf16.mxu0 %v613
        %2725 = vmatmul.mubr.bf16.gmra.mrb[0].mxu0 %v612
        %v2726 = vpop.f32.mrb[0].mxu0
        %v2727 = vadd.f32 %v2534, %v2726
        %v2728 = vpop.f32.mrb[0].mxu0
        %v2729 = vadd.f32 %v2536, %v2728
        %v2730 = vpop.f32.mrb[0].mxu0
        %v2731 = vadd.f32 %v2538, %v2730
        %v2732 = vpop.f32.mrb[0].mxu0
        %v2733 = vadd.f32 %v2540, %v2732
        %2734 = vmatprep.mubr.bf16.mxu0 %v621
        %2735 = vmatmul.mubr.bf16.gmra.mrb[0].mxu0 %v620
        %v2736 = vpop.f32.mrb[0].mxu0
        %v2737 = vadd.f32 %v2544, %v2736
        %v2738 = vpop.f32.mrb[0].mxu0
        %v2739 = vadd.f32 %v2546, %v2738
        %v2740 = vpop.f32.mrb[0].mxu0
        %v2741 = vadd.f32 %v2548, %v2740
        %v2742 = vpop.f32.mrb[0].mxu0
        %v2743 = vadd.f32 %v2550, %v2742
        %2744 = vmatprep.mubr.bf16.mxu0 %v629
        %2745 = vmatmul.mubr.bf16.gmra.mrb[0].mxu0 %v628
        %v2746 = vpop.f32.mrb[0].mxu0
        %v2747 = vadd.f32 %v2554, %v2746
        %v2748 = vpop.f32.mrb[0].mxu0
        %v2749 = vadd.f32 %v2556, %v2748
        %v2750 = vpop.f32.mrb[0].mxu0
        %v2751 = vadd.f32 %v2558, %v2750
        %v2752 = vpop.f32.mrb[0].mxu0
        %v2753 = vadd.f32 %v2560, %v2752
        %2754 = vmatprep.mubr.bf16.mxu0 %v637
        %2755 = vmatmul.mubr.bf16.gmra.mrb[0].mxu0 %v636
        %v2756 = vpop.f32.mrb[0].mxu0
        %v2757 = vadd.f32 %v2564, %v2756
        %v2758 = vpop.f32.mrb[0].mxu0
        %v2759 = vadd.f32 %v2566, %v2758
        %v2760 = vpop.f32.mrb[0].mxu0
        %v2761 = vadd.f32 %v2568, %v2760
        %v2762 = vpop.f32.mrb[0].mxu0
        %v2763 = vadd.f32 %v2570, %v2762
        %2764 = vmatprep.mubr.bf16.mxu0 %v645
        %2765 = vmatmul.mubr.bf16.gmra.mrb[0].mxu0 %v644
        %v2766 = vpop.f32.mrb[0].mxu0
        %v2767 = vadd.f32 %v2574, %v2766
        %v2768 = vpop.f32.mrb[0].mxu0
        %v2769 = vadd.f32 %v2576, %v2768
        %v2770 = vpop.f32.mrb[0].mxu0
        %v2771 = vadd.f32 %v2578, %v2770
        %v2772 = vpop.f32.mrb[0].mxu0
        %v2773 = vadd.f32 %v2580, %v2772
        %2774 = vmatprep.mubr.bf16.mxu0 %v653
        %2775 = vmatmul.mubr.bf16.gmra.mrb[0].mxu0 %v652
        %v2776 = vpop.f32.mrb[0].mxu0
        %v2777 = vadd.f32 %v2584, %v2776
        %v2778 = vpop.f32.mrb[0].mxu0
        %v2779 = vadd.f32 %v2586, %v2778
        %v2780 = vpop.f32.mrb[0].mxu0
        %v2781 = vadd.f32 %v2588, %v2780
        %v2782 = vpop.f32.mrb[0].mxu0
        %v2783 = vadd.f32 %v2590, %v2782
        %2784 = vmatprep.mubr.bf16.mxu0 %v661
        %2785 = vmatmul.mubr.bf16.gmra.mrb[0].mxu0 %v660
        %v2786 = vpop.f32.mrb[0].mxu0
        %v2787 = vadd.f32 %v2594, %v2786
        %v2788 = vpop.f32.mrb[0].mxu0
        %v2789 = vadd.f32 %v2596, %v2788
        %v2790 = vpop.f32.mrb[0].mxu0
        %v2791 = vadd.f32 %v2598, %v2790
        %v2792 = vpop.f32.mrb[0].mxu0
        %v2793 = vadd.f32 %v2600, %v2792
        %2794 = vmatprep.mubr.bf16.mxu0 %v669
        %2795 = vmatmul.mubr.bf16.gmra.mrb[0].mxu0 %v668
        %v2796 = vpop.f32.mrb[0].mxu0
        %v2797 = vadd.f32 %v2604, %v2796
        %v2798 = vpop.f32.mrb[0].mxu0
        %v2799 = vadd.f32 %v2606, %v2798
        %v2800 = vpop.f32.mrb[0].mxu0
        %v2801 = vadd.f32 %v2608, %v2800
        %v2802 = vpop.f32.mrb[0].mxu0
        %v2803 = vadd.f32 %v2610, %v2802
        %2804 = vmatprep.mubr.bf16.mxu0 %v677
        %2805 = vmatmul.mubr.bf16.gmra.mrb[0].mxu0 %v676
        %v2806 = vpop.f32.mrb[0].mxu0
        %v2807 = vadd.f32 %v2614, %v2806
        %v2808 = vpop.f32.mrb[0].mxu0
        %v2809 = vadd.f32 %v2616, %v2808
        %v2810 = vpop.f32.mrb[0].mxu0
        %v2811 = vadd.f32 %v2618, %v2810
        %v2812 = vpop.f32.mrb[0].mxu0
        %v2813 = vadd.f32 %v2620, %v2812
        %2814 = vmatprep.mubr.bf16.mxu0 %v685
        %2815 = vmatmul.mubr.bf16.gmra.mrb[0].mxu0 %v684
        %v2816 = vpop.f32.mrb[0].mxu0
        %v2817 = vadd.f32 %v2624, %v2816
        %v2818 = vpop.f32.mrb[0].mxu0
        %v2819 = vadd.f32 %v2626, %v2818
        %v2820 = vpop.f32.mrb[0].mxu0
        %v2821 = vadd.f32 %v2628, %v2820
        %v2822 = vpop.f32.mrb[0].mxu0
        %v2823 = vadd.f32 %v2630, %v2822
        %2824 = vdwg.mxu0
        %2825 = vmatprep.subr.bf16.mxu0 %v1927
        %2826 = vmatpush1.bf16.msra.mxu0 %v1926
        %2827 = vmatprep.subr.bf16.mxu0 %v1931
        %2828 = vmatpush1.bf16.msra.mxu0 %v1930
        %2829 = vmatprep.subr.bf16.mxu0 %v1935
        %2830 = vmatpush1.bf16.msra.mxu0 %v1934
        %2831 = vmatprep.subr.bf16.mxu0 %v1939
        %2832 = vmatpush1.bf16.msra.mxu0 %v1938
        %2833 = vmatprep.subr.bf16.mxu0 %v1943
        %2834 = vmatpush1.bf16.msra.mxu0 %v1942
        %2835 = vmatprep.subr.bf16.mxu0 %v1947
        %2836 = vmatpush1.bf16.msra.mxu0 %v1946
        %2837 = vmatprep.subr.bf16.mxu0 %v1951
        %2838 = vmatpush1.bf16.msra.mxu0 %v1950
        %2839 = vmatprep.subr.bf16.mxu0 %v1955
        %2840 = vmatpush1.bf16.msra.mxu0 %v1954
        %2841 = vmatprep.subr.bf16.mxu0 %v1959
        %2842 = vmatpush1.bf16.msra.mxu0 %v1958
        %2843 = vmatprep.subr.bf16.mxu0 %v1963
        %2844 = vmatpush1.bf16.msra.mxu0 %v1962
        %2845 = vmatprep.subr.bf16.mxu0 %v1967
        %2846 = vmatpush1.bf16.msra.mxu0 %v1966
        %2847 = vmatprep.subr.bf16.mxu0 %v1971
        %2848 = vmatpush1.bf16.msra.mxu0 %v1970
        %2849 = vmatprep.subr.bf16.mxu0 %v1975
        %2850 = vmatpush1.bf16.msra.mxu0 %v1974
        %2851 = vmatprep.subr.bf16.mxu0 %v1979
        %2852 = vmatpush1.bf16.msra.mxu0 %v1978
        %2853 = vmatprep.subr.bf16.mxu0 %v1983
        %2854 = vmatpush1.bf16.msra.mxu0 %v1982
        %2855 = vmatprep.subr.bf16.mxu0 %v1987
        %2856 = vmatpush1.bf16.msra.mxu0 %v1986
        %2857 = vmatprep.mubr.bf16.mxu0 %v567
        %2858 = vmatmul.mubr.bf16.gmra.mrb[0].mxu0 %v566
        %v2859 = vpop.f32.mrb[0].mxu0
        %v2860 = vadd.f32 %v2667, %v2859
        %v2861 = vpop.f32.mrb[0].mxu0
        %v2862 = vadd.f32 %v2669, %v2861
        %v2863 = vpop.f32.mrb[0].mxu0
        %v2864 = vadd.f32 %v2671, %v2863
        %v2865 = vpop.f32.mrb[0].mxu0
        %v2866 = vadd.f32 %v2673, %v2865
        %2867 = vmatprep.mubr.bf16.mxu0 %v575
        %2868 = vmatmul.mubr.bf16.gmra.mrb[0].mxu0 %v574
        %v2869 = vpop.f32.mrb[0].mxu0
        %v2870 = vadd.f32 %v2677, %v2869
        %v2871 = vpop.f32.mrb[0].mxu0
        %v2872 = vadd.f32 %v2679, %v2871
        %v2873 = vpop.f32.mrb[0].mxu0
        %v2874 = vadd.f32 %v2681, %v2873
        %v2875 = vpop.f32.mrb[0].mxu0
        %v2876 = vadd.f32 %v2683, %v2875
        %2877 = vmatprep.mubr.bf16.mxu0 %v583
        %2878 = vmatmul.mubr.bf16.gmra.mrb[0].mxu0 %v582
        %v2879 = vpop.f32.mrb[0].mxu0
        %v2880 = vadd.f32 %v2687, %v2879
        %v2881 = vpop.f32.mrb[0].mxu0
        %v2882 = vadd.f32 %v2689, %v2881
        %v2883 = vpop.f32.mrb[0].mxu0
        %v2884 = vadd.f32 %v2691, %v2883
        %v2885 = vpop.f32.mrb[0].mxu0
        %v2886 = vadd.f32 %v2693, %v2885
        %2887 = vmatprep.mubr.bf16.mxu0 %v591
        %2888 = vmatmul.mubr.bf16.gmra.mrb[0].mxu0 %v590
        %v2889 = vpop.f32.mrb[0].mxu0
        %v2890 = vadd.f32 %v2697, %v2889
        %v2891 = vpop.f32.mrb[0].mxu0
        %v2892 = vadd.f32 %v2699, %v2891
        %v2893 = vpop.f32.mrb[0].mxu0
        %v2894 = vadd.f32 %v2701, %v2893
        %v2895 = vpop.f32.mrb[0].mxu0
        %v2896 = vadd.f32 %v2703, %v2895
        %2897 = vmatprep.mubr.bf16.mxu0 %v599
        %2898 = vmatmul.mubr.bf16.gmra.mrb[0].mxu0 %v598
        %v2899 = vpop.f32.mrb[0].mxu0
        %v2900 = vadd.f32 %v2707, %v2899
        %v2901 = vpop.f32.mrb[0].mxu0
        %v2902 = vadd.f32 %v2709, %v2901
        %v2903 = vpop.f32.mrb[0].mxu0
        %v2904 = vadd.f32 %v2711, %v2903
        %v2905 = vpop.f32.mrb[0].mxu0
        %v2906 = vadd.f32 %v2713, %v2905
        %2907 = vmatprep.mubr.bf16.mxu0 %v607
        %2908 = vmatmul.mubr.bf16.gmra.mrb[0].mxu0 %v606
        %v2909 = vpop.f32.mrb[0].mxu0
        %v2910 = vadd.f32 %v2717, %v2909
        %v2911 = vpop.f32.mrb[0].mxu0
        %v2912 = vadd.f32 %v2719, %v2911
        %v2913 = vpop.f32.mrb[0].mxu0
        %v2914 = vadd.f32 %v2721, %v2913
        %v2915 = vpop.f32.mrb[0].mxu0
        %v2916 = vadd.f32 %v2723, %v2915
        %2917 = vmatprep.mubr.bf16.mxu0 %v615
        %2918 = vmatmul.mubr.bf16.gmra.mrb[0].mxu0 %v614
        %v2919 = vpop.f32.mrb[0].mxu0
        %v2920 = vadd.f32 %v2727, %v2919
        %v2921 = vpop.f32.mrb[0].mxu0
        %v2922 = vadd.f32 %v2729, %v2921
        %v2923 = vpop.f32.mrb[0].mxu0
        %v2924 = vadd.f32 %v2731, %v2923
        %v2925 = vpop.f32.mrb[0].mxu0
        %v2926 = vadd.f32 %v2733, %v2925
        %2927 = vmatprep.mubr.bf16.mxu0 %v623
        %2928 = vmatmul.mubr.bf16.gmra.mrb[0].mxu0 %v622
        %v2929 = vpop.f32.mrb[0].mxu0
        %v2930 = vadd.f32 %v2737, %v2929
        %v2931 = vpop.f32.mrb[0].mxu0
        %v2932 = vadd.f32 %v2739, %v2931
        %v2933 = vpop.f32.mrb[0].mxu0
        %v2934 = vadd.f32 %v2741, %v2933
        %v2935 = vpop.f32.mrb[0].mxu0
        %v2936 = vadd.f32 %v2743, %v2935
        %2937 = vmatprep.mubr.bf16.mxu0 %v631
        %2938 = vmatmul.mubr.bf16.gmra.mrb[0].mxu0 %v630
        %v2939 = vpop.f32.mrb[0].mxu0
        %v2940 = vadd.f32 %v2747, %v2939
        %v2941 = vpop.f32.mrb[0].mxu0
        %v2942 = vadd.f32 %v2749, %v2941
        %v2943 = vpop.f32.mrb[0].mxu0
        %v2944 = vadd.f32 %v2751, %v2943
        %v2945 = vpop.f32.mrb[0].mxu0
        %v2946 = vadd.f32 %v2753, %v2945
        %2947 = vmatprep.mubr.bf16.mxu0 %v639
        %2948 = vmatmul.mubr.bf16.gmra.mrb[0].mxu0 %v638
        %v2949 = vpop.f32.mrb[0].mxu0
        %v2950 = vadd.f32 %v2757, %v2949
        %v2951 = vpop.f32.mrb[0].mxu0
        %v2952 = vadd.f32 %v2759, %v2951
        %v2953 = vpop.f32.mrb[0].mxu0
        %v2954 = vadd.f32 %v2761, %v2953
        %v2955 = vpop.f32.mrb[0].mxu0
        %v2956 = vadd.f32 %v2763, %v2955
        %2957 = vmatprep.mubr.bf16.mxu0 %v647
        %2958 = vmatmul.mubr.bf16.gmra.mrb[0].mxu0 %v646
        %v2959 = vpop.f32.mrb[0].mxu0
        %v2960 = vadd.f32 %v2767, %v2959
        %v2961 = vpop.f32.mrb[0].mxu0
        %v2962 = vadd.f32 %v2769, %v2961
        %v2963 = vpop.f32.mrb[0].mxu0
        %v2964 = vadd.f32 %v2771, %v2963
        %v2965 = vpop.f32.mrb[0].mxu0
        %v2966 = vadd.f32 %v2773, %v2965
        %2967 = vmatprep.mubr.bf16.mxu0 %v655
        %2968 = vmatmul.mubr.bf16.gmra.mrb[0].mxu0 %v654
        %v2969 = vpop.f32.mrb[0].mxu0
        %v2970 = vadd.f32 %v2777, %v2969
        %v2971 = vpop.f32.mrb[0].mxu0
        %v2972 = vadd.f32 %v2779, %v2971
        %v2973 = vpop.f32.mrb[0].mxu0
        %v2974 = vadd.f32 %v2781, %v2973
        %v2975 = vpop.f32.mrb[0].mxu0
        %v2976 = vadd.f32 %v2783, %v2975
        %2977 = vmatprep.mubr.bf16.mxu0 %v663
        %2978 = vmatmul.mubr.bf16.gmra.mrb[0].mxu0 %v662
        %v2979 = vpop.f32.mrb[0].mxu0
        %v2980 = vadd.f32 %v2787, %v2979
        %v2981 = vpop.f32.mrb[0].mxu0
        %v2982 = vadd.f32 %v2789, %v2981
        %v2983 = vpop.f32.mrb[0].mxu0
        %v2984 = vadd.f32 %v2791, %v2983
        %v2985 = vpop.f32.mrb[0].mxu0
        %v2986 = vadd.f32 %v2793, %v2985
        %2987 = vmatprep.mubr.bf16.mxu0 %v671
        %2988 = vmatmul.mubr.bf16.gmra.mrb[0].mxu0 %v670
        %v2989 = vpop.f32.mrb[0].mxu0
        %v2990 = vadd.f32 %v2797, %v2989
        %v2991 = vpop.f32.mrb[0].mxu0
        %v2992 = vadd.f32 %v2799, %v2991
        %v2993 = vpop.f32.mrb[0].mxu0
        %v2994 = vadd.f32 %v2801, %v2993
        %v2995 = vpop.f32.mrb[0].mxu0
        %v2996 = vadd.f32 %v2803, %v2995
        %2997 = vmatprep.mubr.bf16.mxu0 %v679
        %2998 = vmatmul.mubr.bf16.gmra.mrb[0].mxu0 %v678
        %v2999 = vpop.f32.mrb[0].mxu0
        %v3000 = vadd.f32 %v2807, %v2999
        %v3001 = vpop.f32.mrb[0].mxu0
        %v3002 = vadd.f32 %v2809, %v3001
        %v3003 = vpop.f32.mrb[0].mxu0
        %v3004 = vadd.f32 %v2811, %v3003
        %v3005 = vpop.f32.mrb[0].mxu0
        %v3006 = vadd.f32 %v2813, %v3005
        %3007 = vmatprep.mubr.bf16.mxu0 %v687
        %3008 = vmatmul.mubr.bf16.gmra.mrb[0].mxu0 %v686
        %v3009 = vpop.f32.mrb[0].mxu0
        %v3010 = vadd.f32 %v2817, %v3009
        %v3011 = vpop.f32.mrb[0].mxu0
        %v3012 = vadd.f32 %v2819, %v3011
        %v3013 = vpop.f32.mrb[0].mxu0
        %v3014 = vadd.f32 %v2821, %v3013
        %v3015 = vpop.f32.mrb[0].mxu0
        %v3016 = vadd.f32 %v2823, %v3015
        %3017 = vdwg.mxu0
        %3018 = vmatprep.subr.bf16.mxu0 %v1737
        %3019 = vmatpush1.bf16.msra.mxu0 %v1736
        %3020 = vmatprep.subr.bf16.mxu0 %v1741
        %3021 = vmatpush1.bf16.msra.mxu0 %v1740
        %3022 = vmatprep.subr.bf16.mxu0 %v1745
        %3023 = vmatpush1.bf16.msra.mxu0 %v1744
        %3024 = vmatprep.subr.bf16.mxu0 %v1749
        %3025 = vmatpush1.bf16.msra.mxu0 %v1748
        %3026 = vmatprep.subr.bf16.mxu0 %v1753
        %3027 = vmatpush1.bf16.msra.mxu0 %v1752
        %3028 = vmatprep.subr.bf16.mxu0 %v1757
        %3029 = vmatpush1.bf16.msra.mxu0 %v1756
        %3030 = vmatprep.subr.bf16.mxu0 %v1761
        %3031 = vmatpush1.bf16.msra.mxu0 %v1760
        %3032 = vmatprep.subr.bf16.mxu0 %v1765
        %3033 = vmatpush1.bf16.msra.mxu0 %v1764
        %3034 = vmatprep.subr.bf16.mxu0 %v1769
        %3035 = vmatpush1.bf16.msra.mxu0 %v1768
        %3036 = vmatprep.subr.bf16.mxu0 %v1773
        %3037 = vmatpush1.bf16.msra.mxu0 %v1772
        %3038 = vmatprep.subr.bf16.mxu0 %v1777
        %3039 = vmatpush1.bf16.msra.mxu0 %v1776
        %3040 = vmatprep.subr.bf16.mxu0 %v1781
        %3041 = vmatpush1.bf16.msra.mxu0 %v1780
        %3042 = vmatprep.subr.bf16.mxu0 %v1785
        %3043 = vmatpush1.bf16.msra.mxu0 %v1784
        %3044 = vmatprep.subr.bf16.mxu0 %v1789
        %3045 = vmatpush1.bf16.msra.mxu0 %v1788
        %3046 = vmatprep.subr.bf16.mxu0 %v1793
        %3047 = vmatpush1.bf16.msra.mxu0 %v1792
        %3048 = vmatprep.subr.bf16.mxu0 %v1797
        %3049 = vmatpush1.bf16.msra.mxu0 %v1796
        %3050 = vmatprep.mubr.bf16.mxu0 %v561
        %3051 = vmatmul.mubr.bf16.gmra.mrb[0].mxu0 %v560
        %v3052 = vpop.f32.mrb[0].mxu0
        %v3053 = vadd.f32 %v957, %v3052
        %v3054 = vpop.f32.mrb[0].mxu0
        %v3055 = vadd.f32 %v961, %v3054
        %v3056 = vpop.f32.mrb[0].mxu0
        %v3057 = vadd.f32 %v957, %v3056
        %v3058 = vpop.f32.mrb[0].mxu0
        %v3059 = vadd.f32 %v961, %v3058
        %3060 = vmatprep.mubr.bf16.mxu0 %v569
        %3061 = vmatmul.mubr.bf16.gmra.mrb[0].mxu0 %v568
        %v3062 = vpop.f32.mrb[0].mxu0
        %v3063 = vadd.f32 %v957, %v3062
        %v3064 = vpop.f32.mrb[0].mxu0
        %v3065 = vadd.f32 %v961, %v3064
        %v3066 = vpop.f32.mrb[0].mxu0
        %v3067 = vadd.f32 %v957, %v3066
        %v3068 = vpop.f32.mrb[0].mxu0
        %v3069 = vadd.f32 %v961, %v3068
        %3070 = vmatprep.mubr.bf16.mxu0 %v577
        %3071 = vmatmul.mubr.bf16.gmra.mrb[0].mxu0 %v576
        %v3072 = vpop.f32.mrb[0].mxu0
        %v3073 = vadd.f32 %v957, %v3072
        %v3074 = vpop.f32.mrb[0].mxu0
        %v3075 = vadd.f32 %v961, %v3074
        %v3076 = vpop.f32.mrb[0].mxu0
        %v3077 = vadd.f32 %v957, %v3076
        %v3078 = vpop.f32.mrb[0].mxu0
        %v3079 = vadd.f32 %v961, %v3078
        %3080 = vmatprep.mubr.bf16.mxu0 %v585
        %3081 = vmatmul.mubr.bf16.gmra.mrb[0].mxu0 %v584
        %v3082 = vpop.f32.mrb[0].mxu0
        %v3083 = vadd.f32 %v957, %v3082
        %v3084 = vpop.f32.mrb[0].mxu0
        %v3085 = vadd.f32 %v961, %v3084
        %v3086 = vpop.f32.mrb[0].mxu0
        %v3087 = vadd.f32 %v957, %v3086
        %v3088 = vpop.f32.mrb[0].mxu0
        %v3089 = vadd.f32 %v961, %v3088
        %3090 = vmatprep.mubr.bf16.mxu0 %v593
        %3091 = vmatmul.mubr.bf16.gmra.mrb[0].mxu0 %v592
        %v3092 = vpop.f32.mrb[0].mxu0
        %v3093 = vadd.f32 %v957, %v3092
        %v3094 = vpop.f32.mrb[0].mxu0
        %v3095 = vadd.f32 %v961, %v3094
        %v3096 = vpop.f32.mrb[0].mxu0
        %v3097 = vadd.f32 %v957, %v3096
        %v3098 = vpop.f32.mrb[0].mxu0
        %v3099 = vadd.f32 %v961, %v3098
        %3100 = vmatprep.mubr.bf16.mxu0 %v601
        %3101 = vmatmul.mubr.bf16.gmra.mrb[0].mxu0 %v600
        %v3102 = vpop.f32.mrb[0].mxu0
        %v3103 = vadd.f32 %v957, %v3102
        %v3104 = vpop.f32.mrb[0].mxu0
        %v3105 = vadd.f32 %v961, %v3104
        %v3106 = vpop.f32.mrb[0].mxu0
        %v3107 = vadd.f32 %v957, %v3106
        %v3108 = vpop.f32.mrb[0].mxu0
        %v3109 = vadd.f32 %v961, %v3108
        %3110 = vmatprep.mubr.bf16.mxu0 %v609
        %3111 = vmatmul.mubr.bf16.gmra.mrb[0].mxu0 %v608
        %v3112 = vpop.f32.mrb[0].mxu0
        %v3113 = vadd.f32 %v957, %v3112
        %v3114 = vpop.f32.mrb[0].mxu0
        %v3115 = vadd.f32 %v961, %v3114
        %v3116 = vpop.f32.mrb[0].mxu0
        %v3117 = vadd.f32 %v957, %v3116
        %v3118 = vpop.f32.mrb[0].mxu0
        %v3119 = vadd.f32 %v961, %v3118
        %3120 = vmatprep.mubr.bf16.mxu0 %v617
        %3121 = vmatmul.mubr.bf16.gmra.mrb[0].mxu0 %v616
        %v3122 = vpop.f32.mrb[0].mxu0
        %v3123 = vadd.f32 %v957, %v3122
        %v3124 = vpop.f32.mrb[0].mxu0
        %v3125 = vadd.f32 %v961, %v3124
        %v3126 = vpop.f32.mrb[0].mxu0
        %v3127 = vadd.f32 %v957, %v3126
        %v3128 = vpop.f32.mrb[0].mxu0
        %v3129 = vadd.f32 %v961, %v3128
        %3130 = vmatprep.mubr.bf16.mxu0 %v625
        %3131 = vmatmul.mubr.bf16.gmra.mrb[0].mxu0 %v624
        %v3132 = vpop.f32.mrb[0].mxu0
        %v3133 = vadd.f32 %v957, %v3132
        %v3134 = vpop.f32.mrb[0].mxu0
        %v3135 = vadd.f32 %v961, %v3134
        %v3136 = vpop.f32.mrb[0].mxu0
        %v3137 = vadd.f32 %v957, %v3136
        %v3138 = vpop.f32.mrb[0].mxu0
        %v3139 = vadd.f32 %v961, %v3138
        %3140 = vmatprep.mubr.bf16.mxu0 %v633
        %3141 = vmatmul.mubr.bf16.gmra.mrb[0].mxu0 %v632
        %v3142 = vpop.f32.mrb[0].mxu0
        %v3143 = vadd.f32 %v957, %v3142
        %v3144 = vpop.f32.mrb[0].mxu0
        %v3145 = vadd.f32 %v961, %v3144
        %v3146 = vpop.f32.mrb[0].mxu0
        %v3147 = vadd.f32 %v957, %v3146
        %v3148 = vpop.f32.mrb[0].mxu0
        %v3149 = vadd.f32 %v961, %v3148
        %3150 = vmatprep.mubr.bf16.mxu0 %v641
        %3151 = vmatmul.mubr.bf16.gmra.mrb[0].mxu0 %v640
        %v3152 = vpop.f32.mrb[0].mxu0
        %v3153 = vadd.f32 %v957, %v3152
        %v3154 = vpop.f32.mrb[0].mxu0
        %v3155 = vadd.f32 %v961, %v3154
        %v3156 = vpop.f32.mrb[0].mxu0
        %v3157 = vadd.f32 %v957, %v3156
        %v3158 = vpop.f32.mrb[0].mxu0
        %v3159 = vadd.f32 %v961, %v3158
        %3160 = vmatprep.mubr.bf16.mxu0 %v649
        %3161 = vmatmul.mubr.bf16.gmra.mrb[0].mxu0 %v648
        %v3162 = vpop.f32.mrb[0].mxu0
        %v3163 = vadd.f32 %v957, %v3162
        %v3164 = vpop.f32.mrb[0].mxu0
        %v3165 = vadd.f32 %v961, %v3164
        %v3166 = vpop.f32.mrb[0].mxu0
        %v3167 = vadd.f32 %v957, %v3166
        %v3168 = vpop.f32.mrb[0].mxu0
        %v3169 = vadd.f32 %v961, %v3168
        %3170 = vmatprep.mubr.bf16.mxu0 %v657
        %3171 = vmatmul.mubr.bf16.gmra.mrb[0].mxu0 %v656
        %v3172 = vpop.f32.mrb[0].mxu0
        %v3173 = vadd.f32 %v957, %v3172
        %v3174 = vpop.f32.mrb[0].mxu0
        %v3175 = vadd.f32 %v961, %v3174
        %v3176 = vpop.f32.mrb[0].mxu0
        %v3177 = vadd.f32 %v957, %v3176
        %v3178 = vpop.f32.mrb[0].mxu0
        %v3179 = vadd.f32 %v961, %v3178
        %3180 = vmatprep.mubr.bf16.mxu0 %v665
        %3181 = vmatmul.mubr.bf16.gmra.mrb[0].mxu0 %v664
        %v3182 = vpop.f32.mrb[0].mxu0
        %v3183 = vadd.f32 %v957, %v3182
        %v3184 = vpop.f32.mrb[0].mxu0
        %v3185 = vadd.f32 %v961, %v3184
        %v3186 = vpop.f32.mrb[0].mxu0
        %v3187 = vadd.f32 %v957, %v3186
        %v3188 = vpop.f32.mrb[0].mxu0
        %v3189 = vadd.f32 %v961, %v3188
        %3190 = vmatprep.mubr.bf16.mxu0 %v673
        %3191 = vmatmul.mubr.bf16.gmra.mrb[0].mxu0 %v672
        %v3192 = vpop.f32.mrb[0].mxu0
        %v3193 = vadd.f32 %v957, %v3192
        %v3194 = vpop.f32.mrb[0].mxu0
        %v3195 = vadd.f32 %v961, %v3194
        %v3196 = vpop.f32.mrb[0].mxu0
        %v3197 = vadd.f32 %v957, %v3196
        %v3198 = vpop.f32.mrb[0].mxu0
        %v3199 = vadd.f32 %v961, %v3198
        %3200 = vmatprep.mubr.bf16.mxu0 %v681
        %3201 = vmatmul.mubr.bf16.gmra.mrb[0].mxu0 %v680
        %v3202 = vpop.f32.mrb[0].mxu0
        %v3203 = vadd.f32 %v957, %v3202
        %v3204 = vpop.f32.mrb[0].mxu0
        %v3205 = vadd.f32 %v961, %v3204
        %v3206 = vpop.f32.mrb[0].mxu0
        %v3207 = vadd.f32 %v957, %v3206
        %v3208 = vpop.f32.mrb[0].mxu0
        %v3209 = vadd.f32 %v961, %v3208
        %3210 = vdwg.mxu0
        %3211 = vmatprep.subr.bf16.mxu0 %v1801
        %3212 = vmatpush1.bf16.msra.mxu0 %v1800
        %3213 = vmatprep.subr.bf16.mxu0 %v1805
        %3214 = vmatpush1.bf16.msra.mxu0 %v1804
        %3215 = vmatprep.subr.bf16.mxu0 %v1809
        %3216 = vmatpush1.bf16.msra.mxu0 %v1808
        %3217 = vmatprep.subr.bf16.mxu0 %v1813
        %3218 = vmatpush1.bf16.msra.mxu0 %v1812
        %3219 = vmatprep.subr.bf16.mxu0 %v1817
        %3220 = vmatpush1.bf16.msra.mxu0 %v1816
        %3221 = vmatprep.subr.bf16.mxu0 %v1821
        %3222 = vmatpush1.bf16.msra.mxu0 %v1820
        %3223 = vmatprep.subr.bf16.mxu0 %v1825
        %3224 = vmatpush1.bf16.msra.mxu0 %v1824
        %3225 = vmatprep.subr.bf16.mxu0 %v1829
        %3226 = vmatpush1.bf16.msra.mxu0 %v1828
        %3227 = vmatprep.subr.bf16.mxu0 %v1833
        %3228 = vmatpush1.bf16.msra.mxu0 %v1832
        %3229 = vmatprep.subr.bf16.mxu0 %v1837
        %3230 = vmatpush1.bf16.msra.mxu0 %v1836
        %3231 = vmatprep.subr.bf16.mxu0 %v1841
        %3232 = vmatpush1.bf16.msra.mxu0 %v1840
        %3233 = vmatprep.subr.bf16.mxu0 %v1845
        %3234 = vmatpush1.bf16.msra.mxu0 %v1844
        %3235 = vmatprep.subr.bf16.mxu0 %v1849
        %3236 = vmatpush1.bf16.msra.mxu0 %v1848
        %3237 = vmatprep.subr.bf16.mxu0 %v1853
        %3238 = vmatpush1.bf16.msra.mxu0 %v1852
        %3239 = vmatprep.subr.bf16.mxu0 %v1857
        %3240 = vmatpush1.bf16.msra.mxu0 %v1856
        %3241 = vmatprep.subr.bf16.mxu0 %v1861
        %3242 = vmatpush1.bf16.msra.mxu0 %v1860
        %3243 = vmatprep.mubr.bf16.mxu0 %v563
        %3244 = vmatmul.mubr.bf16.gmra.mrb[0].mxu0 %v562
        %v3245 = vpop.f32.mrb[0].mxu0
        %v3246 = vadd.f32 %v3053, %v3245
        %v3247 = vpop.f32.mrb[0].mxu0
        %v3248 = vadd.f32 %v3055, %v3247
        %v3249 = vpop.f32.mrb[0].mxu0
        %v3250 = vadd.f32 %v3057, %v3249
        %v3251 = vpop.f32.mrb[0].mxu0
        %v3252 = vadd.f32 %v3059, %v3251
        %3253 = vmatprep.mubr.bf16.mxu0 %v571
        %3254 = vmatmul.mubr.bf16.gmra.mrb[0].mxu0 %v570
        %v3255 = vpop.f32.mrb[0].mxu0
        %v3256 = vadd.f32 %v3063, %v3255
        %v3257 = vpop.f32.mrb[0].mxu0
        %v3258 = vadd.f32 %v3065, %v3257
        %v3259 = vpop.f32.mrb[0].mxu0
        %v3260 = vadd.f32 %v3067, %v3259
        %v3261 = vpop.f32.mrb[0].mxu0
        %v3262 = vadd.f32 %v3069, %v3261
        %3263 = vmatprep.mubr.bf16.mxu0 %v579
        %3264 = vmatmul.mubr.bf16.gmra.mrb[0].mxu0 %v578
        %v3265 = vpop.f32.mrb[0].mxu0
        %v3266 = vadd.f32 %v3073, %v3265
        %v3267 = vpop.f32.mrb[0].mxu0
        %v3268 = vadd.f32 %v3075, %v3267
        %v3269 = vpop.f32.mrb[0].mxu0
        %v3270 = vadd.f32 %v3077, %v3269
        %v3271 = vpop.f32.mrb[0].mxu0
        %v3272 = vadd.f32 %v3079, %v3271
        %3273 = vmatprep.mubr.bf16.mxu0 %v587
        %3274 = vmatmul.mubr.bf16.gmra.mrb[0].mxu0 %v586
        %v3275 = vpop.f32.mrb[0].mxu0
        %v3276 = vadd.f32 %v3083, %v3275
        %v3277 = vpop.f32.mrb[0].mxu0
        %v3278 = vadd.f32 %v3085, %v3277
        %v3279 = vpop.f32.mrb[0].mxu0
        %v3280 = vadd.f32 %v3087, %v3279
        %v3281 = vpop.f32.mrb[0].mxu0
        %v3282 = vadd.f32 %v3089, %v3281
        %3283 = vmatprep.mubr.bf16.mxu0 %v595
        %3284 = vmatmul.mubr.bf16.gmra.mrb[0].mxu0 %v594
        %v3285 = vpop.f32.mrb[0].mxu0
        %v3286 = vadd.f32 %v3093, %v3285
        %v3287 = vpop.f32.mrb[0].mxu0
        %v3288 = vadd.f32 %v3095, %v3287
        %v3289 = vpop.f32.mrb[0].mxu0
        %v3290 = vadd.f32 %v3097, %v3289
        %v3291 = vpop.f32.mrb[0].mxu0
        %v3292 = vadd.f32 %v3099, %v3291
        %3293 = vmatprep.mubr.bf16.mxu0 %v603
        %3294 = vmatmul.mubr.bf16.gmra.mrb[0].mxu0 %v602
        %v3295 = vpop.f32.mrb[0].mxu0
        %v3296 = vadd.f32 %v3103, %v3295
        %v3297 = vpop.f32.mrb[0].mxu0
        %v3298 = vadd.f32 %v3105, %v3297
        %v3299 = vpop.f32.mrb[0].mxu0
        %v3300 = vadd.f32 %v3107, %v3299
        %v3301 = vpop.f32.mrb[0].mxu0
        %v3302 = vadd.f32 %v3109, %v3301
        %3303 = vmatprep.mubr.bf16.mxu0 %v611
        %3304 = vmatmul.mubr.bf16.gmra.mrb[0].mxu0 %v610
        %v3305 = vpop.f32.mrb[0].mxu0
        %v3306 = vadd.f32 %v3113, %v3305
        %v3307 = vpop.f32.mrb[0].mxu0
        %v3308 = vadd.f32 %v3115, %v3307
        %v3309 = vpop.f32.mrb[0].mxu0
        %v3310 = vadd.f32 %v3117, %v3309
        %v3311 = vpop.f32.mrb[0].mxu0
        %v3312 = vadd.f32 %v3119, %v3311
        %3313 = vmatprep.mubr.bf16.mxu0 %v619
        %3314 = vmatmul.mubr.bf16.gmra.mrb[0].mxu0 %v618
        %v3315 = vpop.f32.mrb[0].mxu0
        %v3316 = vadd.f32 %v3123, %v3315
        %v3317 = vpop.f32.mrb[0].mxu0
        %v3318 = vadd.f32 %v3125, %v3317
        %v3319 = vpop.f32.mrb[0].mxu0
        %v3320 = vadd.f32 %v3127, %v3319
        %v3321 = vpop.f32.mrb[0].mxu0
        %v3322 = vadd.f32 %v3129, %v3321
        %3323 = vmatprep.mubr.bf16.mxu0 %v627
        %3324 = vmatmul.mubr.bf16.gmra.mrb[0].mxu0 %v626
        %v3325 = vpop.f32.mrb[0].mxu0
        %v3326 = vadd.f32 %v3133, %v3325
        %v3327 = vpop.f32.mrb[0].mxu0
        %v3328 = vadd.f32 %v3135, %v3327
        %v3329 = vpop.f32.mrb[0].mxu0
        %v3330 = vadd.f32 %v3137, %v3329
        %v3331 = vpop.f32.mrb[0].mxu0
        %v3332 = vadd.f32 %v3139, %v3331
        %3333 = vmatprep.mubr.bf16.mxu0 %v635
        %3334 = vmatmul.mubr.bf16.gmra.mrb[0].mxu0 %v634
        %v3335 = vpop.f32.mrb[0].mxu0
        %v3336 = vadd.f32 %v3143, %v3335
        %v3337 = vpop.f32.mrb[0].mxu0
        %v3338 = vadd.f32 %v3145, %v3337
        %v3339 = vpop.f32.mrb[0].mxu0
        %v3340 = vadd.f32 %v3147, %v3339
        %v3341 = vpop.f32.mrb[0].mxu0
        %v3342 = vadd.f32 %v3149, %v3341
        %3343 = vmatprep.mubr.bf16.mxu0 %v643
        %3344 = vmatmul.mubr.bf16.gmra.mrb[0].mxu0 %v642
        %v3345 = vpop.f32.mrb[0].mxu0
        %v3346 = vadd.f32 %v3153, %v3345
        %v3347 = vpop.f32.mrb[0].mxu0
        %v3348 = vadd.f32 %v3155, %v3347
        %v3349 = vpop.f32.mrb[0].mxu0
        %v3350 = vadd.f32 %v3157, %v3349
        %v3351 = vpop.f32.mrb[0].mxu0
        %v3352 = vadd.f32 %v3159, %v3351
        %3353 = vmatprep.mubr.bf16.mxu0 %v651
        %3354 = vmatmul.mubr.bf16.gmra.mrb[0].mxu0 %v650
        %v3355 = vpop.f32.mrb[0].mxu0
        %v3356 = vadd.f32 %v3163, %v3355
        %v3357 = vpop.f32.mrb[0].mxu0
        %v3358 = vadd.f32 %v3165, %v3357
        %v3359 = vpop.f32.mrb[0].mxu0
        %v3360 = vadd.f32 %v3167, %v3359
        %v3361 = vpop.f32.mrb[0].mxu0
        %v3362 = vadd.f32 %v3169, %v3361
        %3363 = vmatprep.mubr.bf16.mxu0 %v659
        %3364 = vmatmul.mubr.bf16.gmra.mrb[0].mxu0 %v658
        %v3365 = vpop.f32.mrb[0].mxu0
        %v3366 = vadd.f32 %v3173, %v3365
        %v3367 = vpop.f32.mrb[0].mxu0
        %v3368 = vadd.f32 %v3175, %v3367
        %v3369 = vpop.f32.mrb[0].mxu0
        %v3370 = vadd.f32 %v3177, %v3369
        %v3371 = vpop.f32.mrb[0].mxu0
        %v3372 = vadd.f32 %v3179, %v3371
        %3373 = vmatprep.mubr.bf16.mxu0 %v667
        %3374 = vmatmul.mubr.bf16.gmra.mrb[0].mxu0 %v666
        %v3375 = vpop.f32.mrb[0].mxu0
        %v3376 = vadd.f32 %v3183, %v3375
        %v3377 = vpop.f32.mrb[0].mxu0
        %v3378 = vadd.f32 %v3185, %v3377
        %v3379 = vpop.f32.mrb[0].mxu0
        %v3380 = vadd.f32 %v3187, %v3379
        %v3381 = vpop.f32.mrb[0].mxu0
        %v3382 = vadd.f32 %v3189, %v3381
        %3383 = vmatprep.mubr.bf16.mxu0 %v675
        %3384 = vmatmul.mubr.bf16.gmra.mrb[0].mxu0 %v674
        %v3385 = vpop.f32.mrb[0].mxu0
        %v3386 = vadd.f32 %v3193, %v3385
        %v3387 = vpop.f32.mrb[0].mxu0
        %v3388 = vadd.f32 %v3195, %v3387
        %v3389 = vpop.f32.mrb[0].mxu0
        %v3390 = vadd.f32 %v3197, %v3389
        %v3391 = vpop.f32.mrb[0].mxu0
        %v3392 = vadd.f32 %v3199, %v3391
        %3393 = vmatprep.mubr.bf16.mxu0 %v683
        %3394 = vmatmul.mubr.bf16.gmra.mrb[0].mxu0 %v682
        %v3395 = vpop.f32.mrb[0].mxu0
        %v3396 = vadd.f32 %v3203, %v3395
        %v3397 = vpop.f32.mrb[0].mxu0
        %v3398 = vadd.f32 %v3205, %v3397
        %v3399 = vpop.f32.mrb[0].mxu0
        %v3400 = vadd.f32 %v3207, %v3399
        %v3401 = vpop.f32.mrb[0].mxu0
        %v3402 = vadd.f32 %v3209, %v3401
        %3403 = vdwg.mxu0
        %3404 = vmatprep.subr.bf16.mxu0 %v1865
        %3405 = vmatpush1.bf16.msra.mxu0 %v1864
        %3406 = vmatprep.subr.bf16.mxu0 %v1869
        %3407 = vmatpush1.bf16.msra.mxu0 %v1868
        %3408 = vmatprep.subr.bf16.mxu0 %v1873
        %3409 = vmatpush1.bf16.msra.mxu0 %v1872
        %3410 = vmatprep.subr.bf16.mxu0 %v1877
        %3411 = vmatpush1.bf16.msra.mxu0 %v1876
        %3412 = vmatprep.subr.bf16.mxu0 %v1881
        %3413 = vmatpush1.bf16.msra.mxu0 %v1880
        %3414 = vmatprep.subr.bf16.mxu0 %v1885
        %3415 = vmatpush1.bf16.msra.mxu0 %v1884
        %3416 = vmatprep.subr.bf16.mxu0 %v1889
        %3417 = vmatpush1.bf16.msra.mxu0 %v1888
        %3418 = vmatprep.subr.bf16.mxu0 %v1893
        %3419 = vmatpush1.bf16.msra.mxu0 %v1892
        %3420 = vmatprep.subr.bf16.mxu0 %v1897
        %3421 = vmatpush1.bf16.msra.mxu0 %v1896
        %3422 = vmatprep.subr.bf16.mxu0 %v1901
        %3423 = vmatpush1.bf16.msra.mxu0 %v1900
        %3424 = vmatprep.subr.bf16.mxu0 %v1905
        %3425 = vmatpush1.bf16.msra.mxu0 %v1904
        %3426 = vmatprep.subr.bf16.mxu0 %v1909
        %3427 = vmatpush1.bf16.msra.mxu0 %v1908
        %3428 = vmatprep.subr.bf16.mxu0 %v1913
        %3429 = vmatpush1.bf16.msra.mxu0 %v1912
        %3430 = vmatprep.subr.bf16.mxu0 %v1917
        %3431 = vmatpush1.bf16.msra.mxu0 %v1916
        %3432 = vmatprep.subr.bf16.mxu0 %v1921
        %3433 = vmatpush1.bf16.msra.mxu0 %v1920
        %3434 = vmatprep.subr.bf16.mxu0 %v1925
        %3435 = vmatpush1.bf16.msra.mxu0 %v1924
        %3436 = vmatprep.mubr.bf16.mxu0 %v565
        %3437 = vmatmul.mubr.bf16.gmra.mrb[0].mxu0 %v564
        %v3438 = vpop.f32.mrb[0].mxu0
        %v3439 = vadd.f32 %v3246, %v3438
        %v3440 = vpop.f32.mrb[0].mxu0
        %v3441 = vadd.f32 %v3248, %v3440
        %v3442 = vpop.f32.mrb[0].mxu0
        %v3443 = vadd.f32 %v3250, %v3442
        %v3444 = vpop.f32.mrb[0].mxu0
        %v3445 = vadd.f32 %v3252, %v3444
        %3446 = vmatprep.mubr.bf16.mxu0 %v573
        %3447 = vmatmul.mubr.bf16.gmra.mrb[0].mxu0 %v572
        %v3448 = vpop.f32.mrb[0].mxu0
        %v3449 = vadd.f32 %v3256, %v3448
        %v3450 = vpop.f32.mrb[0].mxu0
        %v3451 = vadd.f32 %v3258, %v3450
        %v3452 = vpop.f32.mrb[0].mxu0
        %v3453 = vadd.f32 %v3260, %v3452
        %v3454 = vpop.f32.mrb[0].mxu0
        %v3455 = vadd.f32 %v3262, %v3454
        %3456 = vmatprep.mubr.bf16.mxu0 %v581
        %3457 = vmatmul.mubr.bf16.gmra.mrb[0].mxu0 %v580
        %v3458 = vpop.f32.mrb[0].mxu0
        %v3459 = vadd.f32 %v3266, %v3458
        %v3460 = vpop.f32.mrb[0].mxu0
        %v3461 = vadd.f32 %v3268, %v3460
        %v3462 = vpop.f32.mrb[0].mxu0
        %v3463 = vadd.f32 %v3270, %v3462
        %v3464 = vpop.f32.mrb[0].mxu0
        %v3465 = vadd.f32 %v3272, %v3464
        %3466 = vmatprep.mubr.bf16.mxu0 %v589
        %3467 = vmatmul.mubr.bf16.gmra.mrb[0].mxu0 %v588
        %v3468 = vpop.f32.mrb[0].mxu0
        %v3469 = vadd.f32 %v3276, %v3468
        %v3470 = vpop.f32.mrb[0].mxu0
        %v3471 = vadd.f32 %v3278, %v3470
        %v3472 = vpop.f32.mrb[0].mxu0
        %v3473 = vadd.f32 %v3280, %v3472
        %v3474 = vpop.f32.mrb[0].mxu0
        %v3475 = vadd.f32 %v3282, %v3474
        %3476 = vmatprep.mubr.bf16.mxu0 %v597
        %3477 = vmatmul.mubr.bf16.gmra.mrb[0].mxu0 %v596
        %v3478 = vpop.f32.mrb[0].mxu0
        %v3479 = vadd.f32 %v3286, %v3478
        %v3480 = vpop.f32.mrb[0].mxu0
        %v3481 = vadd.f32 %v3288, %v3480
        %v3482 = vpop.f32.mrb[0].mxu0
        %v3483 = vadd.f32 %v3290, %v3482
        %v3484 = vpop.f32.mrb[0].mxu0
        %v3485 = vadd.f32 %v3292, %v3484
        %3486 = vmatprep.mubr.bf16.mxu0 %v605
        %3487 = vmatmul.mubr.bf16.gmra.mrb[0].mxu0 %v604
        %v3488 = vpop.f32.mrb[0].mxu0
        %v3489 = vadd.f32 %v3296, %v3488
        %v3490 = vpop.f32.mrb[0].mxu0
        %v3491 = vadd.f32 %v3298, %v3490
        %v3492 = vpop.f32.mrb[0].mxu0
        %v3493 = vadd.f32 %v3300, %v3492
        %v3494 = vpop.f32.mrb[0].mxu0
        %v3495 = vadd.f32 %v3302, %v3494
        %3496 = vmatprep.mubr.bf16.mxu0 %v613
        %3497 = vmatmul.mubr.bf16.gmra.mrb[0].mxu0 %v612
        %v3498 = vpop.f32.mrb[0].mxu0
        %v3499 = vadd.f32 %v3306, %v3498
        %v3500 = vpop.f32.mrb[0].mxu0
        %v3501 = vadd.f32 %v3308, %v3500
        %v3502 = vpop.f32.mrb[0].mxu0
        %v3503 = vadd.f32 %v3310, %v3502
        %v3504 = vpop.f32.mrb[0].mxu0
        %v3505 = vadd.f32 %v3312, %v3504
        %3506 = vmatprep.mubr.bf16.mxu0 %v621
        %3507 = vmatmul.mubr.bf16.gmra.mrb[0].mxu0 %v620
        %v3508 = vpop.f32.mrb[0].mxu0
        %v3509 = vadd.f32 %v3316, %v3508
        %v3510 = vpop.f32.mrb[0].mxu0
        %v3511 = vadd.f32 %v3318, %v3510
        %v3512 = vpop.f32.mrb[0].mxu0
        %v3513 = vadd.f32 %v3320, %v3512
        %v3514 = vpop.f32.mrb[0].mxu0
        %v3515 = vadd.f32 %v3322, %v3514
        %3516 = vmatprep.mubr.bf16.mxu0 %v629
        %3517 = vmatmul.mubr.bf16.gmra.mrb[0].mxu0 %v628
        %v3518 = vpop.f32.mrb[0].mxu0
        %v3519 = vadd.f32 %v3326, %v3518
        %v3520 = vpop.f32.mrb[0].mxu0
        %v3521 = vadd.f32 %v3328, %v3520
        %v3522 = vpop.f32.mrb[0].mxu0
        %v3523 = vadd.f32 %v3330, %v3522
        %v3524 = vpop.f32.mrb[0].mxu0
        %v3525 = vadd.f32 %v3332, %v3524
        %3526 = vmatprep.mubr.bf16.mxu0 %v637
        %3527 = vmatmul.mubr.bf16.gmra.mrb[0].mxu0 %v636
        %v3528 = vpop.f32.mrb[0].mxu0
        %v3529 = vadd.f32 %v3336, %v3528
        %v3530 = vpop.f32.mrb[0].mxu0
        %v3531 = vadd.f32 %v3338, %v3530
        %v3532 = vpop.f32.mrb[0].mxu0
        %v3533 = vadd.f32 %v3340, %v3532
        %v3534 = vpop.f32.mrb[0].mxu0
        %v3535 = vadd.f32 %v3342, %v3534
        %3536 = vmatprep.mubr.bf16.mxu0 %v645
        %3537 = vmatmul.mubr.bf16.gmra.mrb[0].mxu0 %v644
        %v3538 = vpop.f32.mrb[0].mxu0
        %v3539 = vadd.f32 %v3346, %v3538
        %v3540 = vpop.f32.mrb[0].mxu0
        %v3541 = vadd.f32 %v3348, %v3540
        %v3542 = vpop.f32.mrb[0].mxu0
        %v3543 = vadd.f32 %v3350, %v3542
        %v3544 = vpop.f32.mrb[0].mxu0
        %v3545 = vadd.f32 %v3352, %v3544
        %3546 = vmatprep.mubr.bf16.mxu0 %v653
        %3547 = vmatmul.mubr.bf16.gmra.mrb[0].mxu0 %v652
        %v3548 = vpop.f32.mrb[0].mxu0
        %v3549 = vadd.f32 %v3356, %v3548
        %v3550 = vpop.f32.mrb[0].mxu0
        %v3551 = vadd.f32 %v3358, %v3550
        %v3552 = vpop.f32.mrb[0].mxu0
        %v3553 = vadd.f32 %v3360, %v3552
        %v3554 = vpop.f32.mrb[0].mxu0
        %v3555 = vadd.f32 %v3362, %v3554
        %3556 = vmatprep.mubr.bf16.mxu0 %v661
        %3557 = vmatmul.mubr.bf16.gmra.mrb[0].mxu0 %v660
        %v3558 = vpop.f32.mrb[0].mxu0
        %v3559 = vadd.f32 %v3366, %v3558
        %v3560 = vpop.f32.mrb[0].mxu0
        %v3561 = vadd.f32 %v3368, %v3560
        %v3562 = vpop.f32.mrb[0].mxu0
        %v3563 = vadd.f32 %v3370, %v3562
        %v3564 = vpop.f32.mrb[0].mxu0
        %v3565 = vadd.f32 %v3372, %v3564
        %3566 = vmatprep.mubr.bf16.mxu0 %v669
        %3567 = vmatmul.mubr.bf16.gmra.mrb[0].mxu0 %v668
        %v3568 = vpop.f32.mrb[0].mxu0
        %v3569 = vadd.f32 %v3376, %v3568
        %v3570 = vpop.f32.mrb[0].mxu0
        %v3571 = vadd.f32 %v3378, %v3570
        %v3572 = vpop.f32.mrb[0].mxu0
        %v3573 = vadd.f32 %v3380, %v3572
        %v3574 = vpop.f32.mrb[0].mxu0
        %v3575 = vadd.f32 %v3382, %v3574
        %3576 = vmatprep.mubr.bf16.mxu0 %v677
        %3577 = vmatmul.mubr.bf16.gmra.mrb[0].mxu0 %v676
        %v3578 = vpop.f32.mrb[0].mxu0
        %v3579 = vadd.f32 %v3386, %v3578
        %v3580 = vpop.f32.mrb[0].mxu0
        %v3581 = vadd.f32 %v3388, %v3580
        %v3582 = vpop.f32.mrb[0].mxu0
        %v3583 = vadd.f32 %v3390, %v3582
        %v3584 = vpop.f32.mrb[0].mxu0
        %v3585 = vadd.f32 %v3392, %v3584
        %3586 = vmatprep.mubr.bf16.mxu0 %v685
        %3587 = vmatmul.mubr.bf16.gmra.mrb[0].mxu0 %v684
        %v3588 = vpop.f32.mrb[0].mxu0
        %v3589 = vadd.f32 %v3396, %v3588
        %v3590 = vpop.f32.mrb[0].mxu0
        %v3591 = vadd.f32 %v3398, %v3590
        %v3592 = vpop.f32.mrb[0].mxu0
        %v3593 = vadd.f32 %v3400, %v3592
        %v3594 = vpop.f32.mrb[0].mxu0
        %v3595 = vadd.f32 %v3402, %v3594
        %3596 = vdwg.mxu0
        %3597 = vmatprep.subr.bf16.mxu0 %v1929
        %3598 = vmatpush1.bf16.msra.mxu0 %v1928
        %3599 = vmatprep.subr.bf16.mxu0 %v1933
        %3600 = vmatpush1.bf16.msra.mxu0 %v1932
        %3601 = vmatprep.subr.bf16.mxu0 %v1937
        %3602 = vmatpush1.bf16.msra.mxu0 %v1936
        %3603 = vmatprep.subr.bf16.mxu0 %v1941
        %3604 = vmatpush1.bf16.msra.mxu0 %v1940
        %3605 = vmatprep.subr.bf16.mxu0 %v1945
        %3606 = vmatpush1.bf16.msra.mxu0 %v1944
        %3607 = vmatprep.subr.bf16.mxu0 %v1949
        %3608 = vmatpush1.bf16.msra.mxu0 %v1948
        %3609 = vmatprep.subr.bf16.mxu0 %v1953
        %3610 = vmatpush1.bf16.msra.mxu0 %v1952
        %3611 = vmatprep.subr.bf16.mxu0 %v1957
        %3612 = vmatpush1.bf16.msra.mxu0 %v1956
        %3613 = vmatprep.subr.bf16.mxu0 %v1961
        %3614 = vmatpush1.bf16.msra.mxu0 %v1960
        %3615 = vmatprep.subr.bf16.mxu0 %v1965
        %3616 = vmatpush1.bf16.msra.mxu0 %v1964
        %3617 = vmatprep.subr.bf16.mxu0 %v1969
        %3618 = vmatpush1.bf16.msra.mxu0 %v1968
        %3619 = vmatprep.subr.bf16.mxu0 %v1973
        %3620 = vmatpush1.bf16.msra.mxu0 %v1972
        %3621 = vmatprep.subr.bf16.mxu0 %v1977
        %3622 = vmatpush1.bf16.msra.mxu0 %v1976
        %3623 = vmatprep.subr.bf16.mxu0 %v1981
        %3624 = vmatpush1.bf16.msra.mxu0 %v1980
        %3625 = vmatprep.subr.bf16.mxu0 %v1985
        %3626 = vmatpush1.bf16.msra.mxu0 %v1984
        %3627 = vmatprep.subr.bf16.mxu0 %v1989
        %3628 = vmatpush1.bf16.msra.mxu0 %v1988
        %3629 = vmatprep.mubr.bf16.mxu0 %v567
        %3630 = vmatmul.mubr.bf16.gmra.mrb[0].mxu0 %v566
        %v3631 = vpop.f32.mrb[0].mxu0
        %v3632 = vadd.f32 %v3439, %v3631
        %v3633 = vpop.f32.mrb[0].mxu0
        %v3634 = vadd.f32 %v3441, %v3633
        %v3635 = vpop.f32.mrb[0].mxu0
        %v3636 = vadd.f32 %v3443, %v3635
        %v3637 = vpop.f32.mrb[0].mxu0
        %v3638 = vadd.f32 %v3445, %v3637
        %3639 = vmatprep.mubr.bf16.mxu0 %v575
        %3640 = vmatmul.mubr.bf16.gmra.mrb[0].mxu0 %v574
        %v3641 = vpop.f32.mrb[0].mxu0
        %v3642 = vadd.f32 %v3449, %v3641
        %v3643 = vpop.f32.mrb[0].mxu0
        %v3644 = vadd.f32 %v3451, %v3643
        %v3645 = vpop.f32.mrb[0].mxu0
        %v3646 = vadd.f32 %v3453, %v3645
        %v3647 = vpop.f32.mrb[0].mxu0
        %v3648 = vadd.f32 %v3455, %v3647
        %3649 = vmatprep.mubr.bf16.mxu0 %v583
        %3650 = vmatmul.mubr.bf16.gmra.mrb[0].mxu0 %v582
        %v3651 = vpop.f32.mrb[0].mxu0
        %v3652 = vadd.f32 %v3459, %v3651
        %v3653 = vpop.f32.mrb[0].mxu0
        %v3654 = vadd.f32 %v3461, %v3653
        %v3655 = vpop.f32.mrb[0].mxu0
        %v3656 = vadd.f32 %v3463, %v3655
        %v3657 = vpop.f32.mrb[0].mxu0
        %v3658 = vadd.f32 %v3465, %v3657
        %3659 = vmatprep.mubr.bf16.mxu0 %v591
        %3660 = vmatmul.mubr.bf16.gmra.mrb[0].mxu0 %v590
        %v3661 = vpop.f32.mrb[0].mxu0
        %v3662 = vadd.f32 %v3469, %v3661
        %v3663 = vpop.f32.mrb[0].mxu0
        %v3664 = vadd.f32 %v3471, %v3663
        %v3665 = vpop.f32.mrb[0].mxu0
        %v3666 = vadd.f32 %v3473, %v3665
        %v3667 = vpop.f32.mrb[0].mxu0
        %v3668 = vadd.f32 %v3475, %v3667
        %3669 = vmatprep.mubr.bf16.mxu0 %v599
        %3670 = vmatmul.mubr.bf16.gmra.mrb[0].mxu0 %v598
        %v3671 = vpop.f32.mrb[0].mxu0
        %v3672 = vadd.f32 %v3479, %v3671
        %v3673 = vpop.f32.mrb[0].mxu0
        %v3674 = vadd.f32 %v3481, %v3673
        %v3675 = vpop.f32.mrb[0].mxu0
        %v3676 = vadd.f32 %v3483, %v3675
        %v3677 = vpop.f32.mrb[0].mxu0
        %v3678 = vadd.f32 %v3485, %v3677
        %3679 = vmatprep.mubr.bf16.mxu0 %v607
        %3680 = vmatmul.mubr.bf16.gmra.mrb[0].mxu0 %v606
        %v3681 = vpop.f32.mrb[0].mxu0
        %v3682 = vadd.f32 %v3489, %v3681
        %v3683 = vpop.f32.mrb[0].mxu0
        %v3684 = vadd.f32 %v3491, %v3683
        %v3685 = vpop.f32.mrb[0].mxu0
        %v3686 = vadd.f32 %v3493, %v3685
        %v3687 = vpop.f32.mrb[0].mxu0
        %v3688 = vadd.f32 %v3495, %v3687
        %3689 = vmatprep.mubr.bf16.mxu0 %v615
        %3690 = vmatmul.mubr.bf16.gmra.mrb[0].mxu0 %v614
        %v3691 = vpop.f32.mrb[0].mxu0
        %v3692 = vadd.f32 %v3499, %v3691
        %v3693 = vpop.f32.mrb[0].mxu0
        %v3694 = vadd.f32 %v3501, %v3693
        %v3695 = vpop.f32.mrb[0].mxu0
        %v3696 = vadd.f32 %v3503, %v3695
        %v3697 = vpop.f32.mrb[0].mxu0
        %v3698 = vadd.f32 %v3505, %v3697
        %3699 = vmatprep.mubr.bf16.mxu0 %v623
        %3700 = vmatmul.mubr.bf16.gmra.mrb[0].mxu0 %v622
        %v3701 = vpop.f32.mrb[0].mxu0
        %v3702 = vadd.f32 %v3509, %v3701
        %v3703 = vpop.f32.mrb[0].mxu0
        %v3704 = vadd.f32 %v3511, %v3703
        %v3705 = vpop.f32.mrb[0].mxu0
        %v3706 = vadd.f32 %v3513, %v3705
        %v3707 = vpop.f32.mrb[0].mxu0
        %v3708 = vadd.f32 %v3515, %v3707
        %3709 = vmatprep.mubr.bf16.mxu0 %v631
        %3710 = vmatmul.mubr.bf16.gmra.mrb[0].mxu0 %v630
        %v3711 = vpop.f32.mrb[0].mxu0
        %v3712 = vadd.f32 %v3519, %v3711
        %v3713 = vpop.f32.mrb[0].mxu0
        %v3714 = vadd.f32 %v3521, %v3713
        %v3715 = vpop.f32.mrb[0].mxu0
        %v3716 = vadd.f32 %v3523, %v3715
        %v3717 = vpop.f32.mrb[0].mxu0
        %v3718 = vadd.f32 %v3525, %v3717
        %3719 = vmatprep.mubr.bf16.mxu0 %v639
        %3720 = vmatmul.mubr.bf16.gmra.mrb[0].mxu0 %v638
        %v3721 = vpop.f32.mrb[0].mxu0
        %v3722 = vadd.f32 %v3529, %v3721
        %v3723 = vpop.f32.mrb[0].mxu0
        %v3724 = vadd.f32 %v3531, %v3723
        %v3725 = vpop.f32.mrb[0].mxu0
        %v3726 = vadd.f32 %v3533, %v3725
        %v3727 = vpop.f32.mrb[0].mxu0
        %v3728 = vadd.f32 %v3535, %v3727
        %3729 = vmatprep.mubr.bf16.mxu0 %v647
        %3730 = vmatmul.mubr.bf16.gmra.mrb[0].mxu0 %v646
        %v3731 = vpop.f32.mrb[0].mxu0
        %v3732 = vadd.f32 %v3539, %v3731
        %v3733 = vpop.f32.mrb[0].mxu0
        %v3734 = vadd.f32 %v3541, %v3733
        %v3735 = vpop.f32.mrb[0].mxu0
        %v3736 = vadd.f32 %v3543, %v3735
        %v3737 = vpop.f32.mrb[0].mxu0
        %v3738 = vadd.f32 %v3545, %v3737
        %3739 = vmatprep.mubr.bf16.mxu0 %v655
        %3740 = vmatmul.mubr.bf16.gmra.mrb[0].mxu0 %v654
        %v3741 = vpop.f32.mrb[0].mxu0
        %v3742 = vadd.f32 %v3549, %v3741
        %v3743 = vpop.f32.mrb[0].mxu0
        %v3744 = vadd.f32 %v3551, %v3743
        %v3745 = vpop.f32.mrb[0].mxu0
        %v3746 = vadd.f32 %v3553, %v3745
        %v3747 = vpop.f32.mrb[0].mxu0
        %v3748 = vadd.f32 %v3555, %v3747
        %3749 = vmatprep.mubr.bf16.mxu0 %v663
        %3750 = vmatmul.mubr.bf16.gmra.mrb[0].mxu0 %v662
        %v3751 = vpop.f32.mrb[0].mxu0
        %v3752 = vadd.f32 %v3559, %v3751
        %v3753 = vpop.f32.mrb[0].mxu0
        %v3754 = vadd.f32 %v3561, %v3753
        %v3755 = vpop.f32.mrb[0].mxu0
        %v3756 = vadd.f32 %v3563, %v3755
        %v3757 = vpop.f32.mrb[0].mxu0
        %v3758 = vadd.f32 %v3565, %v3757
        %3759 = vmatprep.mubr.bf16.mxu0 %v671
        %3760 = vmatmul.mubr.bf16.gmra.mrb[0].mxu0 %v670
        %v3761 = vpop.f32.mrb[0].mxu0
        %v3762 = vadd.f32 %v3569, %v3761
        %v3763 = vpop.f32.mrb[0].mxu0
        %v3764 = vadd.f32 %v3571, %v3763
        %v3765 = vpop.f32.mrb[0].mxu0
        %v3766 = vadd.f32 %v3573, %v3765
        %v3767 = vpop.f32.mrb[0].mxu0
        %v3768 = vadd.f32 %v3575, %v3767
        %3769 = vmatprep.mubr.bf16.mxu0 %v679
        %3770 = vmatmul.mubr.bf16.gmra.mrb[0].mxu0 %v678
        %v3771 = vpop.f32.mrb[0].mxu0
        %v3772 = vadd.f32 %v3579, %v3771
        %v3773 = vpop.f32.mrb[0].mxu0
        %v3774 = vadd.f32 %v3581, %v3773
        %v3775 = vpop.f32.mrb[0].mxu0
        %v3776 = vadd.f32 %v3583, %v3775
        %v3777 = vpop.f32.mrb[0].mxu0
        %v3778 = vadd.f32 %v3585, %v3777
        %3779 = vmatprep.mubr.bf16.mxu0 %v687
        %3780 = vmatmul.mubr.bf16.gmra.mrb[0].mxu0 %v686
        %v3781 = vpop.f32.mrb[0].mxu0
        %v3782 = vadd.f32 %v3589, %v3781
        %v3783 = vpop.f32.mrb[0].mxu0
        %v3784 = vadd.f32 %v3591, %v3783
        %v3785 = vpop.f32.mrb[0].mxu0
        %v3786 = vadd.f32 %v3593, %v3785
        %v3787 = vpop.f32.mrb[0].mxu0
        %v3788 = vadd.f32 %v3595, %v3787
        %3789 = vdwg.mxu0
        %v3790 = vtanh.pop %v2860
        %v3791 = vtanh.pop %v2862
        %v3792 = vtanh.pop %v2864
        %v3793 = vtanh.pop %v2866
        %v3794 = vtanh.pop %v2870
        %v3795 = vtanh.pop %v2872
        %v3796 = vtanh.pop %v2874
        %v3797 = vtanh.pop %v2876
        %v3798 = vtanh.pop %v2880
        %v3799 = vtanh.pop %v2882
        %v3800 = vtanh.pop %v2884
        %v3801 = vtanh.pop %v2886
        %v3802 = vtanh.pop %v2890
        %v3803 = vtanh.pop %v2892
        %v3804 = vtanh.pop %v2894
        %v3805 = vtanh.pop %v2896
        %v3806 = vtanh.pop %v2900
        %v3807 = vtanh.pop %v2902
        %v3808 = vtanh.pop %v2904
        %v3809 = vtanh.pop %v2906
        %v3810 = vtanh.pop %v2910
        %v3811 = vtanh.pop %v2912
        %v3812 = vtanh.pop %v2914
        %v3813 = vtanh.pop %v2916
        %v3814 = vtanh.pop %v2920
        %v3815 = vtanh.pop %v2922
        %v3816 = vtanh.pop %v2924
        %v3817 = vtanh.pop %v2926
        %v3818 = vtanh.pop %v2930
        %v3819 = vtanh.pop %v2932
        %v3820 = vtanh.pop %v2934
        %v3821 = vtanh.pop %v2936
        %v3822 = vtanh.pop %v2940
        %v3823 = vtanh.pop %v2942
        %v3824 = vtanh.pop %v2944
        %v3825 = vtanh.pop %v2946
        %v3826 = vtanh.pop %v2950
        %v3827 = vtanh.pop %v2952
        %v3828 = vtanh.pop %v2954
        %v3829 = vtanh.pop %v2956
        %v3830 = vtanh.pop %v2960
        %v3831 = vtanh.pop %v2962
        %v3832 = vtanh.pop %v2964
        %v3833 = vtanh.pop %v2966
        %v3834 = vtanh.pop %v2970
        %v3835 = vtanh.pop %v2972
        %v3836 = vtanh.pop %v2974
        %v3837 = vtanh.pop %v2976
        %v3838 = vtanh.pop %v2980
        %v3839 = vtanh.pop %v2982
        %v3840 = vtanh.pop %v2984
        %v3841 = vtanh.pop %v2986
        %v3842 = vtanh.pop %v2990
        %v3843 = vtanh.pop %v2992
        %v3844 = vtanh.pop %v2994
        %v3845 = vtanh.pop %v2996
        %v3846 = vtanh.pop %v3000
        %v3847 = vtanh.pop %v3002
        %v3848 = vtanh.pop %v3004
        %v3849 = vtanh.pop %v3006
        %v3850 = vtanh.pop %v3010
        %v3851 = vtanh.pop %v3012
        %v3852 = vtanh.pop %v3014
        %v3853 = vtanh.pop %v3016
        %v3854 = vxor.u32 %v3632, 2147483648
        %v3855 = vxor.u32 %v3634, 2147483648
        %v3856 = vxor.u32 %v3636, 2147483648
        %v3857 = vxor.u32 %v3638, 2147483648
        %v3858 = vxor.u32 %v3642, 2147483648
        %v3859 = vxor.u32 %v3644, 2147483648
        %v3860 = vxor.u32 %v3646, 2147483648
        %v3861 = vxor.u32 %v3648, 2147483648
        %v3862 = vxor.u32 %v3652, 2147483648
        %v3863 = vxor.u32 %v3654, 2147483648
        %v3864 = vxor.u32 %v3656, 2147483648
        %v3865 = vxor.u32 %v3658, 2147483648
        %v3866 = vxor.u32 %v3662, 2147483648
        %v3867 = vxor.u32 %v3664, 2147483648
        %v3868 = vxor.u32 %v3666, 2147483648
        %v3869 = vxor.u32 %v3668, 2147483648
        %v3870 = vxor.u32 %v3672, 2147483648
        %v3871 = vxor.u32 %v3674, 2147483648
        %v3872 = vxor.u32 %v3676, 2147483648
        %v3873 = vxor.u32 %v3678, 2147483648
        %v3874 = vxor.u32 %v3682, 2147483648
        %v3875 = vxor.u32 %v3684, 2147483648
        %v3876 = vxor.u32 %v3686, 2147483648
        %v3877 = vxor.u32 %v3688, 2147483648
        %v3878 = vxor.u32 %v3692, 2147483648
        %v3879 = vxor.u32 %v3694, 2147483648
        %v3880 = vxor.u32 %v3696, 2147483648
        %v3881 = vxor.u32 %v3698, 2147483648
        %v3882 = vxor.u32 %v3702, 2147483648
        %v3883 = vxor.u32 %v3704, 2147483648
        %v3884 = vxor.u32 %v3706, 2147483648
        %v3885 = vxor.u32 %v3708, 2147483648
        %v3886 = vxor.u32 %v3712, 2147483648
        %v3887 = vxor.u32 %v3714, 2147483648
        %v3888 = vxor.u32 %v3716, 2147483648
        %v3889 = vxor.u32 %v3718, 2147483648
        %v3890 = vxor.u32 %v3722, 2147483648
        %v3891 = vxor.u32 %v3724, 2147483648
        %v3892 = vxor.u32 %v3726, 2147483648
        %v3893 = vxor.u32 %v3728, 2147483648
        %v3894 = vxor.u32 %v3732, 2147483648
        %v3895 = vxor.u32 %v3734, 2147483648
        %v3896 = vxor.u32 %v3736, 2147483648
        %v3897 = vxor.u32 %v3738, 2147483648
        %v3898 = vxor.u32 %v3742, 2147483648
        %v3899 = vxor.u32 %v3744, 2147483648
        %v3900 = vxor.u32 %v3746, 2147483648
        %v3901 = vxor.u32 %v3748, 2147483648
        %v3902 = vxor.u32 %v3752, 2147483648
        %v3903 = vxor.u32 %v3754, 2147483648
        %v3904 = vxor.u32 %v3756, 2147483648
        %v3905 = vxor.u32 %v3758, 2147483648
        %v3906 = vxor.u32 %v3762, 2147483648
        %v3907 = vxor.u32 %v3764, 2147483648
        %v3908 = vxor.u32 %v3766, 2147483648
        %v3909 = vxor.u32 %v3768, 2147483648
        %v3910 = vxor.u32 %v3772, 2147483648
        %v3911 = vxor.u32 %v3774, 2147483648
        %v3912 = vxor.u32 %v3776, 2147483648
        %v3913 = vxor.u32 %v3778, 2147483648
        %v3914 = vxor.u32 %v3782, 2147483648
        %v3915 = vxor.u32 %v3784, 2147483648
        %v3916 = vxor.u32 %v3786, 2147483648
        %v3917 = vxor.u32 %v3788, 2147483648
        %v3918 = vmul.f32 %v3854, 1.442695
        %v3919 = vpow.pop %v3918
        %v3920 = vmul.f32 %v3855, 1.442695
        %v3921 = vpow.pop %v3920
        %v3922 = vmul.f32 %v3856, 1.442695
        %v3923 = vpow.pop %v3922
        %v3924 = vmul.f32 %v3857, 1.442695
        %v3925 = vpow.pop %v3924
        %v3926 = vmul.f32 %v3858, 1.442695
        %v3927 = vpow.pop %v3926
        %v3928 = vmul.f32 %v3859, 1.442695
        %v3929 = vpow.pop %v3928
        %v3930 = vmul.f32 %v3860, 1.442695
        %v3931 = vpow.pop %v3930
        %v3932 = vmul.f32 %v3861, 1.442695
        %v3933 = vpow.pop %v3932
        %v3934 = vmul.f32 %v3862, 1.442695
        %v3935 = vpow.pop %v3934
        %v3936 = vmul.f32 %v3863, 1.442695
        %v3937 = vpow.pop %v3936
        %v3938 = vmul.f32 %v3864, 1.442695
        %v3939 = vpow.pop %v3938
        %v3940 = vmul.f32 %v3865, 1.442695
        %v3941 = vpow.pop %v3940
        %v3942 = vmul.f32 %v3866, 1.442695
        %v3943 = vpow.pop %v3942
        %v3944 = vmul.f32 %v3867, 1.442695
        %v3945 = vpow.pop %v3944
        %v3946 = vmul.f32 %v3868, 1.442695
        %v3947 = vpow.pop %v3946
        %v3948 = vmul.f32 %v3869, 1.442695
        %v3949 = vpow.pop %v3948
        %v3950 = vmul.f32 %v3870, 1.442695
        %v3951 = vpow.pop %v3950
        %v3952 = vmul.f32 %v3871, 1.442695
        %v3953 = vpow.pop %v3952
        %v3954 = vmul.f32 %v3872, 1.442695
        %v3955 = vpow.pop %v3954
        %v3956 = vmul.f32 %v3873, 1.442695
        %v3957 = vpow.pop %v3956
        %v3958 = vmul.f32 %v3874, 1.442695
        %v3959 = vpow.pop %v3958
        %v3960 = vmul.f32 %v3875, 1.442695
        %v3961 = vpow.pop %v3960
        %v3962 = vmul.f32 %v3876, 1.442695
        %v3963 = vpow.pop %v3962
        %v3964 = vmul.f32 %v3877, 1.442695
        %v3965 = vpow.pop %v3964
        %v3966 = vmul.f32 %v3878, 1.442695
        %v3967 = vpow.pop %v3966
        %v3968 = vmul.f32 %v3879, 1.442695
        %v3969 = vpow.pop %v3968
        %v3970 = vmul.f32 %v3880, 1.442695
        %v3971 = vpow.pop %v3970
        %v3972 = vmul.f32 %v3881, 1.442695
        %v3973 = vpow.pop %v3972
        %v3974 = vmul.f32 %v3882, 1.442695
        %v3975 = vpow.pop %v3974
        %v3976 = vmul.f32 %v3883, 1.442695
        %v3977 = vpow.pop %v3976
        %v3978 = vmul.f32 %v3884, 1.442695
        %v3979 = vpow.pop %v3978
        %v3980 = vmul.f32 %v3885, 1.442695
        %v3981 = vpow.pop %v3980
        %v3982 = vmul.f32 %v3886, 1.442695
        %v3983 = vpow.pop %v3982
        %v3984 = vmul.f32 %v3887, 1.442695
        %v3985 = vpow.pop %v3984
        %v3986 = vmul.f32 %v3888, 1.442695
        %v3987 = vpow.pop %v3986
        %v3988 = vmul.f32 %v3889, 1.442695
        %v3989 = vpow.pop %v3988
        %v3990 = vmul.f32 %v3890, 1.442695
        %v3991 = vpow.pop %v3990
        %v3992 = vmul.f32 %v3891, 1.442695
        %v3993 = vpow.pop %v3992
        %v3994 = vmul.f32 %v3892, 1.442695
        %v3995 = vpow.pop %v3994
        %v3996 = vmul.f32 %v3893, 1.442695
        %v3997 = vpow.pop %v3996
        %v3998 = vmul.f32 %v3894, 1.442695
        %v3999 = vpow.pop %v3998
        %v4000 = vmul.f32 %v3895, 1.442695
        %v4001 = vpow.pop %v4000
        %v4002 = vmul.f32 %v3896, 1.442695
        %v4003 = vpow.pop %v4002
        %v4004 = vmul.f32 %v3897, 1.442695
        %v4005 = vpow.pop %v4004
        %v4006 = vmul.f32 %v3898, 1.442695
        %v4007 = vpow.pop %v4006
        %v4008 = vmul.f32 %v3899, 1.442695
        %v4009 = vpow.pop %v4008
        %v4010 = vmul.f32 %v3900, 1.442695
        %v4011 = vpow.pop %v4010
        %v4012 = vmul.f32 %v3901, 1.442695
        %v4013 = vpow.pop %v4012
        %v4014 = vmul.f32 %v3902, 1.442695
        %v4015 = vpow.pop %v4014
        %v4016 = vmul.f32 %v3903, 1.442695
        %v4017 = vpow.pop %v4016
        %v4018 = vmul.f32 %v3904, 1.442695
        %v4019 = vpow.pop %v4018
        %v4020 = vmul.f32 %v3905, 1.442695
        %v4021 = vpow.pop %v4020
        %v4022 = vmul.f32 %v3906, 1.442695
        %v4023 = vpow.pop %v4022
        %v4024 = vmul.f32 %v3907, 1.442695
        %v4025 = vpow.pop %v4024
        %v4026 = vmul.f32 %v3908, 1.442695
        %v4027 = vpow.pop %v4026
        %v4028 = vmul.f32 %v3909, 1.442695
        %v4029 = vpow.pop %v4028
        %v4030 = vmul.f32 %v3910, 1.442695
        %v4031 = vpow.pop %v4030
        %v4032 = vmul.f32 %v3911, 1.442695
        %v4033 = vpow.pop %v4032
        %v4034 = vmul.f32 %v3912, 1.442695
        %v4035 = vpow.pop %v4034
        %v4036 = vmul.f32 %v3913, 1.442695
        %v4037 = vpow.pop %v4036
        %v4038 = vmul.f32 %v3914, 1.442695
        %v4039 = vpow.pop %v4038
        %v4040 = vmul.f32 %v3915, 1.442695
        %v4041 = vpow.pop %v4040
        %v4042 = vmul.f32 %v3916, 1.442695
        %v4043 = vpow.pop %v4042
        %v4044 = vmul.f32 %v3917, 1.442695
        %v4045 = vpow.pop %v4044
        %v4046 = vadd.f32 %v3919, 1.0
        %v4047 = vadd.f32 %v3921, 1.0
        %v4048 = vadd.f32 %v3923, 1.0
        %v4049 = vadd.f32 %v3925, 1.0
        %v4050 = vadd.f32 %v3927, 1.0
        %v4051 = vadd.f32 %v3929, 1.0
        %v4052 = vadd.f32 %v3931, 1.0
        %v4053 = vadd.f32 %v3933, 1.0
        %v4054 = vadd.f32 %v3935, 1.0
        %v4055 = vadd.f32 %v3937, 1.0
        %v4056 = vadd.f32 %v3939, 1.0
        %v4057 = vadd.f32 %v3941, 1.0
        %v4058 = vadd.f32 %v3943, 1.0
        %v4059 = vadd.f32 %v3945, 1.0
        %v4060 = vadd.f32 %v3947, 1.0
        %v4061 = vadd.f32 %v3949, 1.0
        %v4062 = vadd.f32 %v3951, 1.0
        %v4063 = vadd.f32 %v3953, 1.0
        %v4064 = vadd.f32 %v3955, 1.0
        %v4065 = vadd.f32 %v3957, 1.0
        %v4066 = vadd.f32 %v3959, 1.0
        %v4067 = vadd.f32 %v3961, 1.0
        %v4068 = vadd.f32 %v3963, 1.0
        %v4069 = vadd.f32 %v3965, 1.0
        %v4070 = vadd.f32 %v3967, 1.0
        %v4071 = vadd.f32 %v3969, 1.0
        %v4072 = vadd.f32 %v3971, 1.0
        %v4073 = vadd.f32 %v3973, 1.0
        %v4074 = vadd.f32 %v3975, 1.0
        %v4075 = vadd.f32 %v3977, 1.0
        %v4076 = vadd.f32 %v3979, 1.0
        %v4077 = vadd.f32 %v3981, 1.0
        %v4078 = vadd.f32 %v3983, 1.0
        %v4079 = vadd.f32 %v3985, 1.0
        %v4080 = vadd.f32 %v3987, 1.0
        %v4081 = vadd.f32 %v3989, 1.0
        %v4082 = vadd.f32 %v3991, 1.0
        %v4083 = vadd.f32 %v3993, 1.0
        %v4084 = vadd.f32 %v3995, 1.0
        %v4085 = vadd.f32 %v3997, 1.0
        %v4086 = vadd.f32 %v3999, 1.0
        %v4087 = vadd.f32 %v4001, 1.0
        %v4088 = vadd.f32 %v4003, 1.0
        %v4089 = vadd.f32 %v4005, 1.0
        %v4090 = vadd.f32 %v4007, 1.0
        %v4091 = vadd.f32 %v4009, 1.0
        %v4092 = vadd.f32 %v4011, 1.0
        %v4093 = vadd.f32 %v4013, 1.0
        %v4094 = vadd.f32 %v4015, 1.0
        %v4095 = vadd.f32 %v4017, 1.0
        %v4096 = vadd.f32 %v4019, 1.0
        %v4097 = vadd.f32 %v4021, 1.0
        %v4098 = vadd.f32 %v4023, 1.0
        %v4099 = vadd.f32 %v4025, 1.0
        %v4100 = vadd.f32 %v4027, 1.0
        %v4101 = vadd.f32 %v4029, 1.0
        %v4102 = vadd.f32 %v4031, 1.0
        %v4103 = vadd.f32 %v4033, 1.0
        %v4104 = vadd.f32 %v4035, 1.0
        %v4105 = vadd.f32 %v4037, 1.0
        %v4106 = vadd.f32 %v4039, 1.0
        %v4107 = vadd.f32 %v4041, 1.0
        %v4108 = vadd.f32 %v4043, 1.0
        %v4109 = vadd.f32 %v4045, 1.0
        %v4110 = vrcp.pop %v4046
        %v4111 = vmul.f32 1.0, %v4110
        %v4112 = vrcp.pop %v4047
        %v4113 = vmul.f32 1.0, %v4112
        %v4114 = vrcp.pop %v4048
        %v4115 = vmul.f32 1.0, %v4114
        %v4116 = vrcp.pop %v4049
        %v4117 = vmul.f32 1.0, %v4116
        %v4118 = vrcp.pop %v4050
        %v4119 = vmul.f32 1.0, %v4118
        %v4120 = vrcp.pop %v4051
        %v4121 = vmul.f32 1.0, %v4120
        %v4122 = vrcp.pop %v4052
        %v4123 = vmul.f32 1.0, %v4122
        %v4124 = vrcp.pop %v4053
        %v4125 = vmul.f32 1.0, %v4124
        %v4126 = vrcp.pop %v4054
        %v4127 = vmul.f32 1.0, %v4126
        %v4128 = vrcp.pop %v4055
        %v4129 = vmul.f32 1.0, %v4128
        %v4130 = vrcp.pop %v4056
        %v4131 = vmul.f32 1.0, %v4130
        %v4132 = vrcp.pop %v4057
        %v4133 = vmul.f32 1.0, %v4132
        %v4134 = vrcp.pop %v4058
        %v4135 = vmul.f32 1.0, %v4134
        %v4136 = vrcp.pop %v4059
        %v4137 = vmul.f32 1.0, %v4136
        %v4138 = vrcp.pop %v4060
        %v4139 = vmul.f32 1.0, %v4138
        %v4140 = vrcp.pop %v4061
        %v4141 = vmul.f32 1.0, %v4140
        %v4142 = vrcp.pop %v4062
        %v4143 = vmul.f32 1.0, %v4142
        %v4144 = vrcp.pop %v4063
        %v4145 = vmul.f32 1.0, %v4144
        %v4146 = vrcp.pop %v4064
        %v4147 = vmul.f32 1.0, %v4146
        %v4148 = vrcp.pop %v4065
        %v4149 = vmul.f32 1.0, %v4148
        %v4150 = vrcp.pop %v4066
        %v4151 = vmul.f32 1.0, %v4150
        %v4152 = vrcp.pop %v4067
        %v4153 = vmul.f32 1.0, %v4152
        %v4154 = vrcp.pop %v4068
        %v4155 = vmul.f32 1.0, %v4154
        %v4156 = vrcp.pop %v4069
        %v4157 = vmul.f32 1.0, %v4156
        %v4158 = vrcp.pop %v4070
        %v4159 = vmul.f32 1.0, %v4158
        %v4160 = vrcp.pop %v4071
        %v4161 = vmul.f32 1.0, %v4160
        %v4162 = vrcp.pop %v4072
        %v4163 = vmul.f32 1.0, %v4162
        %v4164 = vrcp.pop %v4073
        %v4165 = vmul.f32 1.0, %v4164
        %v4166 = vrcp.pop %v4074
        %v4167 = vmul.f32 1.0, %v4166
        %v4168 = vrcp.pop %v4075
        %v4169 = vmul.f32 1.0, %v4168
        %v4170 = vrcp.pop %v4076
        %v4171 = vmul.f32 1.0, %v4170
        %v4172 = vrcp.pop %v4077
        %v4173 = vmul.f32 1.0, %v4172
        %v4174 = vrcp.pop %v4078
        %v4175 = vmul.f32 1.0, %v4174
        %v4176 = vrcp.pop %v4079
        %v4177 = vmul.f32 1.0, %v4176
        %v4178 = vrcp.pop %v4080
        %v4179 = vmul.f32 1.0, %v4178
        %v4180 = vrcp.pop %v4081
        %v4181 = vmul.f32 1.0, %v4180
        %v4182 = vrcp.pop %v4082
        %v4183 = vmul.f32 1.0, %v4182
        %v4184 = vrcp.pop %v4083
        %v4185 = vmul.f32 1.0, %v4184
        %v4186 = vrcp.pop %v4084
        %v4187 = vmul.f32 1.0, %v4186
        %v4188 = vrcp.pop %v4085
        %v4189 = vmul.f32 1.0, %v4188
        %v4190 = vrcp.pop %v4086
        %v4191 = vmul.f32 1.0, %v4190
        %v4192 = vrcp.pop %v4087
        %v4193 = vmul.f32 1.0, %v4192
        %v4194 = vrcp.pop %v4088
        %v4195 = vmul.f32 1.0, %v4194
        %v4196 = vrcp.pop %v4089
        %v4197 = vmul.f32 1.0, %v4196
        %v4198 = vrcp.pop %v4090
        %v4199 = vmul.f32 1.0, %v4198
        %v4200 = vrcp.pop %v4091
        %v4201 = vmul.f32 1.0, %v4200
        %v4202 = vrcp.pop %v4092
        %v4203 = vmul.f32 1.0, %v4202
        %v4204 = vrcp.pop %v4093
        %v4205 = vmul.f32 1.0, %v4204
        %v4206 = vrcp.pop %v4094
        %v4207 = vmul.f32 1.0, %v4206
        %v4208 = vrcp.pop %v4095
        %v4209 = vmul.f32 1.0, %v4208
        %v4210 = vrcp.pop %v4096
        %v4211 = vmul.f32 1.0, %v4210
        %v4212 = vrcp.pop %v4097
        %v4213 = vmul.f32 1.0, %v4212
        %v4214 = vrcp.pop %v4098
        %v4215 = vmul.f32 1.0, %v4214
        %v4216 = vrcp.pop %v4099
        %v4217 = vmul.f32 1.0, %v4216
        %v4218 = vrcp.pop %v4100
        %v4219 = vmul.f32 1.0, %v4218
        %v4220 = vrcp.pop %v4101
        %v4221 = vmul.f32 1.0, %v4220
        %v4222 = vrcp.pop %v4102
        %v4223 = vmul.f32 1.0, %v4222
        %v4224 = vrcp.pop %v4103
        %v4225 = vmul.f32 1.0, %v4224
        %v4226 = vrcp.pop %v4104
        %v4227 = vmul.f32 1.0, %v4226
        %v4228 = vrcp.pop %v4105
        %v4229 = vmul.f32 1.0, %v4228
        %v4230 = vrcp.pop %v4106
        %v4231 = vmul.f32 1.0, %v4230
        %v4232 = vrcp.pop %v4107
        %v4233 = vmul.f32 1.0, %v4232
        %v4234 = vrcp.pop %v4108
        %v4235 = vmul.f32 1.0, %v4234
        %v4236 = vrcp.pop %v4109
        %v4237 = vmul.f32 1.0, %v4236
        %v4238 = vmul.f32 %v3790, %v4111
        %v4239 = vmul.f32 %v3791, %v4113
        %v4240 = vmul.f32 %v3792, %v4115
        %v4241 = vmul.f32 %v3793, %v4117
        %v4242 = vmul.f32 %v3794, %v4119
        %v4243 = vmul.f32 %v3795, %v4121
        %v4244 = vmul.f32 %v3796, %v4123
        %v4245 = vmul.f32 %v3797, %v4125
        %v4246 = vmul.f32 %v3798, %v4127
        %v4247 = vmul.f32 %v3799, %v4129
        %v4248 = vmul.f32 %v3800, %v4131
        %v4249 = vmul.f32 %v3801, %v4133
        %v4250 = vmul.f32 %v3802, %v4135
        %v4251 = vmul.f32 %v3803, %v4137
        %v4252 = vmul.f32 %v3804, %v4139
        %v4253 = vmul.f32 %v3805, %v4141
        %v4254 = vmul.f32 %v3806, %v4143
        %v4255 = vmul.f32 %v3807, %v4145
        %v4256 = vmul.f32 %v3808, %v4147
        %v4257 = vmul.f32 %v3809, %v4149
        %v4258 = vmul.f32 %v3810, %v4151
        %v4259 = vmul.f32 %v3811, %v4153
        %v4260 = vmul.f32 %v3812, %v4155
        %v4261 = vmul.f32 %v3813, %v4157
        %v4262 = vmul.f32 %v3814, %v4159
        %v4263 = vmul.f32 %v3815, %v4161
        %v4264 = vmul.f32 %v3816, %v4163
        %v4265 = vmul.f32 %v3817, %v4165
        %v4266 = vmul.f32 %v3818, %v4167
        %v4267 = vmul.f32 %v3819, %v4169
        %v4268 = vmul.f32 %v3820, %v4171
        %v4269 = vmul.f32 %v3821, %v4173
        %v4270 = vmul.f32 %v3822, %v4175
        %v4271 = vmul.f32 %v3823, %v4177
        %v4272 = vmul.f32 %v3824, %v4179
        %v4273 = vmul.f32 %v3825, %v4181
        %v4274 = vmul.f32 %v3826, %v4183
        %v4275 = vmul.f32 %v3827, %v4185
        %v4276 = vmul.f32 %v3828, %v4187
        %v4277 = vmul.f32 %v3829, %v4189
        %v4278 = vmul.f32 %v3830, %v4191
        %v4279 = vmul.f32 %v3831, %v4193
        %v4280 = vmul.f32 %v3832, %v4195
        %v4281 = vmul.f32 %v3833, %v4197
        %v4282 = vmul.f32 %v3834, %v4199
        %v4283 = vmul.f32 %v3835, %v4201
        %v4284 = vmul.f32 %v3836, %v4203
        %v4285 = vmul.f32 %v3837, %v4205
        %v4286 = vmul.f32 %v3838, %v4207
        %v4287 = vmul.f32 %v3839, %v4209
        %v4288 = vmul.f32 %v3840, %v4211
        %v4289 = vmul.f32 %v3841, %v4213
        %v4290 = vmul.f32 %v3842, %v4215
        %v4291 = vmul.f32 %v3843, %v4217
        %v4292 = vmul.f32 %v3844, %v4219
        %v4293 = vmul.f32 %v3845, %v4221
        %v4294 = vmul.f32 %v3846, %v4223
        %v4295 = vmul.f32 %v3847, %v4225
        %v4296 = vmul.f32 %v3848, %v4227
        %v4297 = vmul.f32 %v3849, %v4229
        %v4298 = vmul.f32 %v3850, %v4231
        %v4299 = vmul.f32 %v3851, %v4233
        %v4300 = vmul.f32 %v3852, %v4235
        %v4301 = vmul.f32 %v3853, %v4237
        %v4302 = vld [vmem:[#allocation9] sm:$0x3]
        %v4303 = vpack.c.bf16 %v4240, %v4238
        %v4304 = vpack.c.bf16 %v4241, %v4239
        %v4305 = vpack.c.bf16 %v4244, %v4242
        %v4306 = vpack.c.bf16 %v4245, %v4243
        %v4307 = vpack.c.bf16 %v4248, %v4246
        %v4308 = vpack.c.bf16 %v4249, %v4247
        %v4309 = vpack.c.bf16 %v4252, %v4250
        %v4310 = vpack.c.bf16 %v4253, %v4251
        %v4311 = vpack.c.bf16 %v4256, %v4254
        %v4312 = vpack.c.bf16 %v4257, %v4255
        %v4313 = vpack.c.bf16 %v4260, %v4258
        %v4314 = vpack.c.bf16 %v4261, %v4259
        %v4315 = vpack.c.bf16 %v4264, %v4262
        %v4316 = vpack.c.bf16 %v4265, %v4263
        %v4317 = vpack.c.bf16 %v4268, %v4266
        %v4318 = vpack.c.bf16 %v4269, %v4267
        %v4319 = vpack.c.bf16 %v4272, %v4270
        %v4320 = vpack.c.bf16 %v4273, %v4271
        %v4321 = vpack.c.bf16 %v4276, %v4274
        %v4322 = vpack.c.bf16 %v4277, %v4275
        %v4323 = vpack.c.bf16 %v4280, %v4278
        %v4324 = vpack.c.bf16 %v4281, %v4279
        %v4325 = vpack.c.bf16 %v4284, %v4282
        %v4326 = vpack.c.bf16 %v4285, %v4283
        %v4327 = vpack.c.bf16 %v4288, %v4286
        %v4328 = vpack.c.bf16 %v4289, %v4287
        %v4329 = vpack.c.bf16 %v4292, %v4290
        %v4330 = vpack.c.bf16 %v4293, %v4291
        %v4331 = vpack.c.bf16 %v4296, %v4294
        %v4332 = vpack.c.bf16 %v4297, %v4295
        %v4333 = vpack.c.bf16 %v4300, %v4298
        %v4334 = vpack.c.bf16 %v4301, %v4299
        %v4335 = vld [vmem:[#allocation2] sm:$0x1]
        %4337 = vset.pattern.permute.xlu0 0
        %4338 = vperm.xlu0 %4337, %v4335
        %v4339 = vpop.permute.xlu0 %4338
        %v4341 = vlaneseq
        %v4342 = vshrl.u32 %v4341, 7
        %v4343 = vsub.s32 0, %v4342
        %v4344 = vrot.slane %v4339, %v4343
        %v4347 = vunpack.c.l.s4 1966171168
        %v4348 = vunpack.c.0.s8 %v4347
        %v4349 = vlaneseq
        %v4350 = vshrl.u32 %v4349, 7
        %v4351 = vsub.s32 %v4348, %v4350
        %v4352 = vrot.slane %v4302, %v4351
        %v4353 = vcombine.high %v4352, %v4352
        %v4355 = vunpack.c.l.s4 1966171168
        %v4356 = vunpack.c.0.s8 %v4355
        %v4357 = vlaneseq
        %v4358 = vshrl.u32 %v4357, 7
        %v4359 = vsub.s32 %v4356, %v4358
        %v4360 = vrot.slane %v4352, %v4359
        %v4362 = vunpack.c.l.s4 1966171168
        %v4363 = vunpack.c.0.s8 %v4362
        %v4364 = vlaneseq
        %v4365 = vshrl.u32 %v4364, 7
        %v4366 = vsub.s32 %v4363, %v4365
        %v4367 = vrot.slane %v4353, %v4366
        %4370 = vmatprep.subr.bf16.mxu0 %v4304
        %4371 = vmatpush1.bf16.xpose.msra.mxu0 %v4303
        %4372 = vmatprep.subr.bf16.mxu0 %v4306
        %4373 = vmatpush1.bf16.xpose.msra.mxu0 %v4305
        %4374 = vmatprep.subr.bf16.mxu0 %v4308
        %4375 = vmatpush1.bf16.xpose.msra.mxu0 %v4307
        %4376 = vmatprep.subr.bf16.mxu0 %v4310
        %4377 = vmatpush1.bf16.xpose.msra.mxu0 %v4309
        %4378 = vmatprep.subr.bf16.mxu0 %v4312
        %4379 = vmatpush1.bf16.xpose.msra.mxu0 %v4311
        %4380 = vmatprep.subr.bf16.mxu0 %v4314
        %4381 = vmatpush1.bf16.xpose.msra.mxu0 %v4313
        %4382 = vmatprep.subr.bf16.mxu0 %v4316
        %4383 = vmatpush1.bf16.xpose.msra.mxu0 %v4315
        %4384 = vmatprep.subr.bf16.mxu0 %v4318
        %4385 = vmatpush1.bf16.xpose.msra.mxu0 %v4317
        %4386 = vmatprep.subr.bf16.mxu0 %v4320
        %4387 = vmatpush1.bf16.xpose.msra.mxu0 %v4319
        %4388 = vmatprep.subr.bf16.mxu0 %v4322
        %4389 = vmatpush1.bf16.xpose.msra.mxu0 %v4321
        %4390 = vmatprep.subr.bf16.mxu0 %v4324
        %4391 = vmatpush1.bf16.xpose.msra.mxu0 %v4323
        %4392 = vmatprep.subr.bf16.mxu0 %v4326
        %4393 = vmatpush1.bf16.xpose.msra.mxu0 %v4325
        %4394 = vmatprep.subr.bf16.mxu0 %v4328
        %4395 = vmatpush1.bf16.xpose.msra.mxu0 %v4327
        %4396 = vmatprep.subr.bf16.mxu0 %v4330
        %4397 = vmatpush1.bf16.xpose.msra.mxu0 %v4329
        %4398 = vmatprep.subr.bf16.mxu0 %v4332
        %4399 = vmatpush1.bf16.xpose.msra.mxu0 %v4331
        %4400 = vmatprep.subr.bf16.mxu0 %v4334
        %4401 = vmatpush1.bf16.xpose.msra.mxu0 %v4333
        %4402 = vmatprep.mubr.bf16.mxu0 %v4367
        %4403 = vmatmul.mubr.bf16.gmra.mrb[0].mxu0 %v4360
        %v4404 = vpop.f32.mrb[0].mxu0
        %v4405 = vadd.f32 %v4344, %v4404
        %v4406 = vpop.f32.mrb[0].mxu0
        %v4407 = vadd.f32 %v4344, %v4406
        %v4408 = vpop.f32.mrb[0].mxu0
        %v4409 = vpop.f32.mrb[0].mxu0
        %4410 = vdwg.mxu0
        %v4413 = vcombine.low %v4405, %v4407
        %v4415 = vunpack.c.l.s4 1966171168
        %v4416 = vunpack.c.0.s8 %v4415
        %v4417 = vlaneseq
        %v4418 = vshrl.u32 %v4417, 7
        %v4419 = vsub.s32 %v4416, %v4418
        %v4420 = vrot.slane %v4413, %v4419
        %v4422 = vunpack.c.l.s4 1966171168
        %v4423 = vunpack.c.0.s8 %v4422
        %v4424 = vlaneseq
        %v4425 = vshrl.u32 %v4424, 7
        %v4426 = vsub.s32 %v4423, %v4425
        %v4427 = vrot.slane %v4420, %v4426
        %v4429 = vlaneseq
        %vm4430 = vcmp.ge.s32.totalorder %v4429, 0
        %vm4431 = vcmp.lt.s32.totalorder %v4429, 256
        %vm4432 = vmand %vm4430, %vm4431
        %4433 = vst.msk [vmem:[%s292] sm:$0x3] %vm4432, %v4427
        %s4434 = sand.u32 %s144, 1
        %s4435 = scalar_lea.sflag [#allocation5], %s4434
        %s4436 = sand.u32 %s144, 1
        %s4437 = smul.addr %s4436, 2
        %s4438 = scalar_lea.vmem [#allocation11], %s4437
        // Predicated region
        $region57: #{tpu_custom_call.1} parent=39 // pred_check
          %p4439 = pneg %p154
        $region58: #{tpu_custom_call.1} parent=39 // pred_check_branch
          %4441 = sbr.rel (%p4439) target = $region60
        $region59: #{tpu_custom_call.1} parent=39 // pred_region
          %s4442 = smul.u32 2, %s26
          %s4443 = ssub.s32 3, %s4442
          %p4444 = scmp.lt.s32.totalorder %s4443, 2
          %s4445 = scalar_select %p4444, %s4443, 2
          %s4446 = smul.u32 16, %s4445
          %s4448 = ssub.s32 32, %s4446
          %4449 = vsyncadd %s4435, %s4448
          %p4450 = scmp.ne.s32.totalorder 0, %s4446
          %s4451 = smul.addr %s4442, 16
          %s4452 = scalar_lea.hbm %s5, %s4451
          %s4453 = sshll.u32 %s4445, 4
          %s4454 = sshll.u32 %s4438, 4
          %s4455 = int_to_ptr.vmem [resolvable:$true] %s4454
          %4457 = dma.vmem_to_hbm [thread:$0]  (%p4450), %s4455, %s4453, %s4452, %s4435
        $region60: #{tpu_custom_call.1} parent=39 // pred_fallthru
          _
      $region40: #{tpu_custom_call.1} parent=5 // pred_fallthru
        _
      %p4458 = scmp.le.s32.totalorder 2, %s21
      // Predicated region
      $region61: #{tpu_custom_call.1} parent=5 // pred_check
        %p4459 = pneg %p4458
      $region62: #{tpu_custom_call.1} parent=5 // pred_check_branch
        %4461 = sbr.rel (%p4459) target = $region64
      $region63: #{tpu_custom_call.1} parent=5 // pred_region
        %s4462 = ssub.s32 %s21, 2
        // Predicated region
        $region65: #{tpu_custom_call.1} parent=63 // pred_check
          %p4463 = pneg %p160
        $region66: #{tpu_custom_call.1} parent=63 // pred_check_branch
          %4465 = sbr.rel (%p4463) target = $region68
        $region67: #{tpu_custom_call.1} parent=63 // pred_region
          %s4466 = sand.u32 %s145, 1
          %s4467 = scalar_lea.sflag [#allocation5], %s4466
          %s4468 = sand.u32 %s145, 1
          %s4469 = smul.addr %s4468, 2
          %s4470 = scalar_lea.vmem [#allocation11], %s4469
          %4471 = dma.done %s4467, 32
        $region68: #{tpu_custom_call.1} parent=63 // pred_fallthru
          _
      $region64: #{tpu_custom_call.1} parent=5 // pred_fallthru
        _
    $region6: #{tpu_custom_call.1} parent=1 // loop_footer
      %s25 = sadd.s32 1, %s21
    $region7: #{tpu_custom_call.1} parent=1 // loop_footer_branch
      %20 = sbr.rel target = $region3
    $region8: #{tpu_custom_call.1} parent=1 // loop_exit
      _
    %4472 = vsyncpa [#allocation4], 1
    %s4473 = scalar_lea.sflag [#allocation4], 1
    %4474 = vsyncpa %s4473, 1
    %4475 = vsyncpa [#allocation7], 1
    %4476 = vsyncpa [#allocation10], 1
    %4477 = vsyncpa [#allocation5], 1
    %s4478 = scalar_lea.sflag [#allocation5], 1
    %4479 = vsyncpa %s4478, 1

</llo_original>
